<compile_context>
chip_gen: v7x
topology: tpu7x:2x2x1
jax: 0.10.0
libtpu: 0.0.40
codegen_flags: <defaults>
</compile_context>

<pallas_src>
import functools

import jax
import jax.numpy as jnp
from jax.experimental import pallas as pl
from jax.experimental.pallas import tpu as pltpu


def lstm_recurrent_kernel(gx_ref,            # (TC, B, 4D) precomputed x-gates (f32)
                          whh_ref,           # (D, 4D) recurrent weight^T (bf16)
                          y_ref,             # (TC, B, D) output chunk (time-major)
                          cn_ref,            # (1, B, D) final cell state
                          h_scr, c_scr,      # (B, D) f32 VMEM recurrent state
                          *, tc, t_total, masked):
    chunk = pl.program_id(0)
    D = h_scr.shape[-1]

    # reset(): zero-initialize (h, c) at the first chunk.
    @pl.when(chunk == 0)
    def _():
        h_scr[...] = jnp.zeros_like(h_scr)
        c_scr[...] = jnp.zeros_like(c_scr)

    def body(k):
        h_prev = h_scr[...]
        c_prev = c_scr[...]

        # Serial part only: h_{t-1} @ W_hh^T on the MXU with bf16 operands,
        # f32 accumulation; everything else stays f32 on the VPU/EUP.
        rec = jnp.dot(h_prev.astype(jnp.bfloat16), whh_ref[...],
                      preferred_element_type=jnp.float32)
        gates = gx_ref[k] + rec

        i_g = jax.nn.sigmoid(gates[:, 0 * D:1 * D])
        f_g = jax.nn.sigmoid(gates[:, 1 * D:2 * D])
        g_g = jnp.tanh(gates[:, 2 * D:3 * D])
        o_g = jax.nn.sigmoid(gates[:, 3 * D:4 * D])

        c_new = f_g * c_prev + i_g * g_g
        h_new = o_g * jnp.tanh(c_new)

        c_scr[...] = c_new
        h_scr[...] = h_new
        y_ref[k] = h_new.astype(y_ref.dtype)

    def step(k, carry):
        if masked:
            # Padded timesteps (past T) leave the state untouched.
            pl.when(chunk * tc + k < t_total)(lambda: body(k))
        else:
            body(k)
        return carry

    # Short, fixed trip count: fully unroll so the scheduler sees the chunk.
    jax.lax.fori_loop(0, tc, step, 0, unroll=True)

    # Final cell state (h_n is recovered in the wrapper from y[T-1]).
    @pl.when(chunk == pl.num_programs(0) - 1)
    def _():
        cn_ref[0] = c_scr[...].astype(cn_ref.dtype)


def lstm_layer_forward(x, w_ih, w_hh, b_ih, b_hh, *,
                       dropout_p=0.1, rng_key=None, time_chunk=16):
    """x: [B, T, D] batch_first. Returns (y [B,T,D], (h_n [1,B,D], c_n [1,B,D]))."""
    B, T, D = x.shape
    xf = x.astype(jnp.float32)
    wih_t = jnp.transpose(w_ih).astype(jnp.float32)      # (D, 4D)
    whh_t_bf = jnp.transpose(w_hh).astype(jnp.bfloat16)  # (D, 4D), MXU-native
    bias = (b_ih + b_hh).astype(jnp.float32)              # (4D,)

    # Hoisted input projection for ALL timesteps in one well-shaped matmul,
    # emitted directly in time-major [T, B, 4D] (no separate HBM transpose).
    gates_x = jnp.einsum('btd,dg->tbg', xf, wih_t) + bias

    # Time-chunking: pad T up to a multiple of tc (predicated off in-kernel)
    # instead of collapsing to tc=1 for awkward T.  At T<=time_chunk the whole
    # recurrence is a single grid step.
    tc = max(1, min(time_chunk, T))
    n_chunks = (T + tc - 1) // tc
    t_pad = n_chunks * tc
    masked = t_pad != T
    if masked:
        gates_x = jnp.pad(gates_x, ((0, t_pad - T), (0, 0), (0, 0)))

    kernel = functools.partial(lstm_recurrent_kernel,
                               tc=tc, t_total=T, masked=masked)

    grid_spec = pltpu.PrefetchScalarGridSpec(
        num_scalar_prefetch=0,
        grid=(n_chunks,),
        in_specs=[
            pl.BlockSpec((tc, B, 4 * D), lambda c: (c, 0, 0)),   # gates_x chunk
            pl.BlockSpec((D, 4 * D), lambda c: (0, 0)),          # W_hh^T (resident, bf16)
        ],
        out_specs=[
            pl.BlockSpec((tc, B, D), lambda c: (c, 0, 0)),       # y chunk
            pl.BlockSpec((1, B, D), lambda c: (0, 0, 0)),        # c_n
        ],
        scratch_shapes=[
            pltpu.VMEM((B, D), jnp.float32),   # h state (f32)
            pltpu.VMEM((B, D), jnp.float32),   # c state (f32)
        ],
    )

    y_tbd, c_n = pl.pallas_call(
        kernel,
        out_shape=(
            jax.ShapeDtypeStruct((t_pad, B, D), jnp.float32),
            jax.ShapeDtypeStruct((1, B, D), jnp.float32),
        ),
        grid_spec=grid_spec,
        compiler_params=pltpu.CompilerParams(
            dimension_semantics=("arbitrary",)),   # time recurrence: sequential
    )(gates_x, whh_t_bf)

    if masked:
        y_tbd = y_tbd[:T]

    h_n = y_tbd[T - 1][None]                       # final hidden state, pre-dropout
    y = jnp.transpose(y_tbd, (1, 0, 2))            # back to batch_first [B, T, D]

    if dropout_p > 0.0:
        # Inverted dropout on the output sequence only (training-mode
        # semantics), applied as a fully parallel mem-bound pass OFF the
        # serial recurrence.
        # TODO(synk): RNG stream differs from torch.nn.Dropout (uses jax.random).
        if rng_key is None:
            rng_key = jax.random.PRNGKey(0)
        keep = jax.random.bernoulli(rng_key, 1.0 - dropout_p, y.shape)
        y = jnp.where(keep, y * (1.0 / (1.0 - dropout_p)), 0.0)

    return y, (h_n, c_n)


def lstm_ref(x, w_ih, w_hh, b_ih, b_hh):
    """Pure-JAX f32 reference (dropout disabled) for a correctness check."""
    B, T, D = x.shape

    def step(carry, x_t):
        h, c = carry
        gates = x_t @ w_ih.T + h @ w_hh.T + b_ih + b_hh
        i, f, g, o = jnp.split(gates, 4, axis=-1)
        i, f, o = jax.nn.sigmoid(i), jax.nn.sigmoid(f), jax.nn.sigmoid(o)
        g = jnp.tanh(g)
        c = f * c + i * g
        h = o * jnp.tanh(c)
        return (h, c), h

    h0 = jnp.zeros((B, D), jnp.float32)
    c0 = jnp.zeros((B, D), jnp.float32)
    (hT, cT), ys = jax.lax.scan(step, (h0, c0), jnp.transpose(x, (1, 0, 2)))
    return jnp.transpose(ys, (1, 0, 2)), hT[None], cT[None]


if __name__ == "__main__":
    B, T, D = 8, 16, 128            # batch, seq, dim_model
    key = jax.random.PRNGKey(0)
    k_x, k_wih, k_whh, k_bih, k_bhh, k_drop = jax.random.split(key, 6)

    # nn.LSTM init: uniform(-1/sqrt(hidden), 1/sqrt(hidden))
    bound = 1.0 / (D ** 0.5)
    x = jax.random.normal(k_x, (B, T, D), dtype=jnp.float32)
    w_ih = jax.random.uniform(k_wih, (4 * D, D), jnp.float32, -bound, bound)
    w_hh = jax.random.uniform(k_whh, (4 * D, D), jnp.float32, -bound, bound)
    b_ih = jax.random.uniform(k_bih, (4 * D,), jnp.float32, -bound, bound)
    b_hh = jax.random.uniform(k_bhh, (4 * D,), jnp.float32, -bound, bound)

    # Correctness check (dropout disabled) against the f32 reference.
    # Tolerance loosened vs. a pure-f32 kernel because the recurrent matmul
    # runs with bf16 MXU operands (f32 accumulation -> bounded drift).
    y0, (h0, c0) = lstm_layer_forward(x, w_ih, w_hh, b_ih, b_hh, dropout_p=0.0)
    yr, hr, cr = lstm_ref(x, w_ih, w_hh, b_ih, b_hh)
    assert jnp.allclose(y0, yr, atol=2e-2, rtol=2e-2), "output mismatch"
    assert jnp.allclose(h0, hr, atol=2e-2, rtol=2e-2), "h_n mismatch"
    assert jnp.allclose(c0, cr, atol=2e-2, rtol=2e-2), "c_n mismatch"

    # Exercise the padded/masked path (T not a multiple of the time chunk).
    T2 = 13
    x2 = x[:, :T2]
    y2, (h2, c2) = lstm_layer_forward(x2, w_ih, w_hh, b_ih, b_hh,
                                      dropout_p=0.0, time_chunk=8)
    yr2, hr2, cr2 = lstm_ref(x2, w_ih, w_hh, b_ih, b_hh)
    assert jnp.allclose(y2, yr2, atol=2e-2, rtol=2e-2), "padded output mismatch"
    assert jnp.allclose(h2, hr2, atol=2e-2, rtol=2e-2), "padded h_n mismatch"
    assert jnp.allclose(c2, cr2, atol=2e-2, rtol=2e-2), "padded c_n mismatch"

    # Actual module semantics: training-mode dropout p=0.1 on the outputs.
    y, (h_n, c_n) = lstm_layer_forward(x, w_ih, w_hh, b_ih, b_hh,
                                       dropout_p=0.1, rng_key=k_drop)
    jax.block_until_ready((y, h_n, c_n))
    print("KERNEL_OK")
</pallas_src>

<mosaic_0001>
module attributes {stable_mosaic.version = 11 : i64} {
  func.func @lstm_recurrent_kernel(%arg0: i32, %arg1: memref<16x8x512xf32, #tpu.memory_space<vmem>>, %arg2: memref<128x512xbf16, #tpu.memory_space<vmem>>, %arg3: memref<16x8x128xf32, #tpu.memory_space<vmem>>, %arg4: memref<1x8x128xf32, #tpu.memory_space<vmem>>, %arg5: memref<8x128xf32, #tpu.memory_space<vmem>>, %arg6: memref<8x128xf32, #tpu.memory_space<vmem>>) attributes {dimension_semantics = [#tpu.dimension_semantics<arbitrary>], iteration_bounds = array<i64: 1>, scalar_prefetch = 0 : i64, scratch_operands = 2 : i64, tpu.core_type = #tpu.core_type<tc>, window_params = [{transform_indices = @transform_0, window_bounds = array<i64: 16, 8, 512>}, {pipeline_mode = #tpu.pipeline_mode<synchronous>, transform_indices = @transform_1, window_bounds = array<i64: 128, 512>}, {transform_indices = @transform_2, window_bounds = array<i64: 16, 8, 128>}, {pipeline_mode = #tpu.pipeline_mode<synchronous>, transform_indices = @transform_3, window_bounds = array<i64: 1, 8, 128>}]} {
    %c0_i32 = arith.constant 0 : i32
    %0 = arith.cmpi eq, %arg0, %c0_i32 : i32
    %1 = arith.extui %0 : i1 to i32
    %c0_i32_0 = arith.constant 0 : i32
    %2 = arith.cmpi ne, %1, %c0_i32_0 : i32
    scf.if %2 {
      %cst_290 = arith.constant 0.000000e+00 : f32
      %646 = vector.broadcast %cst_290 : f32 to vector<8x128xf32>
      %c0_291 = arith.constant 0 : index
      %c0_292 = arith.constant 0 : index
      %647 = vector.load %arg5[%c0_291, %c0_292] : memref<8x128xf32, #tpu.memory_space<vmem>>, vector<8x128xf32>
      tpu.vector_store %arg5[%c0_291, %c0_292], %646 {strides = array<i32>} : memref<8x128xf32, #tpu.memory_space<vmem>>, vector<8x128xf32>,
      %cst_293 = arith.constant 0.000000e+00 : f32
      %648 = vector.broadcast %cst_293 : f32 to vector<8x128xf32>
      %c0_294 = arith.constant 0 : index
      %c0_295 = arith.constant 0 : index
      %649 = vector.load %arg6[%c0_294, %c0_295] : memref<8x128xf32, #tpu.memory_space<vmem>>, vector<8x128xf32>
      tpu.vector_store %arg6[%c0_294, %c0_295], %648 {strides = array<i32>} : memref<8x128xf32, #tpu.memory_space<vmem>>, vector<8x128xf32>,
    } else {
    }
    %c0_i32_1 = arith.constant 0 : i32
    %c0 = arith.constant 0 : index
    %c0_2 = arith.constant 0 : index
    %3 = vector.load %arg5[%c0, %c0_2] : memref<8x128xf32, #tpu.memory_space<vmem>>, vector<8x128xf32>
    %c0_3 = arith.constant 0 : index
    %c0_4 = arith.constant 0 : index
    %4 = vector.load %arg6[%c0_3, %c0_4] : memref<8x128xf32, #tpu.memory_space<vmem>>, vector<8x128xf32>
    %5 = arith.truncf %3 : vector<8x128xf32> to vector<8x128xbf16>
    %c0_5 = arith.constant 0 : index
    %c0_6 = arith.constant 0 : index
    %6 = vector.load %arg2[%c0_5, %c0_6] : memref<128x512xbf16, #tpu.memory_space<vmem>>, vector<128x512xbf16>
    %cst = arith.constant dense<0.000000e+00> : vector<8x512xf32>
    %7 = tpu.matmul %5, %6, %cst {dimension_numbers = #tpu.dot_dimension_numbers<[1], [0], [0], [1], [0, 0, 1, 1], [], []>} : vector<8x128xbf16>, vector<128x512xbf16>, vector<8x512xf32> -> vector<8x512xf32>
    %8 = arith.index_cast %c0_i32_1 : i32 to index
    %c0_7 = arith.constant 0 : index
    %c0_8 = arith.constant 0 : index
    %9 = vector.load %arg1[%8, %c0_7, %c0_8] : memref<16x8x512xf32, #tpu.memory_space<vmem>>, vector<1x8x512xf32>
    %10 = vector.shape_cast %9 : vector<1x8x512xf32> to vector<8x512xf32>
    %11 = arith.addf %10, %7 : vector<8x512xf32>
    %12 = vector.extract_strided_slice %11 {offsets = [0, 0], sizes = [8, 128], strides = [1, 1]} : vector<8x512xf32> to vector<8x128xf32>
    %13 = arith.negf %12 : vector<8x128xf32>
    %14 = math.exp %13 : vector<8x128xf32>
    %cst_9 = arith.constant 1.000000e+00 : f32
    %15 = vector.broadcast %cst_9 : f32 to vector<8x128xf32>
    %16 = arith.addf %15, %14 : vector<8x128xf32>
    %17 = arith.divf %15, %16 : vector<8x128xf32>
    %18 = vector.extract_strided_slice %11 {offsets = [0, 128], sizes = [8, 128], strides = [1, 1]} : vector<8x512xf32> to vector<8x128xf32>
    %19 = arith.negf %18 : vector<8x128xf32>
    %20 = math.exp %19 : vector<8x128xf32>
    %cst_10 = arith.constant 1.000000e+00 : f32
    %21 = vector.broadcast %cst_10 : f32 to vector<8x128xf32>
    %22 = arith.addf %21, %20 : vector<8x128xf32>
    %23 = arith.divf %21, %22 : vector<8x128xf32>
    %24 = vector.extract_strided_slice %11 {offsets = [0, 256], sizes = [8, 128], strides = [1, 1]} : vector<8x512xf32> to vector<8x128xf32>
    %25 = math.tanh %24 : vector<8x128xf32>
    %26 = vector.extract_strided_slice %11 {offsets = [0, 384], sizes = [8, 128], strides = [1, 1]} : vector<8x512xf32> to vector<8x128xf32>
    %27 = arith.negf %26 : vector<8x128xf32>
    %28 = math.exp %27 : vector<8x128xf32>
    %cst_11 = arith.constant 1.000000e+00 : f32
    %29 = vector.broadcast %cst_11 : f32 to vector<8x128xf32>
    %30 = arith.addf %29, %28 : vector<8x128xf32>
    %31 = arith.divf %29, %30 : vector<8x128xf32>
    %32 = arith.mulf %23, %4 : vector<8x128xf32>
    %33 = arith.mulf %17, %25 : vector<8x128xf32>
    %34 = arith.addf %32, %33 : vector<8x128xf32>
    %35 = math.tanh %34 : vector<8x128xf32>
    %36 = arith.mulf %31, %35 : vector<8x128xf32>
    %c0_12 = arith.constant 0 : index
    %c0_13 = arith.constant 0 : index
    %37 = vector.load %arg6[%c0_12, %c0_13] : memref<8x128xf32, #tpu.memory_space<vmem>>, vector<8x128xf32>
    tpu.vector_store %arg6[%c0_12, %c0_13], %34 {strides = array<i32>} : memref<8x128xf32, #tpu.memory_space<vmem>>, vector<8x128xf32>,
    %c0_14 = arith.constant 0 : index
    %c0_15 = arith.constant 0 : index
    %38 = vector.load %arg5[%c0_14, %c0_15] : memref<8x128xf32, #tpu.memory_space<vmem>>, vector<8x128xf32>
    tpu.vector_store %arg5[%c0_14, %c0_15], %36 {strides = array<i32>} : memref<8x128xf32, #tpu.memory_space<vmem>>, vector<8x128xf32>,
    %39 = arith.index_cast %c0_i32_1 : i32 to index
    %c0_16 = arith.constant 0 : index
    %c0_17 = arith.constant 0 : index
    %40 = vector.load %arg3[%39, %c0_16, %c0_17] : memref<16x8x128xf32, #tpu.memory_space<vmem>>, vector<1x8x128xf32>
    %41 = vector.shape_cast %40 : vector<1x8x128xf32> to vector<8x128xf32>
    %42 = vector.shape_cast %36 : vector<8x128xf32> to vector<1x8x128xf32>
    tpu.vector_store %arg3[%39, %c0_16, %c0_17], %42 {strides = array<i32>} : memref<16x8x128xf32, #tpu.memory_space<vmem>>, vector<1x8x128xf32>,
    %c1_i32 = arith.constant 1 : i32
    %c0_18 = arith.constant 0 : index
    %c0_19 = arith.constant 0 : index
    %43 = vector.load %arg5[%c0_18, %c0_19] : memref<8x128xf32, #tpu.memory_space<vmem>>, vector<8x128xf32>
    %c0_20 = arith.constant 0 : index
    %c0_21 = arith.constant 0 : index
    %44 = vector.load %arg6[%c0_20, %c0_21] : memref<8x128xf32, #tpu.memory_space<vmem>>, vector<8x128xf32>
    %45 = arith.truncf %43 : vector<8x128xf32> to vector<8x128xbf16>
    %c0_22 = arith.constant 0 : index
    %c0_23 = arith.constant 0 : index
    %46 = vector.load %arg2[%c0_22, %c0_23] : memref<128x512xbf16, #tpu.memory_space<vmem>>, vector<128x512xbf16>
    %cst_24 = arith.constant dense<0.000000e+00> : vector<8x512xf32>
    %47 = tpu.matmul %45, %46, %cst_24 {dimension_numbers = #tpu.dot_dimension_numbers<[1], [0], [0], [1], [0, 0, 1, 1], [], []>} : vector<8x128xbf16>, vector<128x512xbf16>, vector<8x512xf32> -> vector<8x512xf32>
    %48 = arith.index_cast %c1_i32 : i32 to index
    %c0_25 = arith.constant 0 : index
    %c0_26 = arith.constant 0 : index
    %49 = vector.load %arg1[%48, %c0_25, %c0_26] : memref<16x8x512xf32, #tpu.memory_space<vmem>>, vector<1x8x512xf32>
    %50 = vector.shape_cast %49 : vector<1x8x512xf32> to vector<8x512xf32>
    %51 = arith.addf %50, %47 : vector<8x512xf32>
    %52 = vector.extract_strided_slice %51 {offsets = [0, 0], sizes = [8, 128], strides = [1, 1]} : vector<8x512xf32> to vector<8x128xf32>
    %53 = arith.negf %52 : vector<8x128xf32>
    %54 = math.exp %53 : vector<8x128xf32>
    %cst_27 = arith.constant 1.000000e+00 : f32
    %55 = vector.broadcast %cst_27 : f32 to vector<8x128xf32>
    %56 = arith.addf %55, %54 : vector<8x128xf32>
    %57 = arith.divf %55, %56 : vector<8x128xf32>
    %58 = vector.extract_strided_slice %51 {offsets = [0, 128], sizes = [8, 128], strides = [1, 1]} : vector<8x512xf32> to vector<8x128xf32>
    %59 = arith.negf %58 : vector<8x128xf32>
    %60 = math.exp %59 : vector<8x128xf32>
    %cst_28 = arith.constant 1.000000e+00 : f32
    %61 = vector.broadcast %cst_28 : f32 to vector<8x128xf32>
    %62 = arith.addf %61, %60 : vector<8x128xf32>
    %63 = arith.divf %61, %62 : vector<8x128xf32>
    %64 = vector.extract_strided_slice %51 {offsets = [0, 256], sizes = [8, 128], strides = [1, 1]} : vector<8x512xf32> to vector<8x128xf32>
    %65 = math.tanh %64 : vector<8x128xf32>
    %66 = vector.extract_strided_slice %51 {offsets = [0, 384], sizes = [8, 128], strides = [1, 1]} : vector<8x512xf32> to vector<8x128xf32>
    %67 = arith.negf %66 : vector<8x128xf32>
    %68 = math.exp %67 : vector<8x128xf32>
    %cst_29 = arith.constant 1.000000e+00 : f32
    %69 = vector.broadcast %cst_29 : f32 to vector<8x128xf32>
    %70 = arith.addf %69, %68 : vector<8x128xf32>
    %71 = arith.divf %69, %70 : vector<8x128xf32>
    %72 = arith.mulf %63, %44 : vector<8x128xf32>
    %73 = arith.mulf %57, %65 : vector<8x128xf32>
    %74 = arith.addf %72, %73 : vector<8x128xf32>
    %75 = math.tanh %74 : vector<8x128xf32>
    %76 = arith.mulf %71, %75 : vector<8x128xf32>
    %c0_30 = arith.constant 0 : index
    %c0_31 = arith.constant 0 : index
    %77 = vector.load %arg6[%c0_30, %c0_31] : memref<8x128xf32, #tpu.memory_space<vmem>>, vector<8x128xf32>
    tpu.vector_store %arg6[%c0_30, %c0_31], %74 {strides = array<i32>} : memref<8x128xf32, #tpu.memory_space<vmem>>, vector<8x128xf32>,
    %c0_32 = arith.constant 0 : index
    %c0_33 = arith.constant 0 : index
    %78 = vector.load %arg5[%c0_32, %c0_33] : memref<8x128xf32, #tpu.memory_space<vmem>>, vector<8x128xf32>
    tpu.vector_store %arg5[%c0_32, %c0_33], %76 {strides = array<i32>} : memref<8x128xf32, #tpu.memory_space<vmem>>, vector<8x128xf32>,
    %79 = arith.index_cast %c1_i32 : i32 to index
    %c0_34 = arith.constant 0 : index
    %c0_35 = arith.constant 0 : index
    %80 = vector.load %arg3[%79, %c0_34, %c0_35] : memref<16x8x128xf32, #tpu.memory_space<vmem>>, vector<1x8x128xf32>
    %81 = vector.shape_cast %80 : vector<1x8x128xf32> to vector<8x128xf32>
    %82 = vector.shape_cast %76 : vector<8x128xf32> to vector<1x8x128xf32>
    tpu.vector_store %arg3[%79, %c0_34, %c0_35], %82 {strides = array<i32>} : memref<16x8x128xf32, #tpu.memory_space<vmem>>, vector<1x8x128xf32>,
    %c2_i32 = arith.constant 2 : i32
    %c0_36 = arith.constant 0 : index
    %c0_37 = arith.constant 0 : index
    %83 = vector.load %arg5[%c0_36, %c0_37] : memref<8x128xf32, #tpu.memory_space<vmem>>, vector<8x128xf32>
    %c0_38 = arith.constant 0 : index
    %c0_39 = arith.constant 0 : index
    %84 = vector.load %arg6[%c0_38, %c0_39] : memref<8x128xf32, #tpu.memory_space<vmem>>, vector<8x128xf32>
    %85 = arith.truncf %83 : vector<8x128xf32> to vector<8x128xbf16>
    %c0_40 = arith.constant 0 : index
    %c0_41 = arith.constant 0 : index
    %86 = vector.load %arg2[%c0_40, %c0_41] : memref<128x512xbf16, #tpu.memory_space<vmem>>, vector<128x512xbf16>
    %cst_42 = arith.constant dense<0.000000e+00> : vector<8x512xf32>
    %87 = tpu.matmul %85, %86, %cst_42 {dimension_numbers = #tpu.dot_dimension_numbers<[1], [0], [0], [1], [0, 0, 1, 1], [], []>} : vector<8x128xbf16>, vector<128x512xbf16>, vector<8x512xf32> -> vector<8x512xf32>
    %88 = arith.index_cast %c2_i32 : i32 to index
    %c0_43 = arith.constant 0 : index
    %c0_44 = arith.constant 0 : index
    %89 = vector.load %arg1[%88, %c0_43, %c0_44] : memref<16x8x512xf32, #tpu.memory_space<vmem>>, vector<1x8x512xf32>
    %90 = vector.shape_cast %89 : vector<1x8x512xf32> to vector<8x512xf32>
    %91 = arith.addf %90, %87 : vector<8x512xf32>
    %92 = vector.extract_strided_slice %91 {offsets = [0, 0], sizes = [8, 128], strides = [1, 1]} : vector<8x512xf32> to vector<8x128xf32>
    %93 = arith.negf %92 : vector<8x128xf32>
    %94 = math.exp %93 : vector<8x128xf32>
    %cst_45 = arith.constant 1.000000e+00 : f32
    %95 = vector.broadcast %cst_45 : f32 to vector<8x128xf32>
    %96 = arith.addf %95, %94 : vector<8x128xf32>
    %97 = arith.divf %95, %96 : vector<8x128xf32>
    %98 = vector.extract_strided_slice %91 {offsets = [0, 128], sizes = [8, 128], strides = [1, 1]} : vector<8x512xf32> to vector<8x128xf32>
    %99 = arith.negf %98 : vector<8x128xf32>
    %100 = math.exp %99 : vector<8x128xf32>
    %cst_46 = arith.constant 1.000000e+00 : f32
    %101 = vector.broadcast %cst_46 : f32 to vector<8x128xf32>
    %102 = arith.addf %101, %100 : vector<8x128xf32>
    %103 = arith.divf %101, %102 : vector<8x128xf32>
    %104 = vector.extract_strided_slice %91 {offsets = [0, 256], sizes = [8, 128], strides = [1, 1]} : vector<8x512xf32> to vector<8x128xf32>
    %105 = math.tanh %104 : vector<8x128xf32>
    %106 = vector.extract_strided_slice %91 {offsets = [0, 384], sizes = [8, 128], strides = [1, 1]} : vector<8x512xf32> to vector<8x128xf32>
    %107 = arith.negf %106 : vector<8x128xf32>
    %108 = math.exp %107 : vector<8x128xf32>
    %cst_47 = arith.constant 1.000000e+00 : f32
    %109 = vector.broadcast %cst_47 : f32 to vector<8x128xf32>
    %110 = arith.addf %109, %108 : vector<8x128xf32>
    %111 = arith.divf %109, %110 : vector<8x128xf32>
    %112 = arith.mulf %103, %84 : vector<8x128xf32>
    %113 = arith.mulf %97, %105 : vector<8x128xf32>
    %114 = arith.addf %112, %113 : vector<8x128xf32>
    %115 = math.tanh %114 : vector<8x128xf32>
    %116 = arith.mulf %111, %115 : vector<8x128xf32>
    %c0_48 = arith.constant 0 : index
    %c0_49 = arith.constant 0 : index
    %117 = vector.load %arg6[%c0_48, %c0_49] : memref<8x128xf32, #tpu.memory_space<vmem>>, vector<8x128xf32>
    tpu.vector_store %arg6[%c0_48, %c0_49], %114 {strides = array<i32>} : memref<8x128xf32, #tpu.memory_space<vmem>>, vector<8x128xf32>,
    %c0_50 = arith.constant 0 : index
    %c0_51 = arith.constant 0 : index
    %118 = vector.load %arg5[%c0_50, %c0_51] : memref<8x128xf32, #tpu.memory_space<vmem>>, vector<8x128xf32>
    tpu.vector_store %arg5[%c0_50, %c0_51], %116 {strides = array<i32>} : memref<8x128xf32, #tpu.memory_space<vmem>>, vector<8x128xf32>,
    %119 = arith.index_cast %c2_i32 : i32 to index
    %c0_52 = arith.constant 0 : index
    %c0_53 = arith.constant 0 : index
    %120 = vector.load %arg3[%119, %c0_52, %c0_53] : memref<16x8x128xf32, #tpu.memory_space<vmem>>, vector<1x8x128xf32>
    %121 = vector.shape_cast %120 : vector<1x8x128xf32> to vector<8x128xf32>
    %122 = vector.shape_cast %116 : vector<8x128xf32> to vector<1x8x128xf32>
    tpu.vector_store %arg3[%119, %c0_52, %c0_53], %122 {strides = array<i32>} : memref<16x8x128xf32, #tpu.memory_space<vmem>>, vector<1x8x128xf32>,
    %c3_i32 = arith.constant 3 : i32
    %c0_54 = arith.constant 0 : index
    %c0_55 = arith.constant 0 : index
    %123 = vector.load %arg5[%c0_54, %c0_55] : memref<8x128xf32, #tpu.memory_space<vmem>>, vector<8x128xf32>
    %c0_56 = arith.constant 0 : index
    %c0_57 = arith.constant 0 : index
    %124 = vector.load %arg6[%c0_56, %c0_57] : memref<8x128xf32, #tpu.memory_space<vmem>>, vector<8x128xf32>
    %125 = arith.truncf %123 : vector<8x128xf32> to vector<8x128xbf16>
    %c0_58 = arith.constant 0 : index
    %c0_59 = arith.constant 0 : index
    %126 = vector.load %arg2[%c0_58, %c0_59] : memref<128x512xbf16, #tpu.memory_space<vmem>>, vector<128x512xbf16>
    %cst_60 = arith.constant dense<0.000000e+00> : vector<8x512xf32>
    %127 = tpu.matmul %125, %126, %cst_60 {dimension_numbers = #tpu.dot_dimension_numbers<[1], [0], [0], [1], [0, 0, 1, 1], [], []>} : vector<8x128xbf16>, vector<128x512xbf16>, vector<8x512xf32> -> vector<8x512xf32>
    %128 = arith.index_cast %c3_i32 : i32 to index
    %c0_61 = arith.constant 0 : index
    %c0_62 = arith.constant 0 : index
    %129 = vector.load %arg1[%128, %c0_61, %c0_62] : memref<16x8x512xf32, #tpu.memory_space<vmem>>, vector<1x8x512xf32>
    %130 = vector.shape_cast %129 : vector<1x8x512xf32> to vector<8x512xf32>
    %131 = arith.addf %130, %127 : vector<8x512xf32>
    %132 = vector.extract_strided_slice %131 {offsets = [0, 0], sizes = [8, 128], strides = [1, 1]} : vector<8x512xf32> to vector<8x128xf32>
    %133 = arith.negf %132 : vector<8x128xf32>
    %134 = math.exp %133 : vector<8x128xf32>
    %cst_63 = arith.constant 1.000000e+00 : f32
    %135 = vector.broadcast %cst_63 : f32 to vector<8x128xf32>
    %136 = arith.addf %135, %134 : vector<8x128xf32>
    %137 = arith.divf %135, %136 : vector<8x128xf32>
    %138 = vector.extract_strided_slice %131 {offsets = [0, 128], sizes = [8, 128], strides = [1, 1]} : vector<8x512xf32> to vector<8x128xf32>
    %139 = arith.negf %138 : vector<8x128xf32>
    %140 = math.exp %139 : vector<8x128xf32>
    %cst_64 = arith.constant 1.000000e+00 : f32
    %141 = vector.broadcast %cst_64 : f32 to vector<8x128xf32>
    %142 = arith.addf %141, %140 : vector<8x128xf32>
    %143 = arith.divf %141, %142 : vector<8x128xf32>
    %144 = vector.extract_strided_slice %131 {offsets = [0, 256], sizes = [8, 128], strides = [1, 1]} : vector<8x512xf32> to vector<8x128xf32>
    %145 = math.tanh %144 : vector<8x128xf32>
    %146 = vector.extract_strided_slice %131 {offsets = [0, 384], sizes = [8, 128], strides = [1, 1]} : vector<8x512xf32> to vector<8x128xf32>
    %147 = arith.negf %146 : vector<8x128xf32>
    %148 = math.exp %147 : vector<8x128xf32>
    %cst_65 = arith.constant 1.000000e+00 : f32
    %149 = vector.broadcast %cst_65 : f32 to vector<8x128xf32>
    %150 = arith.addf %149, %148 : vector<8x128xf32>
    %151 = arith.divf %149, %150 : vector<8x128xf32>
    %152 = arith.mulf %143, %124 : vector<8x128xf32>
    %153 = arith.mulf %137, %145 : vector<8x128xf32>
    %154 = arith.addf %152, %153 : vector<8x128xf32>
    %155 = math.tanh %154 : vector<8x128xf32>
    %156 = arith.mulf %151, %155 : vector<8x128xf32>
    %c0_66 = arith.constant 0 : index
    %c0_67 = arith.constant 0 : index
    %157 = vector.load %arg6[%c0_66, %c0_67] : memref<8x128xf32, #tpu.memory_space<vmem>>, vector<8x128xf32>
    tpu.vector_store %arg6[%c0_66, %c0_67], %154 {strides = array<i32>} : memref<8x128xf32, #tpu.memory_space<vmem>>, vector<8x128xf32>,
    %c0_68 = arith.constant 0 : index
    %c0_69 = arith.constant 0 : index
    %158 = vector.load %arg5[%c0_68, %c0_69] : memref<8x128xf32, #tpu.memory_space<vmem>>, vector<8x128xf32>
    tpu.vector_store %arg5[%c0_68, %c0_69], %156 {strides = array<i32>} : memref<8x128xf32, #tpu.memory_space<vmem>>, vector<8x128xf32>,
    %159 = arith.index_cast %c3_i32 : i32 to index
    %c0_70 = arith.constant 0 : index
    %c0_71 = arith.constant 0 : index
    %160 = vector.load %arg3[%159, %c0_70, %c0_71] : memref<16x8x128xf32, #tpu.memory_space<vmem>>, vector<1x8x128xf32>
    %161 = vector.shape_cast %160 : vector<1x8x128xf32> to vector<8x128xf32>
    %162 = vector.shape_cast %156 : vector<8x128xf32> to vector<1x8x128xf32>
    tpu.vector_store %arg3[%159, %c0_70, %c0_71], %162 {strides = array<i32>} : memref<16x8x128xf32, #tpu.memory_space<vmem>>, vector<1x8x128xf32>,
    %c4_i32 = arith.constant 4 : i32
    %c0_72 = arith.constant 0 : index
    %c0_73 = arith.constant 0 : index
    %163 = vector.load %arg5[%c0_72, %c0_73] : memref<8x128xf32, #tpu.memory_space<vmem>>, vector<8x128xf32>
    %c0_74 = arith.constant 0 : index
    %c0_75 = arith.constant 0 : index
    %164 = vector.load %arg6[%c0_74, %c0_75] : memref<8x128xf32, #tpu.memory_space<vmem>>, vector<8x128xf32>
    %165 = arith.truncf %163 : vector<8x128xf32> to vector<8x128xbf16>
    %c0_76 = arith.constant 0 : index
    %c0_77 = arith.constant 0 : index
    %166 = vector.load %arg2[%c0_76, %c0_77] : memref<128x512xbf16, #tpu.memory_space<vmem>>, vector<128x512xbf16>
    %cst_78 = arith.constant dense<0.000000e+00> : vector<8x512xf32>
    %167 = tpu.matmul %165, %166, %cst_78 {dimension_numbers = #tpu.dot_dimension_numbers<[1], [0], [0], [1], [0, 0, 1, 1], [], []>} : vector<8x128xbf16>, vector<128x512xbf16>, vector<8x512xf32> -> vector<8x512xf32>
    %168 = arith.index_cast %c4_i32 : i32 to index
    %c0_79 = arith.constant 0 : index
    %c0_80 = arith.constant 0 : index
    %169 = vector.load %arg1[%168, %c0_79, %c0_80] : memref<16x8x512xf32, #tpu.memory_space<vmem>>, vector<1x8x512xf32>
    %170 = vector.shape_cast %169 : vector<1x8x512xf32> to vector<8x512xf32>
    %171 = arith.addf %170, %167 : vector<8x512xf32>
    %172 = vector.extract_strided_slice %171 {offsets = [0, 0], sizes = [8, 128], strides = [1, 1]} : vector<8x512xf32> to vector<8x128xf32>
    %173 = arith.negf %172 : vector<8x128xf32>
    %174 = math.exp %173 : vector<8x128xf32>
    %cst_81 = arith.constant 1.000000e+00 : f32
    %175 = vector.broadcast %cst_81 : f32 to vector<8x128xf32>
    %176 = arith.addf %175, %174 : vector<8x128xf32>
    %177 = arith.divf %175, %176 : vector<8x128xf32>
    %178 = vector.extract_strided_slice %171 {offsets = [0, 128], sizes = [8, 128], strides = [1, 1]} : vector<8x512xf32> to vector<8x128xf32>
    %179 = arith.negf %178 : vector<8x128xf32>
    %180 = math.exp %179 : vector<8x128xf32>
    %cst_82 = arith.constant 1.000000e+00 : f32
    %181 = vector.broadcast %cst_82 : f32 to vector<8x128xf32>
    %182 = arith.addf %181, %180 : vector<8x128xf32>
    %183 = arith.divf %181, %182 : vector<8x128xf32>
    %184 = vector.extract_strided_slice %171 {offsets = [0, 256], sizes = [8, 128], strides = [1, 1]} : vector<8x512xf32> to vector<8x128xf32>
    %185 = math.tanh %184 : vector<8x128xf32>
    %186 = vector.extract_strided_slice %171 {offsets = [0, 384], sizes = [8, 128], strides = [1, 1]} : vector<8x512xf32> to vector<8x128xf32>
    %187 = arith.negf %186 : vector<8x128xf32>
    %188 = math.exp %187 : vector<8x128xf32>
    %cst_83 = arith.constant 1.000000e+00 : f32
    %189 = vector.broadcast %cst_83 : f32 to vector<8x128xf32>
    %190 = arith.addf %189, %188 : vector<8x128xf32>
    %191 = arith.divf %189, %190 : vector<8x128xf32>
    %192 = arith.mulf %183, %164 : vector<8x128xf32>
    %193 = arith.mulf %177, %185 : vector<8x128xf32>
    %194 = arith.addf %192, %193 : vector<8x128xf32>
    %195 = math.tanh %194 : vector<8x128xf32>
    %196 = arith.mulf %191, %195 : vector<8x128xf32>
    %c0_84 = arith.constant 0 : index
    %c0_85 = arith.constant 0 : index
    %197 = vector.load %arg6[%c0_84, %c0_85] : memref<8x128xf32, #tpu.memory_space<vmem>>, vector<8x128xf32>
    tpu.vector_store %arg6[%c0_84, %c0_85], %194 {strides = array<i32>} : memref<8x128xf32, #tpu.memory_space<vmem>>, vector<8x128xf32>,
    %c0_86 = arith.constant 0 : index
    %c0_87 = arith.constant 0 : index
    %198 = vector.load %arg5[%c0_86, %c0_87] : memref<8x128xf32, #tpu.memory_space<vmem>>, vector<8x128xf32>
    tpu.vector_store %arg5[%c0_86, %c0_87], %196 {strides = array<i32>} : memref<8x128xf32, #tpu.memory_space<vmem>>, vector<8x128xf32>,
    %199 = arith.index_cast %c4_i32 : i32 to index
    %c0_88 = arith.constant 0 : index
    %c0_89 = arith.constant 0 : index
    %200 = vector.load %arg3[%199, %c0_88, %c0_89] : memref<16x8x128xf32, #tpu.memory_space<vmem>>, vector<1x8x128xf32>
    %201 = vector.shape_cast %200 : vector<1x8x128xf32> to vector<8x128xf32>
    %202 = vector.shape_cast %196 : vector<8x128xf32> to vector<1x8x128xf32>
    tpu.vector_store %arg3[%199, %c0_88, %c0_89], %202 {strides = array<i32>} : memref<16x8x128xf32, #tpu.memory_space<vmem>>, vector<1x8x128xf32>,
    %c5_i32 = arith.constant 5 : i32
    %c0_90 = arith.constant 0 : index
    %c0_91 = arith.constant 0 : index
    %203 = vector.load %arg5[%c0_90, %c0_91] : memref<8x128xf32, #tpu.memory_space<vmem>>, vector<8x128xf32>
    %c0_92 = arith.constant 0 : index
    %c0_93 = arith.constant 0 : index
    %204 = vector.load %arg6[%c0_92, %c0_93] : memref<8x128xf32, #tpu.memory_space<vmem>>, vector<8x128xf32>
    %205 = arith.truncf %203 : vector<8x128xf32> to vector<8x128xbf16>
    %c0_94 = arith.constant 0 : index
    %c0_95 = arith.constant 0 : index
    %206 = vector.load %arg2[%c0_94, %c0_95] : memref<128x512xbf16, #tpu.memory_space<vmem>>, vector<128x512xbf16>
    %cst_96 = arith.constant dense<0.000000e+00> : vector<8x512xf32>
    %207 = tpu.matmul %205, %206, %cst_96 {dimension_numbers = #tpu.dot_dimension_numbers<[1], [0], [0], [1], [0, 0, 1, 1], [], []>} : vector<8x128xbf16>, vector<128x512xbf16>, vector<8x512xf32> -> vector<8x512xf32>
    %208 = arith.index_cast %c5_i32 : i32 to index
    %c0_97 = arith.constant 0 : index
    %c0_98 = arith.constant 0 : index
    %209 = vector.load %arg1[%208, %c0_97, %c0_98] : memref<16x8x512xf32, #tpu.memory_space<vmem>>, vector<1x8x512xf32>
    %210 = vector.shape_cast %209 : vector<1x8x512xf32> to vector<8x512xf32>
    %211 = arith.addf %210, %207 : vector<8x512xf32>
    %212 = vector.extract_strided_slice %211 {offsets = [0, 0], sizes = [8, 128], strides = [1, 1]} : vector<8x512xf32> to vector<8x128xf32>
    %213 = arith.negf %212 : vector<8x128xf32>
    %214 = math.exp %213 : vector<8x128xf32>
    %cst_99 = arith.constant 1.000000e+00 : f32
    %215 = vector.broadcast %cst_99 : f32 to vector<8x128xf32>
    %216 = arith.addf %215, %214 : vector<8x128xf32>
    %217 = arith.divf %215, %216 : vector<8x128xf32>
    %218 = vector.extract_strided_slice %211 {offsets = [0, 128], sizes = [8, 128], strides = [1, 1]} : vector<8x512xf32> to vector<8x128xf32>
    %219 = arith.negf %218 : vector<8x128xf32>
    %220 = math.exp %219 : vector<8x128xf32>
    %cst_100 = arith.constant 1.000000e+00 : f32
    %221 = vector.broadcast %cst_100 : f32 to vector<8x128xf32>
    %222 = arith.addf %221, %220 : vector<8x128xf32>
    %223 = arith.divf %221, %222 : vector<8x128xf32>
    %224 = vector.extract_strided_slice %211 {offsets = [0, 256], sizes = [8, 128], strides = [1, 1]} : vector<8x512xf32> to vector<8x128xf32>
    %225 = math.tanh %224 : vector<8x128xf32>
    %226 = vector.extract_strided_slice %211 {offsets = [0, 384], sizes = [8, 128], strides = [1, 1]} : vector<8x512xf32> to vector<8x128xf32>
    %227 = arith.negf %226 : vector<8x128xf32>
    %228 = math.exp %227 : vector<8x128xf32>
    %cst_101 = arith.constant 1.000000e+00 : f32
    %229 = vector.broadcast %cst_101 : f32 to vector<8x128xf32>
    %230 = arith.addf %229, %228 : vector<8x128xf32>
    %231 = arith.divf %229, %230 : vector<8x128xf32>
    %232 = arith.mulf %223, %204 : vector<8x128xf32>
    %233 = arith.mulf %217, %225 : vector<8x128xf32>
    %234 = arith.addf %232, %233 : vector<8x128xf32>
    %235 = math.tanh %234 : vector<8x128xf32>
    %236 = arith.mulf %231, %235 : vector<8x128xf32>
    %c0_102 = arith.constant 0 : index
    %c0_103 = arith.constant 0 : index
    %237 = vector.load %arg6[%c0_102, %c0_103] : memref<8x128xf32, #tpu.memory_space<vmem>>, vector<8x128xf32>
    tpu.vector_store %arg6[%c0_102, %c0_103], %234 {strides = array<i32>} : memref<8x128xf32, #tpu.memory_space<vmem>>, vector<8x128xf32>,
    %c0_104 = arith.constant 0 : index
    %c0_105 = arith.constant 0 : index
    %238 = vector.load %arg5[%c0_104, %c0_105] : memref<8x128xf32, #tpu.memory_space<vmem>>, vector<8x128xf32>
    tpu.vector_store %arg5[%c0_104, %c0_105], %236 {strides = array<i32>} : memref<8x128xf32, #tpu.memory_space<vmem>>, vector<8x128xf32>,
    %239 = arith.index_cast %c5_i32 : i32 to index
    %c0_106 = arith.constant 0 : index
    %c0_107 = arith.constant 0 : index
    %240 = vector.load %arg3[%239, %c0_106, %c0_107] : memref<16x8x128xf32, #tpu.memory_space<vmem>>, vector<1x8x128xf32>
    %241 = vector.shape_cast %240 : vector<1x8x128xf32> to vector<8x128xf32>
    %242 = vector.shape_cast %236 : vector<8x128xf32> to vector<1x8x128xf32>
    tpu.vector_store %arg3[%239, %c0_106, %c0_107], %242 {strides = array<i32>} : memref<16x8x128xf32, #tpu.memory_space<vmem>>, vector<1x8x128xf32>,
    %c6_i32 = arith.constant 6 : i32
    %c0_108 = arith.constant 0 : index
    %c0_109 = arith.constant 0 : index
    %243 = vector.load %arg5[%c0_108, %c0_109] : memref<8x128xf32, #tpu.memory_space<vmem>>, vector<8x128xf32>
    %c0_110 = arith.constant 0 : index
    %c0_111 = arith.constant 0 : index
    %244 = vector.load %arg6[%c0_110, %c0_111] : memref<8x128xf32, #tpu.memory_space<vmem>>, vector<8x128xf32>
    %245 = arith.truncf %243 : vector<8x128xf32> to vector<8x128xbf16>
    %c0_112 = arith.constant 0 : index
    %c0_113 = arith.constant 0 : index
    %246 = vector.load %arg2[%c0_112, %c0_113] : memref<128x512xbf16, #tpu.memory_space<vmem>>, vector<128x512xbf16>
    %cst_114 = arith.constant dense<0.000000e+00> : vector<8x512xf32>
    %247 = tpu.matmul %245, %246, %cst_114 {dimension_numbers = #tpu.dot_dimension_numbers<[1], [0], [0], [1], [0, 0, 1, 1], [], []>} : vector<8x128xbf16>, vector<128x512xbf16>, vector<8x512xf32> -> vector<8x512xf32>
    %248 = arith.index_cast %c6_i32 : i32 to index
    %c0_115 = arith.constant 0 : index
    %c0_116 = arith.constant 0 : index
    %249 = vector.load %arg1[%248, %c0_115, %c0_116] : memref<16x8x512xf32, #tpu.memory_space<vmem>>, vector<1x8x512xf32>
    %250 = vector.shape_cast %249 : vector<1x8x512xf32> to vector<8x512xf32>
    %251 = arith.addf %250, %247 : vector<8x512xf32>
    %252 = vector.extract_strided_slice %251 {offsets = [0, 0], sizes = [8, 128], strides = [1, 1]} : vector<8x512xf32> to vector<8x128xf32>
    %253 = arith.negf %252 : vector<8x128xf32>
    %254 = math.exp %253 : vector<8x128xf32>
    %cst_117 = arith.constant 1.000000e+00 : f32
    %255 = vector.broadcast %cst_117 : f32 to vector<8x128xf32>
    %256 = arith.addf %255, %254 : vector<8x128xf32>
    %257 = arith.divf %255, %256 : vector<8x128xf32>
    %258 = vector.extract_strided_slice %251 {offsets = [0, 128], sizes = [8, 128], strides = [1, 1]} : vector<8x512xf32> to vector<8x128xf32>
    %259 = arith.negf %258 : vector<8x128xf32>
    %260 = math.exp %259 : vector<8x128xf32>
    %cst_118 = arith.constant 1.000000e+00 : f32
    %261 = vector.broadcast %cst_118 : f32 to vector<8x128xf32>
    %262 = arith.addf %261, %260 : vector<8x128xf32>
    %263 = arith.divf %261, %262 : vector<8x128xf32>
    %264 = vector.extract_strided_slice %251 {offsets = [0, 256], sizes = [8, 128], strides = [1, 1]} : vector<8x512xf32> to vector<8x128xf32>
    %265 = math.tanh %264 : vector<8x128xf32>
    %266 = vector.extract_strided_slice %251 {offsets = [0, 384], sizes = [8, 128], strides = [1, 1]} : vector<8x512xf32> to vector<8x128xf32>
    %267 = arith.negf %266 : vector<8x128xf32>
    %268 = math.exp %267 : vector<8x128xf32>
    %cst_119 = arith.constant 1.000000e+00 : f32
    %269 = vector.broadcast %cst_119 : f32 to vector<8x128xf32>
    %270 = arith.addf %269, %268 : vector<8x128xf32>
    %271 = arith.divf %269, %270 : vector<8x128xf32>
    %272 = arith.mulf %263, %244 : vector<8x128xf32>
    %273 = arith.mulf %257, %265 : vector<8x128xf32>
    %274 = arith.addf %272, %273 : vector<8x128xf32>
    %275 = math.tanh %274 : vector<8x128xf32>
    %276 = arith.mulf %271, %275 : vector<8x128xf32>
    %c0_120 = arith.constant 0 : index
    %c0_121 = arith.constant 0 : index
    %277 = vector.load %arg6[%c0_120, %c0_121] : memref<8x128xf32, #tpu.memory_space<vmem>>, vector<8x128xf32>
    tpu.vector_store %arg6[%c0_120, %c0_121], %274 {strides = array<i32>} : memref<8x128xf32, #tpu.memory_space<vmem>>, vector<8x128xf32>,
    %c0_122 = arith.constant 0 : index
    %c0_123 = arith.constant 0 : index
    %278 = vector.load %arg5[%c0_122, %c0_123] : memref<8x128xf32, #tpu.memory_space<vmem>>, vector<8x128xf32>
    tpu.vector_store %arg5[%c0_122, %c0_123], %276 {strides = array<i32>} : memref<8x128xf32, #tpu.memory_space<vmem>>, vector<8x128xf32>,
    %279 = arith.index_cast %c6_i32 : i32 to index
    %c0_124 = arith.constant 0 : index
    %c0_125 = arith.constant 0 : index
    %280 = vector.load %arg3[%279, %c0_124, %c0_125] : memref<16x8x128xf32, #tpu.memory_space<vmem>>, vector<1x8x128xf32>
    %281 = vector.shape_cast %280 : vector<1x8x128xf32> to vector<8x128xf32>
    %282 = vector.shape_cast %276 : vector<8x128xf32> to vector<1x8x128xf32>
    tpu.vector_store %arg3[%279, %c0_124, %c0_125], %282 {strides = array<i32>} : memref<16x8x128xf32, #tpu.memory_space<vmem>>, vector<1x8x128xf32>,
    %c7_i32 = arith.constant 7 : i32
    %c0_126 = arith.constant 0 : index
    %c0_127 = arith.constant 0 : index
    %283 = vector.load %arg5[%c0_126, %c0_127] : memref<8x128xf32, #tpu.memory_space<vmem>>, vector<8x128xf32>
    %c0_128 = arith.constant 0 : index
    %c0_129 = arith.constant 0 : index
    %284 = vector.load %arg6[%c0_128, %c0_129] : memref<8x128xf32, #tpu.memory_space<vmem>>, vector<8x128xf32>
    %285 = arith.truncf %283 : vector<8x128xf32> to vector<8x128xbf16>
    %c0_130 = arith.constant 0 : index
    %c0_131 = arith.constant 0 : index
    %286 = vector.load %arg2[%c0_130, %c0_131] : memref<128x512xbf16, #tpu.memory_space<vmem>>, vector<128x512xbf16>
    %cst_132 = arith.constant dense<0.000000e+00> : vector<8x512xf32>
    %287 = tpu.matmul %285, %286, %cst_132 {dimension_numbers = #tpu.dot_dimension_numbers<[1], [0], [0], [1], [0, 0, 1, 1], [], []>} : vector<8x128xbf16>, vector<128x512xbf16>, vector<8x512xf32> -> vector<8x512xf32>
    %288 = arith.index_cast %c7_i32 : i32 to index
    %c0_133 = arith.constant 0 : index
    %c0_134 = arith.constant 0 : index
    %289 = vector.load %arg1[%288, %c0_133, %c0_134] : memref<16x8x512xf32, #tpu.memory_space<vmem>>, vector<1x8x512xf32>
    %290 = vector.shape_cast %289 : vector<1x8x512xf32> to vector<8x512xf32>
    %291 = arith.addf %290, %287 : vector<8x512xf32>
    %292 = vector.extract_strided_slice %291 {offsets = [0, 0], sizes = [8, 128], strides = [1, 1]} : vector<8x512xf32> to vector<8x128xf32>
    %293 = arith.negf %292 : vector<8x128xf32>
    %294 = math.exp %293 : vector<8x128xf32>
    %cst_135 = arith.constant 1.000000e+00 : f32
    %295 = vector.broadcast %cst_135 : f32 to vector<8x128xf32>
    %296 = arith.addf %295, %294 : vector<8x128xf32>
    %297 = arith.divf %295, %296 : vector<8x128xf32>
    %298 = vector.extract_strided_slice %291 {offsets = [0, 128], sizes = [8, 128], strides = [1, 1]} : vector<8x512xf32> to vector<8x128xf32>
    %299 = arith.negf %298 : vector<8x128xf32>
    %300 = math.exp %299 : vector<8x128xf32>
    %cst_136 = arith.constant 1.000000e+00 : f32
    %301 = vector.broadcast %cst_136 : f32 to vector<8x128xf32>
    %302 = arith.addf %301, %300 : vector<8x128xf32>
    %303 = arith.divf %301, %302 : vector<8x128xf32>
    %304 = vector.extract_strided_slice %291 {offsets = [0, 256], sizes = [8, 128], strides = [1, 1]} : vector<8x512xf32> to vector<8x128xf32>
    %305 = math.tanh %304 : vector<8x128xf32>
    %306 = vector.extract_strided_slice %291 {offsets = [0, 384], sizes = [8, 128], strides = [1, 1]} : vector<8x512xf32> to vector<8x128xf32>
    %307 = arith.negf %306 : vector<8x128xf32>
    %308 = math.exp %307 : vector<8x128xf32>
    %cst_137 = arith.constant 1.000000e+00 : f32
    %309 = vector.broadcast %cst_137 : f32 to vector<8x128xf32>
    %310 = arith.addf %309, %308 : vector<8x128xf32>
    %311 = arith.divf %309, %310 : vector<8x128xf32>
    %312 = arith.mulf %303, %284 : vector<8x128xf32>
    %313 = arith.mulf %297, %305 : vector<8x128xf32>
    %314 = arith.addf %312, %313 : vector<8x128xf32>
    %315 = math.tanh %314 : vector<8x128xf32>
    %316 = arith.mulf %311, %315 : vector<8x128xf32>
    %c0_138 = arith.constant 0 : index
    %c0_139 = arith.constant 0 : index
    %317 = vector.load %arg6[%c0_138, %c0_139] : memref<8x128xf32, #tpu.memory_space<vmem>>, vector<8x128xf32>
    tpu.vector_store %arg6[%c0_138, %c0_139], %314 {strides = array<i32>} : memref<8x128xf32, #tpu.memory_space<vmem>>, vector<8x128xf32>,
    %c0_140 = arith.constant 0 : index
    %c0_141 = arith.constant 0 : index
    %318 = vector.load %arg5[%c0_140, %c0_141] : memref<8x128xf32, #tpu.memory_space<vmem>>, vector<8x128xf32>
    tpu.vector_store %arg5[%c0_140, %c0_141], %316 {strides = array<i32>} : memref<8x128xf32, #tpu.memory_space<vmem>>, vector<8x128xf32>,
    %319 = arith.index_cast %c7_i32 : i32 to index
    %c0_142 = arith.constant 0 : index
    %c0_143 = arith.constant 0 : index
    %320 = vector.load %arg3[%319, %c0_142, %c0_143] : memref<16x8x128xf32, #tpu.memory_space<vmem>>, vector<1x8x128xf32>
    %321 = vector.shape_cast %320 : vector<1x8x128xf32> to vector<8x128xf32>
    %322 = vector.shape_cast %316 : vector<8x128xf32> to vector<1x8x128xf32>
    tpu.vector_store %arg3[%319, %c0_142, %c0_143], %322 {strides = array<i32>} : memref<16x8x128xf32, #tpu.memory_space<vmem>>, vector<1x8x128xf32>,
    %c8_i32 = arith.constant 8 : i32
    %c0_144 = arith.constant 0 : index
    %c0_145 = arith.constant 0 : index
    %323 = vector.load %arg5[%c0_144, %c0_145] : memref<8x128xf32, #tpu.memory_space<vmem>>, vector<8x128xf32>
    %c0_146 = arith.constant 0 : index
    %c0_147 = arith.constant 0 : index
    %324 = vector.load %arg6[%c0_146, %c0_147] : memref<8x128xf32, #tpu.memory_space<vmem>>, vector<8x128xf32>
    %325 = arith.truncf %323 : vector<8x128xf32> to vector<8x128xbf16>
    %c0_148 = arith.constant 0 : index
    %c0_149 = arith.constant 0 : index
    %326 = vector.load %arg2[%c0_148, %c0_149] : memref<128x512xbf16, #tpu.memory_space<vmem>>, vector<128x512xbf16>
    %cst_150 = arith.constant dense<0.000000e+00> : vector<8x512xf32>
    %327 = tpu.matmul %325, %326, %cst_150 {dimension_numbers = #tpu.dot_dimension_numbers<[1], [0], [0], [1], [0, 0, 1, 1], [], []>} : vector<8x128xbf16>, vector<128x512xbf16>, vector<8x512xf32> -> vector<8x512xf32>
    %328 = arith.index_cast %c8_i32 : i32 to index
    %c0_151 = arith.constant 0 : index
    %c0_152 = arith.constant 0 : index
    %329 = vector.load %arg1[%328, %c0_151, %c0_152] : memref<16x8x512xf32, #tpu.memory_space<vmem>>, vector<1x8x512xf32>
    %330 = vector.shape_cast %329 : vector<1x8x512xf32> to vector<8x512xf32>
    %331 = arith.addf %330, %327 : vector<8x512xf32>
    %332 = vector.extract_strided_slice %331 {offsets = [0, 0], sizes = [8, 128], strides = [1, 1]} : vector<8x512xf32> to vector<8x128xf32>
    %333 = arith.negf %332 : vector<8x128xf32>
    %334 = math.exp %333 : vector<8x128xf32>
    %cst_153 = arith.constant 1.000000e+00 : f32
    %335 = vector.broadcast %cst_153 : f32 to vector<8x128xf32>
    %336 = arith.addf %335, %334 : vector<8x128xf32>
    %337 = arith.divf %335, %336 : vector<8x128xf32>
    %338 = vector.extract_strided_slice %331 {offsets = [0, 128], sizes = [8, 128], strides = [1, 1]} : vector<8x512xf32> to vector<8x128xf32>
    %339 = arith.negf %338 : vector<8x128xf32>
    %340 = math.exp %339 : vector<8x128xf32>
    %cst_154 = arith.constant 1.000000e+00 : f32
    %341 = vector.broadcast %cst_154 : f32 to vector<8x128xf32>
    %342 = arith.addf %341, %340 : vector<8x128xf32>
    %343 = arith.divf %341, %342 : vector<8x128xf32>
    %344 = vector.extract_strided_slice %331 {offsets = [0, 256], sizes = [8, 128], strides = [1, 1]} : vector<8x512xf32> to vector<8x128xf32>
    %345 = math.tanh %344 : vector<8x128xf32>
    %346 = vector.extract_strided_slice %331 {offsets = [0, 384], sizes = [8, 128], strides = [1, 1]} : vector<8x512xf32> to vector<8x128xf32>
    %347 = arith.negf %346 : vector<8x128xf32>
    %348 = math.exp %347 : vector<8x128xf32>
    %cst_155 = arith.constant 1.000000e+00 : f32
    %349 = vector.broadcast %cst_155 : f32 to vector<8x128xf32>
    %350 = arith.addf %349, %348 : vector<8x128xf32>
    %351 = arith.divf %349, %350 : vector<8x128xf32>
    %352 = arith.mulf %343, %324 : vector<8x128xf32>
    %353 = arith.mulf %337, %345 : vector<8x128xf32>
    %354 = arith.addf %352, %353 : vector<8x128xf32>
    %355 = math.tanh %354 : vector<8x128xf32>
    %356 = arith.mulf %351, %355 : vector<8x128xf32>
    %c0_156 = arith.constant 0 : index
    %c0_157 = arith.constant 0 : index
    %357 = vector.load %arg6[%c0_156, %c0_157] : memref<8x128xf32, #tpu.memory_space<vmem>>, vector<8x128xf32>
    tpu.vector_store %arg6[%c0_156, %c0_157], %354 {strides = array<i32>} : memref<8x128xf32, #tpu.memory_space<vmem>>, vector<8x128xf32>,
    %c0_158 = arith.constant 0 : index
    %c0_159 = arith.constant 0 : index
    %358 = vector.load %arg5[%c0_158, %c0_159] : memref<8x128xf32, #tpu.memory_space<vmem>>, vector<8x128xf32>
    tpu.vector_store %arg5[%c0_158, %c0_159], %356 {strides = array<i32>} : memref<8x128xf32, #tpu.memory_space<vmem>>, vector<8x128xf32>,
    %359 = arith.index_cast %c8_i32 : i32 to index
    %c0_160 = arith.constant 0 : index
    %c0_161 = arith.constant 0 : index
    %360 = vector.load %arg3[%359, %c0_160, %c0_161] : memref<16x8x128xf32, #tpu.memory_space<vmem>>, vector<1x8x128xf32>
    %361 = vector.shape_cast %360 : vector<1x8x128xf32> to vector<8x128xf32>
    %362 = vector.shape_cast %356 : vector<8x128xf32> to vector<1x8x128xf32>
    tpu.vector_store %arg3[%359, %c0_160, %c0_161], %362 {strides = array<i32>} : memref<16x8x128xf32, #tpu.memory_space<vmem>>, vector<1x8x128xf32>,
    %c9_i32 = arith.constant 9 : i32
    %c0_162 = arith.constant 0 : index
    %c0_163 = arith.constant 0 : index
    %363 = vector.load %arg5[%c0_162, %c0_163] : memref<8x128xf32, #tpu.memory_space<vmem>>, vector<8x128xf32>
    %c0_164 = arith.constant 0 : index
    %c0_165 = arith.constant 0 : index
    %364 = vector.load %arg6[%c0_164, %c0_165] : memref<8x128xf32, #tpu.memory_space<vmem>>, vector<8x128xf32>
    %365 = arith.truncf %363 : vector<8x128xf32> to vector<8x128xbf16>
    %c0_166 = arith.constant 0 : index
    %c0_167 = arith.constant 0 : index
    %366 = vector.load %arg2[%c0_166, %c0_167] : memref<128x512xbf16, #tpu.memory_space<vmem>>, vector<128x512xbf16>
    %cst_168 = arith.constant dense<0.000000e+00> : vector<8x512xf32>
    %367 = tpu.matmul %365, %366, %cst_168 {dimension_numbers = #tpu.dot_dimension_numbers<[1], [0], [0], [1], [0, 0, 1, 1], [], []>} : vector<8x128xbf16>, vector<128x512xbf16>, vector<8x512xf32> -> vector<8x512xf32>
    %368 = arith.index_cast %c9_i32 : i32 to index
    %c0_169 = arith.constant 0 : index
    %c0_170 = arith.constant 0 : index
    %369 = vector.load %arg1[%368, %c0_169, %c0_170] : memref<16x8x512xf32, #tpu.memory_space<vmem>>, vector<1x8x512xf32>
    %370 = vector.shape_cast %369 : vector<1x8x512xf32> to vector<8x512xf32>
    %371 = arith.addf %370, %367 : vector<8x512xf32>
    %372 = vector.extract_strided_slice %371 {offsets = [0, 0], sizes = [8, 128], strides = [1, 1]} : vector<8x512xf32> to vector<8x128xf32>
    %373 = arith.negf %372 : vector<8x128xf32>
    %374 = math.exp %373 : vector<8x128xf32>
    %cst_171 = arith.constant 1.000000e+00 : f32
    %375 = vector.broadcast %cst_171 : f32 to vector<8x128xf32>
    %376 = arith.addf %375, %374 : vector<8x128xf32>
    %377 = arith.divf %375, %376 : vector<8x128xf32>
    %378 = vector.extract_strided_slice %371 {offsets = [0, 128], sizes = [8, 128], strides = [1, 1]} : vector<8x512xf32> to vector<8x128xf32>
    %379 = arith.negf %378 : vector<8x128xf32>
    %380 = math.exp %379 : vector<8x128xf32>
    %cst_172 = arith.constant 1.000000e+00 : f32
    %381 = vector.broadcast %cst_172 : f32 to vector<8x128xf32>
    %382 = arith.addf %381, %380 : vector<8x128xf32>
    %383 = arith.divf %381, %382 : vector<8x128xf32>
    %384 = vector.extract_strided_slice %371 {offsets = [0, 256], sizes = [8, 128], strides = [1, 1]} : vector<8x512xf32> to vector<8x128xf32>
    %385 = math.tanh %384 : vector<8x128xf32>
    %386 = vector.extract_strided_slice %371 {offsets = [0, 384], sizes = [8, 128], strides = [1, 1]} : vector<8x512xf32> to vector<8x128xf32>
    %387 = arith.negf %386 : vector<8x128xf32>
    %388 = math.exp %387 : vector<8x128xf32>
    %cst_173 = arith.constant 1.000000e+00 : f32
    %389 = vector.broadcast %cst_173 : f32 to vector<8x128xf32>
    %390 = arith.addf %389, %388 : vector<8x128xf32>
    %391 = arith.divf %389, %390 : vector<8x128xf32>
    %392 = arith.mulf %383, %364 : vector<8x128xf32>
    %393 = arith.mulf %377, %385 : vector<8x128xf32>
    %394 = arith.addf %392, %393 : vector<8x128xf32>
    %395 = math.tanh %394 : vector<8x128xf32>
    %396 = arith.mulf %391, %395 : vector<8x128xf32>
    %c0_174 = arith.constant 0 : index
    %c0_175 = arith.constant 0 : index
    %397 = vector.load %arg6[%c0_174, %c0_175] : memref<8x128xf32, #tpu.memory_space<vmem>>, vector<8x128xf32>
    tpu.vector_store %arg6[%c0_174, %c0_175], %394 {strides = array<i32>} : memref<8x128xf32, #tpu.memory_space<vmem>>, vector<8x128xf32>,
    %c0_176 = arith.constant 0 : index
    %c0_177 = arith.constant 0 : index
    %398 = vector.load %arg5[%c0_176, %c0_177] : memref<8x128xf32, #tpu.memory_space<vmem>>, vector<8x128xf32>
    tpu.vector_store %arg5[%c0_176, %c0_177], %396 {strides = array<i32>} : memref<8x128xf32, #tpu.memory_space<vmem>>, vector<8x128xf32>,
    %399 = arith.index_cast %c9_i32 : i32 to index
    %c0_178 = arith.constant 0 : index
    %c0_179 = arith.constant 0 : index
    %400 = vector.load %arg3[%399, %c0_178, %c0_179] : memref<16x8x128xf32, #tpu.memory_space<vmem>>, vector<1x8x128xf32>
    %401 = vector.shape_cast %400 : vector<1x8x128xf32> to vector<8x128xf32>
    %402 = vector.shape_cast %396 : vector<8x128xf32> to vector<1x8x128xf32>
    tpu.vector_store %arg3[%399, %c0_178, %c0_179], %402 {strides = array<i32>} : memref<16x8x128xf32, #tpu.memory_space<vmem>>, vector<1x8x128xf32>,
    %c10_i32 = arith.constant 10 : i32
    %c0_180 = arith.constant 0 : index
    %c0_181 = arith.constant 0 : index
    %403 = vector.load %arg5[%c0_180, %c0_181] : memref<8x128xf32, #tpu.memory_space<vmem>>, vector<8x128xf32>
    %c0_182 = arith.constant 0 : index
    %c0_183 = arith.constant 0 : index
    %404 = vector.load %arg6[%c0_182, %c0_183] : memref<8x128xf32, #tpu.memory_space<vmem>>, vector<8x128xf32>
    %405 = arith.truncf %403 : vector<8x128xf32> to vector<8x128xbf16>
    %c0_184 = arith.constant 0 : index
    %c0_185 = arith.constant 0 : index
    %406 = vector.load %arg2[%c0_184, %c0_185] : memref<128x512xbf16, #tpu.memory_space<vmem>>, vector<128x512xbf16>
    %cst_186 = arith.constant dense<0.000000e+00> : vector<8x512xf32>
    %407 = tpu.matmul %405, %406, %cst_186 {dimension_numbers = #tpu.dot_dimension_numbers<[1], [0], [0], [1], [0, 0, 1, 1], [], []>} : vector<8x128xbf16>, vector<128x512xbf16>, vector<8x512xf32> -> vector<8x512xf32>
    %408 = arith.index_cast %c10_i32 : i32 to index
    %c0_187 = arith.constant 0 : index
    %c0_188 = arith.constant 0 : index
    %409 = vector.load %arg1[%408, %c0_187, %c0_188] : memref<16x8x512xf32, #tpu.memory_space<vmem>>, vector<1x8x512xf32>
    %410 = vector.shape_cast %409 : vector<1x8x512xf32> to vector<8x512xf32>
    %411 = arith.addf %410, %407 : vector<8x512xf32>
    %412 = vector.extract_strided_slice %411 {offsets = [0, 0], sizes = [8, 128], strides = [1, 1]} : vector<8x512xf32> to vector<8x128xf32>
    %413 = arith.negf %412 : vector<8x128xf32>
    %414 = math.exp %413 : vector<8x128xf32>
    %cst_189 = arith.constant 1.000000e+00 : f32
    %415 = vector.broadcast %cst_189 : f32 to vector<8x128xf32>
    %416 = arith.addf %415, %414 : vector<8x128xf32>
    %417 = arith.divf %415, %416 : vector<8x128xf32>
    %418 = vector.extract_strided_slice %411 {offsets = [0, 128], sizes = [8, 128], strides = [1, 1]} : vector<8x512xf32> to vector<8x128xf32>
    %419 = arith.negf %418 : vector<8x128xf32>
    %420 = math.exp %419 : vector<8x128xf32>
    %cst_190 = arith.constant 1.000000e+00 : f32
    %421 = vector.broadcast %cst_190 : f32 to vector<8x128xf32>
    %422 = arith.addf %421, %420 : vector<8x128xf32>
    %423 = arith.divf %421, %422 : vector<8x128xf32>
    %424 = vector.extract_strided_slice %411 {offsets = [0, 256], sizes = [8, 128], strides = [1, 1]} : vector<8x512xf32> to vector<8x128xf32>
    %425 = math.tanh %424 : vector<8x128xf32>
    %426 = vector.extract_strided_slice %411 {offsets = [0, 384], sizes = [8, 128], strides = [1, 1]} : vector<8x512xf32> to vector<8x128xf32>
    %427 = arith.negf %426 : vector<8x128xf32>
    %428 = math.exp %427 : vector<8x128xf32>
    %cst_191 = arith.constant 1.000000e+00 : f32
    %429 = vector.broadcast %cst_191 : f32 to vector<8x128xf32>
    %430 = arith.addf %429, %428 : vector<8x128xf32>
    %431 = arith.divf %429, %430 : vector<8x128xf32>
    %432 = arith.mulf %423, %404 : vector<8x128xf32>
    %433 = arith.mulf %417, %425 : vector<8x128xf32>
    %434 = arith.addf %432, %433 : vector<8x128xf32>
    %435 = math.tanh %434 : vector<8x128xf32>
    %436 = arith.mulf %431, %435 : vector<8x128xf32>
    %c0_192 = arith.constant 0 : index
    %c0_193 = arith.constant 0 : index
    %437 = vector.load %arg6[%c0_192, %c0_193] : memref<8x128xf32, #tpu.memory_space<vmem>>, vector<8x128xf32>
    tpu.vector_store %arg6[%c0_192, %c0_193], %434 {strides = array<i32>} : memref<8x128xf32, #tpu.memory_space<vmem>>, vector<8x128xf32>,
    %c0_194 = arith.constant 0 : index
    %c0_195 = arith.constant 0 : index
    %438 = vector.load %arg5[%c0_194, %c0_195] : memref<8x128xf32, #tpu.memory_space<vmem>>, vector<8x128xf32>
    tpu.vector_store %arg5[%c0_194, %c0_195], %436 {strides = array<i32>} : memref<8x128xf32, #tpu.memory_space<vmem>>, vector<8x128xf32>,
    %439 = arith.index_cast %c10_i32 : i32 to index
    %c0_196 = arith.constant 0 : index
    %c0_197 = arith.constant 0 : index
    %440 = vector.load %arg3[%439, %c0_196, %c0_197] : memref<16x8x128xf32, #tpu.memory_space<vmem>>, vector<1x8x128xf32>
    %441 = vector.shape_cast %440 : vector<1x8x128xf32> to vector<8x128xf32>
    %442 = vector.shape_cast %436 : vector<8x128xf32> to vector<1x8x128xf32>
    tpu.vector_store %arg3[%439, %c0_196, %c0_197], %442 {strides = array<i32>} : memref<16x8x128xf32, #tpu.memory_space<vmem>>, vector<1x8x128xf32>,
    %c11_i32 = arith.constant 11 : i32
    %c0_198 = arith.constant 0 : index
    %c0_199 = arith.constant 0 : index
    %443 = vector.load %arg5[%c0_198, %c0_199] : memref<8x128xf32, #tpu.memory_space<vmem>>, vector<8x128xf32>
    %c0_200 = arith.constant 0 : index
    %c0_201 = arith.constant 0 : index
    %444 = vector.load %arg6[%c0_200, %c0_201] : memref<8x128xf32, #tpu.memory_space<vmem>>, vector<8x128xf32>
    %445 = arith.truncf %443 : vector<8x128xf32> to vector<8x128xbf16>
    %c0_202 = arith.constant 0 : index
    %c0_203 = arith.constant 0 : index
    %446 = vector.load %arg2[%c0_202, %c0_203] : memref<128x512xbf16, #tpu.memory_space<vmem>>, vector<128x512xbf16>
    %cst_204 = arith.constant dense<0.000000e+00> : vector<8x512xf32>
    %447 = tpu.matmul %445, %446, %cst_204 {dimension_numbers = #tpu.dot_dimension_numbers<[1], [0], [0], [1], [0, 0, 1, 1], [], []>} : vector<8x128xbf16>, vector<128x512xbf16>, vector<8x512xf32> -> vector<8x512xf32>
    %448 = arith.index_cast %c11_i32 : i32 to index
    %c0_205 = arith.constant 0 : index
    %c0_206 = arith.constant 0 : index
    %449 = vector.load %arg1[%448, %c0_205, %c0_206] : memref<16x8x512xf32, #tpu.memory_space<vmem>>, vector<1x8x512xf32>
    %450 = vector.shape_cast %449 : vector<1x8x512xf32> to vector<8x512xf32>
    %451 = arith.addf %450, %447 : vector<8x512xf32>
    %452 = vector.extract_strided_slice %451 {offsets = [0, 0], sizes = [8, 128], strides = [1, 1]} : vector<8x512xf32> to vector<8x128xf32>
    %453 = arith.negf %452 : vector<8x128xf32>
    %454 = math.exp %453 : vector<8x128xf32>
    %cst_207 = arith.constant 1.000000e+00 : f32
    %455 = vector.broadcast %cst_207 : f32 to vector<8x128xf32>
    %456 = arith.addf %455, %454 : vector<8x128xf32>
    %457 = arith.divf %455, %456 : vector<8x128xf32>
    %458 = vector.extract_strided_slice %451 {offsets = [0, 128], sizes = [8, 128], strides = [1, 1]} : vector<8x512xf32> to vector<8x128xf32>
    %459 = arith.negf %458 : vector<8x128xf32>
    %460 = math.exp %459 : vector<8x128xf32>
    %cst_208 = arith.constant 1.000000e+00 : f32
    %461 = vector.broadcast %cst_208 : f32 to vector<8x128xf32>
    %462 = arith.addf %461, %460 : vector<8x128xf32>
    %463 = arith.divf %461, %462 : vector<8x128xf32>
    %464 = vector.extract_strided_slice %451 {offsets = [0, 256], sizes = [8, 128], strides = [1, 1]} : vector<8x512xf32> to vector<8x128xf32>
    %465 = math.tanh %464 : vector<8x128xf32>
    %466 = vector.extract_strided_slice %451 {offsets = [0, 384], sizes = [8, 128], strides = [1, 1]} : vector<8x512xf32> to vector<8x128xf32>
    %467 = arith.negf %466 : vector<8x128xf32>
    %468 = math.exp %467 : vector<8x128xf32>
    %cst_209 = arith.constant 1.000000e+00 : f32
    %469 = vector.broadcast %cst_209 : f32 to vector<8x128xf32>
    %470 = arith.addf %469, %468 : vector<8x128xf32>
    %471 = arith.divf %469, %470 : vector<8x128xf32>
    %472 = arith.mulf %463, %444 : vector<8x128xf32>
    %473 = arith.mulf %457, %465 : vector<8x128xf32>
    %474 = arith.addf %472, %473 : vector<8x128xf32>
    %475 = math.tanh %474 : vector<8x128xf32>
    %476 = arith.mulf %471, %475 : vector<8x128xf32>
    %c0_210 = arith.constant 0 : index
    %c0_211 = arith.constant 0 : index
    %477 = vector.load %arg6[%c0_210, %c0_211] : memref<8x128xf32, #tpu.memory_space<vmem>>, vector<8x128xf32>
    tpu.vector_store %arg6[%c0_210, %c0_211], %474 {strides = array<i32>} : memref<8x128xf32, #tpu.memory_space<vmem>>, vector<8x128xf32>,
    %c0_212 = arith.constant 0 : index
    %c0_213 = arith.constant 0 : index
    %478 = vector.load %arg5[%c0_212, %c0_213] : memref<8x128xf32, #tpu.memory_space<vmem>>, vector<8x128xf32>
    tpu.vector_store %arg5[%c0_212, %c0_213], %476 {strides = array<i32>} : memref<8x128xf32, #tpu.memory_space<vmem>>, vector<8x128xf32>,
    %479 = arith.index_cast %c11_i32 : i32 to index
    %c0_214 = arith.constant 0 : index
    %c0_215 = arith.constant 0 : index
    %480 = vector.load %arg3[%479, %c0_214, %c0_215] : memref<16x8x128xf32, #tpu.memory_space<vmem>>, vector<1x8x128xf32>
    %481 = vector.shape_cast %480 : vector<1x8x128xf32> to vector<8x128xf32>
    %482 = vector.shape_cast %476 : vector<8x128xf32> to vector<1x8x128xf32>
    tpu.vector_store %arg3[%479, %c0_214, %c0_215], %482 {strides = array<i32>} : memref<16x8x128xf32, #tpu.memory_space<vmem>>, vector<1x8x128xf32>,
    %c12_i32 = arith.constant 12 : i32
    %c0_216 = arith.constant 0 : index
    %c0_217 = arith.constant 0 : index
    %483 = vector.load %arg5[%c0_216, %c0_217] : memref<8x128xf32, #tpu.memory_space<vmem>>, vector<8x128xf32>
    %c0_218 = arith.constant 0 : index
    %c0_219 = arith.constant 0 : index
    %484 = vector.load %arg6[%c0_218, %c0_219] : memref<8x128xf32, #tpu.memory_space<vmem>>, vector<8x128xf32>
    %485 = arith.truncf %483 : vector<8x128xf32> to vector<8x128xbf16>
    %c0_220 = arith.constant 0 : index
    %c0_221 = arith.constant 0 : index
    %486 = vector.load %arg2[%c0_220, %c0_221] : memref<128x512xbf16, #tpu.memory_space<vmem>>, vector<128x512xbf16>
    %cst_222 = arith.constant dense<0.000000e+00> : vector<8x512xf32>
    %487 = tpu.matmul %485, %486, %cst_222 {dimension_numbers = #tpu.dot_dimension_numbers<[1], [0], [0], [1], [0, 0, 1, 1], [], []>} : vector<8x128xbf16>, vector<128x512xbf16>, vector<8x512xf32> -> vector<8x512xf32>
    %488 = arith.index_cast %c12_i32 : i32 to index
    %c0_223 = arith.constant 0 : index
    %c0_224 = arith.constant 0 : index
    %489 = vector.load %arg1[%488, %c0_223, %c0_224] : memref<16x8x512xf32, #tpu.memory_space<vmem>>, vector<1x8x512xf32>
    %490 = vector.shape_cast %489 : vector<1x8x512xf32> to vector<8x512xf32>
    %491 = arith.addf %490, %487 : vector<8x512xf32>
    %492 = vector.extract_strided_slice %491 {offsets = [0, 0], sizes = [8, 128], strides = [1, 1]} : vector<8x512xf32> to vector<8x128xf32>
    %493 = arith.negf %492 : vector<8x128xf32>
    %494 = math.exp %493 : vector<8x128xf32>
    %cst_225 = arith.constant 1.000000e+00 : f32
    %495 = vector.broadcast %cst_225 : f32 to vector<8x128xf32>
    %496 = arith.addf %495, %494 : vector<8x128xf32>
    %497 = arith.divf %495, %496 : vector<8x128xf32>
    %498 = vector.extract_strided_slice %491 {offsets = [0, 128], sizes = [8, 128], strides = [1, 1]} : vector<8x512xf32> to vector<8x128xf32>
    %499 = arith.negf %498 : vector<8x128xf32>
    %500 = math.exp %499 : vector<8x128xf32>
    %cst_226 = arith.constant 1.000000e+00 : f32
    %501 = vector.broadcast %cst_226 : f32 to vector<8x128xf32>
    %502 = arith.addf %501, %500 : vector<8x128xf32>
    %503 = arith.divf %501, %502 : vector<8x128xf32>
    %504 = vector.extract_strided_slice %491 {offsets = [0, 256], sizes = [8, 128], strides = [1, 1]} : vector<8x512xf32> to vector<8x128xf32>
    %505 = math.tanh %504 : vector<8x128xf32>
    %506 = vector.extract_strided_slice %491 {offsets = [0, 384], sizes = [8, 128], strides = [1, 1]} : vector<8x512xf32> to vector<8x128xf32>
    %507 = arith.negf %506 : vector<8x128xf32>
    %508 = math.exp %507 : vector<8x128xf32>
    %cst_227 = arith.constant 1.000000e+00 : f32
    %509 = vector.broadcast %cst_227 : f32 to vector<8x128xf32>
    %510 = arith.addf %509, %508 : vector<8x128xf32>
    %511 = arith.divf %509, %510 : vector<8x128xf32>
    %512 = arith.mulf %503, %484 : vector<8x128xf32>
    %513 = arith.mulf %497, %505 : vector<8x128xf32>
    %514 = arith.addf %512, %513 : vector<8x128xf32>
    %515 = math.tanh %514 : vector<8x128xf32>
    %516 = arith.mulf %511, %515 : vector<8x128xf32>
    %c0_228 = arith.constant 0 : index
    %c0_229 = arith.constant 0 : index
    %517 = vector.load %arg6[%c0_228, %c0_229] : memref<8x128xf32, #tpu.memory_space<vmem>>, vector<8x128xf32>
    tpu.vector_store %arg6[%c0_228, %c0_229], %514 {strides = array<i32>} : memref<8x128xf32, #tpu.memory_space<vmem>>, vector<8x128xf32>,
    %c0_230 = arith.constant 0 : index
    %c0_231 = arith.constant 0 : index
    %518 = vector.load %arg5[%c0_230, %c0_231] : memref<8x128xf32, #tpu.memory_space<vmem>>, vector<8x128xf32>
    tpu.vector_store %arg5[%c0_230, %c0_231], %516 {strides = array<i32>} : memref<8x128xf32, #tpu.memory_space<vmem>>, vector<8x128xf32>,
    %519 = arith.index_cast %c12_i32 : i32 to index
    %c0_232 = arith.constant 0 : index
    %c0_233 = arith.constant 0 : index
    %520 = vector.load %arg3[%519, %c0_232, %c0_233] : memref<16x8x128xf32, #tpu.memory_space<vmem>>, vector<1x8x128xf32>
    %521 = vector.shape_cast %520 : vector<1x8x128xf32> to vector<8x128xf32>
    %522 = vector.shape_cast %516 : vector<8x128xf32> to vector<1x8x128xf32>
    tpu.vector_store %arg3[%519, %c0_232, %c0_233], %522 {strides = array<i32>} : memref<16x8x128xf32, #tpu.memory_space<vmem>>, vector<1x8x128xf32>,
    %c13_i32 = arith.constant 13 : i32
    %c0_234 = arith.constant 0 : index
    %c0_235 = arith.constant 0 : index
    %523 = vector.load %arg5[%c0_234, %c0_235] : memref<8x128xf32, #tpu.memory_space<vmem>>, vector<8x128xf32>
    %c0_236 = arith.constant 0 : index
    %c0_237 = arith.constant 0 : index
    %524 = vector.load %arg6[%c0_236, %c0_237] : memref<8x128xf32, #tpu.memory_space<vmem>>, vector<8x128xf32>
    %525 = arith.truncf %523 : vector<8x128xf32> to vector<8x128xbf16>
    %c0_238 = arith.constant 0 : index
    %c0_239 = arith.constant 0 : index
    %526 = vector.load %arg2[%c0_238, %c0_239] : memref<128x512xbf16, #tpu.memory_space<vmem>>, vector<128x512xbf16>
    %cst_240 = arith.constant dense<0.000000e+00> : vector<8x512xf32>
    %527 = tpu.matmul %525, %526, %cst_240 {dimension_numbers = #tpu.dot_dimension_numbers<[1], [0], [0], [1], [0, 0, 1, 1], [], []>} : vector<8x128xbf16>, vector<128x512xbf16>, vector<8x512xf32> -> vector<8x512xf32>
    %528 = arith.index_cast %c13_i32 : i32 to index
    %c0_241 = arith.constant 0 : index
    %c0_242 = arith.constant 0 : index
    %529 = vector.load %arg1[%528, %c0_241, %c0_242] : memref<16x8x512xf32, #tpu.memory_space<vmem>>, vector<1x8x512xf32>
    %530 = vector.shape_cast %529 : vector<1x8x512xf32> to vector<8x512xf32>
    %531 = arith.addf %530, %527 : vector<8x512xf32>
    %532 = vector.extract_strided_slice %531 {offsets = [0, 0], sizes = [8, 128], strides = [1, 1]} : vector<8x512xf32> to vector<8x128xf32>
    %533 = arith.negf %532 : vector<8x128xf32>
    %534 = math.exp %533 : vector<8x128xf32>
    %cst_243 = arith.constant 1.000000e+00 : f32
    %535 = vector.broadcast %cst_243 : f32 to vector<8x128xf32>
    %536 = arith.addf %535, %534 : vector<8x128xf32>
    %537 = arith.divf %535, %536 : vector<8x128xf32>
    %538 = vector.extract_strided_slice %531 {offsets = [0, 128], sizes = [8, 128], strides = [1, 1]} : vector<8x512xf32> to vector<8x128xf32>
    %539 = arith.negf %538 : vector<8x128xf32>
    %540 = math.exp %539 : vector<8x128xf32>
    %cst_244 = arith.constant 1.000000e+00 : f32
    %541 = vector.broadcast %cst_244 : f32 to vector<8x128xf32>
    %542 = arith.addf %541, %540 : vector<8x128xf32>
    %543 = arith.divf %541, %542 : vector<8x128xf32>
    %544 = vector.extract_strided_slice %531 {offsets = [0, 256], sizes = [8, 128], strides = [1, 1]} : vector<8x512xf32> to vector<8x128xf32>
    %545 = math.tanh %544 : vector<8x128xf32>
    %546 = vector.extract_strided_slice %531 {offsets = [0, 384], sizes = [8, 128], strides = [1, 1]} : vector<8x512xf32> to vector<8x128xf32>
    %547 = arith.negf %546 : vector<8x128xf32>
    %548 = math.exp %547 : vector<8x128xf32>
    %cst_245 = arith.constant 1.000000e+00 : f32
    %549 = vector.broadcast %cst_245 : f32 to vector<8x128xf32>
    %550 = arith.addf %549, %548 : vector<8x128xf32>
    %551 = arith.divf %549, %550 : vector<8x128xf32>
    %552 = arith.mulf %543, %524 : vector<8x128xf32>
    %553 = arith.mulf %537, %545 : vector<8x128xf32>
    %554 = arith.addf %552, %553 : vector<8x128xf32>
    %555 = math.tanh %554 : vector<8x128xf32>
    %556 = arith.mulf %551, %555 : vector<8x128xf32>
    %c0_246 = arith.constant 0 : index
    %c0_247 = arith.constant 0 : index
    %557 = vector.load %arg6[%c0_246, %c0_247] : memref<8x128xf32, #tpu.memory_space<vmem>>, vector<8x128xf32>
    tpu.vector_store %arg6[%c0_246, %c0_247], %554 {strides = array<i32>} : memref<8x128xf32, #tpu.memory_space<vmem>>, vector<8x128xf32>,
    %c0_248 = arith.constant 0 : index
    %c0_249 = arith.constant 0 : index
    %558 = vector.load %arg5[%c0_248, %c0_249] : memref<8x128xf32, #tpu.memory_space<vmem>>, vector<8x128xf32>
    tpu.vector_store %arg5[%c0_248, %c0_249], %556 {strides = array<i32>} : memref<8x128xf32, #tpu.memory_space<vmem>>, vector<8x128xf32>,
    %559 = arith.index_cast %c13_i32 : i32 to index
    %c0_250 = arith.constant 0 : index
    %c0_251 = arith.constant 0 : index
    %560 = vector.load %arg3[%559, %c0_250, %c0_251] : memref<16x8x128xf32, #tpu.memory_space<vmem>>, vector<1x8x128xf32>
    %561 = vector.shape_cast %560 : vector<1x8x128xf32> to vector<8x128xf32>
    %562 = vector.shape_cast %556 : vector<8x128xf32> to vector<1x8x128xf32>
    tpu.vector_store %arg3[%559, %c0_250, %c0_251], %562 {strides = array<i32>} : memref<16x8x128xf32, #tpu.memory_space<vmem>>, vector<1x8x128xf32>,
    %c14_i32 = arith.constant 14 : i32
    %c0_252 = arith.constant 0 : index
    %c0_253 = arith.constant 0 : index
    %563 = vector.load %arg5[%c0_252, %c0_253] : memref<8x128xf32, #tpu.memory_space<vmem>>, vector<8x128xf32>
    %c0_254 = arith.constant 0 : index
    %c0_255 = arith.constant 0 : index
    %564 = vector.load %arg6[%c0_254, %c0_255] : memref<8x128xf32, #tpu.memory_space<vmem>>, vector<8x128xf32>
    %565 = arith.truncf %563 : vector<8x128xf32> to vector<8x128xbf16>
    %c0_256 = arith.constant 0 : index
    %c0_257 = arith.constant 0 : index
    %566 = vector.load %arg2[%c0_256, %c0_257] : memref<128x512xbf16, #tpu.memory_space<vmem>>, vector<128x512xbf16>
    %cst_258 = arith.constant dense<0.000000e+00> : vector<8x512xf32>
    %567 = tpu.matmul %565, %566, %cst_258 {dimension_numbers = #tpu.dot_dimension_numbers<[1], [0], [0], [1], [0, 0, 1, 1], [], []>} : vector<8x128xbf16>, vector<128x512xbf16>, vector<8x512xf32> -> vector<8x512xf32>
    %568 = arith.index_cast %c14_i32 : i32 to index
    %c0_259 = arith.constant 0 : index
    %c0_260 = arith.constant 0 : index
    %569 = vector.load %arg1[%568, %c0_259, %c0_260] : memref<16x8x512xf32, #tpu.memory_space<vmem>>, vector<1x8x512xf32>
    %570 = vector.shape_cast %569 : vector<1x8x512xf32> to vector<8x512xf32>
    %571 = arith.addf %570, %567 : vector<8x512xf32>
    %572 = vector.extract_strided_slice %571 {offsets = [0, 0], sizes = [8, 128], strides = [1, 1]} : vector<8x512xf32> to vector<8x128xf32>
    %573 = arith.negf %572 : vector<8x128xf32>
    %574 = math.exp %573 : vector<8x128xf32>
    %cst_261 = arith.constant 1.000000e+00 : f32
    %575 = vector.broadcast %cst_261 : f32 to vector<8x128xf32>
    %576 = arith.addf %575, %574 : vector<8x128xf32>
    %577 = arith.divf %575, %576 : vector<8x128xf32>
    %578 = vector.extract_strided_slice %571 {offsets = [0, 128], sizes = [8, 128], strides = [1, 1]} : vector<8x512xf32> to vector<8x128xf32>
    %579 = arith.negf %578 : vector<8x128xf32>
    %580 = math.exp %579 : vector<8x128xf32>
    %cst_262 = arith.constant 1.000000e+00 : f32
    %581 = vector.broadcast %cst_262 : f32 to vector<8x128xf32>
    %582 = arith.addf %581, %580 : vector<8x128xf32>
    %583 = arith.divf %581, %582 : vector<8x128xf32>
    %584 = vector.extract_strided_slice %571 {offsets = [0, 256], sizes = [8, 128], strides = [1, 1]} : vector<8x512xf32> to vector<8x128xf32>
    %585 = math.tanh %584 : vector<8x128xf32>
    %586 = vector.extract_strided_slice %571 {offsets = [0, 384], sizes = [8, 128], strides = [1, 1]} : vector<8x512xf32> to vector<8x128xf32>
    %587 = arith.negf %586 : vector<8x128xf32>
    %588 = math.exp %587 : vector<8x128xf32>
    %cst_263 = arith.constant 1.000000e+00 : f32
    %589 = vector.broadcast %cst_263 : f32 to vector<8x128xf32>
    %590 = arith.addf %589, %588 : vector<8x128xf32>
    %591 = arith.divf %589, %590 : vector<8x128xf32>
    %592 = arith.mulf %583, %564 : vector<8x128xf32>
    %593 = arith.mulf %577, %585 : vector<8x128xf32>
    %594 = arith.addf %592, %593 : vector<8x128xf32>
    %595 = math.tanh %594 : vector<8x128xf32>
    %596 = arith.mulf %591, %595 : vector<8x128xf32>
    %c0_264 = arith.constant 0 : index
    %c0_265 = arith.constant 0 : index
    %597 = vector.load %arg6[%c0_264, %c0_265] : memref<8x128xf32, #tpu.memory_space<vmem>>, vector<8x128xf32>
    tpu.vector_store %arg6[%c0_264, %c0_265], %594 {strides = array<i32>} : memref<8x128xf32, #tpu.memory_space<vmem>>, vector<8x128xf32>,
    %c0_266 = arith.constant 0 : index
    %c0_267 = arith.constant 0 : index
    %598 = vector.load %arg5[%c0_266, %c0_267] : memref<8x128xf32, #tpu.memory_space<vmem>>, vector<8x128xf32>
    tpu.vector_store %arg5[%c0_266, %c0_267], %596 {strides = array<i32>} : memref<8x128xf32, #tpu.memory_space<vmem>>, vector<8x128xf32>,
    %599 = arith.index_cast %c14_i32 : i32 to index
    %c0_268 = arith.constant 0 : index
    %c0_269 = arith.constant 0 : index
    %600 = vector.load %arg3[%599, %c0_268, %c0_269] : memref<16x8x128xf32, #tpu.memory_space<vmem>>, vector<1x8x128xf32>
    %601 = vector.shape_cast %600 : vector<1x8x128xf32> to vector<8x128xf32>
    %602 = vector.shape_cast %596 : vector<8x128xf32> to vector<1x8x128xf32>
    tpu.vector_store %arg3[%599, %c0_268, %c0_269], %602 {strides = array<i32>} : memref<16x8x128xf32, #tpu.memory_space<vmem>>, vector<1x8x128xf32>,
    %c15_i32 = arith.constant 15 : i32
    %c0_270 = arith.constant 0 : index
    %c0_271 = arith.constant 0 : index
    %603 = vector.load %arg5[%c0_270, %c0_271] : memref<8x128xf32, #tpu.memory_space<vmem>>, vector<8x128xf32>
    %c0_272 = arith.constant 0 : index
    %c0_273 = arith.constant 0 : index
    %604 = vector.load %arg6[%c0_272, %c0_273] : memref<8x128xf32, #tpu.memory_space<vmem>>, vector<8x128xf32>
    %605 = arith.truncf %603 : vector<8x128xf32> to vector<8x128xbf16>
    %c0_274 = arith.constant 0 : index
    %c0_275 = arith.constant 0 : index
    %606 = vector.load %arg2[%c0_274, %c0_275] : memref<128x512xbf16, #tpu.memory_space<vmem>>, vector<128x512xbf16>
    %cst_276 = arith.constant dense<0.000000e+00> : vector<8x512xf32>
    %607 = tpu.matmul %605, %606, %cst_276 {dimension_numbers = #tpu.dot_dimension_numbers<[1], [0], [0], [1], [0, 0, 1, 1], [], []>} : vector<8x128xbf16>, vector<128x512xbf16>, vector<8x512xf32> -> vector<8x512xf32>
    %608 = arith.index_cast %c15_i32 : i32 to index
    %c0_277 = arith.constant 0 : index
    %c0_278 = arith.constant 0 : index
    %609 = vector.load %arg1[%608, %c0_277, %c0_278] : memref<16x8x512xf32, #tpu.memory_space<vmem>>, vector<1x8x512xf32>
    %610 = vector.shape_cast %609 : vector<1x8x512xf32> to vector<8x512xf32>
    %611 = arith.addf %610, %607 : vector<8x512xf32>
    %612 = vector.extract_strided_slice %611 {offsets = [0, 0], sizes = [8, 128], strides = [1, 1]} : vector<8x512xf32> to vector<8x128xf32>
    %613 = arith.negf %612 : vector<8x128xf32>
    %614 = math.exp %613 : vector<8x128xf32>
    %cst_279 = arith.constant 1.000000e+00 : f32
    %615 = vector.broadcast %cst_279 : f32 to vector<8x128xf32>
    %616 = arith.addf %615, %614 : vector<8x128xf32>
    %617 = arith.divf %615, %616 : vector<8x128xf32>
    %618 = vector.extract_strided_slice %611 {offsets = [0, 128], sizes = [8, 128], strides = [1, 1]} : vector<8x512xf32> to vector<8x128xf32>
    %619 = arith.negf %618 : vector<8x128xf32>
    %620 = math.exp %619 : vector<8x128xf32>
    %cst_280 = arith.constant 1.000000e+00 : f32
    %621 = vector.broadcast %cst_280 : f32 to vector<8x128xf32>
    %622 = arith.addf %621, %620 : vector<8x128xf32>
    %623 = arith.divf %621, %622 : vector<8x128xf32>
    %624 = vector.extract_strided_slice %611 {offsets = [0, 256], sizes = [8, 128], strides = [1, 1]} : vector<8x512xf32> to vector<8x128xf32>
    %625 = math.tanh %624 : vector<8x128xf32>
    %626 = vector.extract_strided_slice %611 {offsets = [0, 384], sizes = [8, 128], strides = [1, 1]} : vector<8x512xf32> to vector<8x128xf32>
    %627 = arith.negf %626 : vector<8x128xf32>
    %628 = math.exp %627 : vector<8x128xf32>
    %cst_281 = arith.constant 1.000000e+00 : f32
    %629 = vector.broadcast %cst_281 : f32 to vector<8x128xf32>
    %630 = arith.addf %629, %628 : vector<8x128xf32>
    %631 = arith.divf %629, %630 : vector<8x128xf32>
    %632 = arith.mulf %623, %604 : vector<8x128xf32>
    %633 = arith.mulf %617, %625 : vector<8x128xf32>
    %634 = arith.addf %632, %633 : vector<8x128xf32>
    %635 = math.tanh %634 : vector<8x128xf32>
    %636 = arith.mulf %631, %635 : vector<8x128xf32>
    %c0_282 = arith.constant 0 : index
    %c0_283 = arith.constant 0 : index
    %637 = vector.load %arg6[%c0_282, %c0_283] : memref<8x128xf32, #tpu.memory_space<vmem>>, vector<8x128xf32>
    tpu.vector_store %arg6[%c0_282, %c0_283], %634 {strides = array<i32>} : memref<8x128xf32, #tpu.memory_space<vmem>>, vector<8x128xf32>,
    %c0_284 = arith.constant 0 : index
    %c0_285 = arith.constant 0 : index
    %638 = vector.load %arg5[%c0_284, %c0_285] : memref<8x128xf32, #tpu.memory_space<vmem>>, vector<8x128xf32>
    tpu.vector_store %arg5[%c0_284, %c0_285], %636 {strides = array<i32>} : memref<8x128xf32, #tpu.memory_space<vmem>>, vector<8x128xf32>,
    %639 = arith.index_cast %c15_i32 : i32 to index
    %c0_286 = arith.constant 0 : index
    %c0_287 = arith.constant 0 : index
    %640 = vector.load %arg3[%639, %c0_286, %c0_287] : memref<16x8x128xf32, #tpu.memory_space<vmem>>, vector<1x8x128xf32>
    %641 = vector.shape_cast %640 : vector<1x8x128xf32> to vector<8x128xf32>
    %642 = vector.shape_cast %636 : vector<8x128xf32> to vector<1x8x128xf32>
    tpu.vector_store %arg3[%639, %c0_286, %c0_287], %642 {strides = array<i32>} : memref<16x8x128xf32, #tpu.memory_space<vmem>>, vector<1x8x128xf32>,
    %c16_i32 = arith.constant 16 : i32
    %c0_i32_288 = arith.constant 0 : i32
    %643 = arith.cmpi eq, %arg0, %c0_i32_288 : i32
    %644 = arith.extui %643 : i1 to i32
    %c0_i32_289 = arith.constant 0 : i32
    %645 = arith.cmpi ne, %644, %c0_i32_289 : i32
    scf.if %645 {
      %c0_290 = arith.constant 0 : index
      %c0_291 = arith.constant 0 : index
      %646 = vector.load %arg6[%c0_290, %c0_291] : memref<8x128xf32, #tpu.memory_space<vmem>>, vector<8x128xf32>
      %c0_292 = arith.constant 0 : index
      %c0_293 = arith.constant 0 : index
      %c0_294 = arith.constant 0 : index
      %647 = vector.load %arg4[%c0_292, %c0_293, %c0_294] : memref<1x8x128xf32, #tpu.memory_space<vmem>>, vector<1x8x128xf32>
      %648 = vector.shape_cast %647 : vector<1x8x128xf32> to vector<8x128xf32>
      %649 = vector.shape_cast %646 : vector<8x128xf32> to vector<1x8x128xf32>
      tpu.vector_store %arg4[%c0_292, %c0_293, %c0_294], %649 {strides = array<i32>} : memref<1x8x128xf32, #tpu.memory_space<vmem>>, vector<1x8x128xf32>,
    } else {
    }
    return
  }
  func.func @transform_0(%arg0: i32) -> (i32, i32, i32) {
    %c0_i32 = arith.constant 0 : i32
    %c0_i32_0 = arith.constant 0 : i32
    %c0_i32_1 = arith.constant 0 : i32
    return %arg0, %c0_i32, %c0_i32_0 : i32, i32, i32
  }
  func.func @transform_1(%arg0: i32) -> (i32, i32) {
    %c0_i32 = arith.constant 0 : i32
    %c0_i32_0 = arith.constant 0 : i32
    %c0_i32_1 = arith.constant 0 : i32
    return %c0_i32, %c0_i32_0 : i32, i32
  }
  func.func @transform_2(%arg0: i32) -> (i32, i32, i32) {
    %c0_i32 = arith.constant 0 : i32
    %c0_i32_0 = arith.constant 0 : i32
    %c0_i32_1 = arith.constant 0 : i32
    return %arg0, %c0_i32, %c0_i32_0 : i32, i32, i32
  }
  func.func @transform_3(%arg0: i32) -> (i32, i32, i32) {
    %c0_i32 = arith.constant 0 : i32
    %c0_i32_0 = arith.constant 0 : i32
    %c0_i32_1 = arith.constant 0 : i32
    %c0_i32_2 = arith.constant 0 : i32
    return %c0_i32, %c0_i32_0, %c0_i32_1 : i32, i32, i32
  }
}

</mosaic_0001>

<llo_original>
// kernel: tpu_custom_call.1
$region0: #{tpu_custom_call.1}
  #allocation0 [shape = 'u32[]', space=smem, size = 0x4, offset = 0x4, fixed_abs, tag = 'smem constant byte address 0x4 - core index']
  #allocation1 [shape = 'u32[144,128]{1,0:T(1,128)}', space=vmem, size = 0x12000, scoped, tag = 'internal scratch']
  #allocation2 [shape = 'f32[8,128]{1,0:T(8,128)}', space=vmem, size = 0x1000, scoped, tag = 'scratch operand']
  #allocation3 [shape = 'f32[8,128]{1,0:T(8,128)}', space=vmem, size = 0x1000, scoped, tag = 'scratch operand']
  %s0 = inlined_call_operand.hbm [shape: f32[16,8,512], index: 0, kind: input, shape index: {}]
  %s1 = inlined_call_operand.hbm [shape: bf16[128,512], index: 1, kind: input, shape index: {}]
  %s2 = inlined_call_operand.hbm [shape: f32[16,8,128], index: 2, kind: output, shape index: {0}]
  %s3 = inlined_call_operand.hbm [shape: f32[1,8,128], index: 3, kind: output, shape index: {1}]
  %4 = xla_tuple %s2, %s3
  %s5 = sld [smem:[#allocation0]]
  $region42: #{tpu_custom_call.1} parent=0
    _
  %s7 = ssub.s32 1, %s5
  %s8 = scalar_select 0, %s7, %s5
  $region1: #{tpu_custom_call.1} parent=0
    #allocation4 [shape = 'u8[262144]{0}', space=vmem, size = 0x40000, scoped, tag = 'input window, operand 0, single buffered']
    #allocation5 [shape = 's32[1]{0}', space=sflag, size = 0x4, scoped, tag = 'scoped memory for tpu_custom_call.1']
    #allocation6 [shape = 's32[1]{0}', space=sflag, size = 0x4, scoped, tag = 'scoped memory for tpu_custom_call.1']
    #allocation7 [shape = 'u8[131072]{0}', space=vmem, size = 0x20000, scoped, tag = 'input window, operand 1, single buffered']
    #allocation8 [shape = 's32[1]{0}', space=sflag, size = 0x4, scoped, tag = 'scoped memory for tpu_custom_call.1']
    #allocation9 [shape = 'u8[65536]{0}', space=vmem, size = 0x10000, scoped, tag = 'output window, operand 0, single buffered']
    #allocation10 [shape = 'u8[4096]{0}', space=vmem, size = 0x1000, scoped, tag = 'output window, operand 1, single buffered']
    #allocation11 [shape = 's32[1]{0}', space=sflag, size = 0x4, scoped, tag = 'scoped memory for tpu_custom_call.1']
    %9 = vsyncpa [#allocation5], 0
    %10 = vsyncpa [#allocation8], 0
    %11 = vsyncpa [#allocation6], 0
    %12 = vsyncpa [#allocation11], 0
    // Predicated region
    $region2: #{tpu_custom_call.1} parent=1 // pred_check
      _
    $region3: #{tpu_custom_call.1} parent=1 // pred_check_branch
      %14 = sbr.rel (0) target = $region5
    $region4: #{tpu_custom_call.1} parent=1 // pred_region
      %s16 = ssub.s32 8192, 8192
      %17 = vsyncadd [#allocation5], %s16
      %s18 = sshll.u32 [#allocation4], 4
      %s19 = int_to_ptr.vmem [resolvable:$true] %s18
      %24 = dma.hbm_to_vmem [thread:$0]  %s0, 8192, %s19, [#allocation5], 512, 512, 32
    $region5: #{tpu_custom_call.1} parent=1 // pred_fallthru
      _
    // Predicated region
    $region6: #{tpu_custom_call.1} parent=1 // pred_check
      _
    $region7: #{tpu_custom_call.1} parent=1 // pred_check_branch
      %26 = sbr.rel (0) target = $region9
    $region8: #{tpu_custom_call.1} parent=1 // pred_region
      %s28 = ssub.s32 4096, 4096
      %29 = vsyncadd [#allocation8], %s28
      %s30 = sshll.u32 [#allocation7], 4
      %s31 = int_to_ptr.vmem [resolvable:$true] %s30
      %36 = dma.hbm_to_vmem [thread:$0]  %s1, 4096, %s31, [#allocation8], 256, 256, 16
    $region9: #{tpu_custom_call.1} parent=1 // pred_fallthru
      _
    // Predicated region
    $region10: #{tpu_custom_call.1} parent=1 // pred_check
      _
    $region11: #{tpu_custom_call.1} parent=1 // pred_check_branch
      %38 = sbr.rel (0) target = $region13
    $region12: #{tpu_custom_call.1} parent=1 // pred_region
      %39 = dma.done [#allocation5], 8192
    $region13: #{tpu_custom_call.1} parent=1 // pred_fallthru
      _
    // Predicated region
    $region14: #{tpu_custom_call.1} parent=1 // pred_check
      _
    $region15: #{tpu_custom_call.1} parent=1 // pred_check_branch
      %41 = sbr.rel (0) target = $region17
    $region16: #{tpu_custom_call.1} parent=1 // pred_region
      %42 = dma.done [#allocation8], 4096
    $region17: #{tpu_custom_call.1} parent=1 // pred_fallthru
      _
    %p44 = scmp.eq.s32.totalorder 0, 0
    // Predicated region
    $region18: #{tpu_custom_call.1} parent=1 // pred_check
      %p45 = pneg %p44
    $region19: #{tpu_custom_call.1} parent=1 // pred_check_branch
      %47 = sbr.rel (%p45) target = $region21
    $region20: #{tpu_custom_call.1} parent=1 // pred_region
      %48 = vst [vmem:[#allocation2] sm:$0xff] 0.0
      %49 = vst [vmem:[#allocation3] sm:$0xff] 0.0
    $region21: #{tpu_custom_call.1} parent=1 // pred_fallthru
      _
    %v50 = vld [vmem:[#allocation2] sm:$0xff]
    %v51 = vld [vmem:[#allocation3] sm:$0xff]
    %v52 = vpack.c.bf16 %v50, %v50
    %v53 = vld [vmem:[#allocation7] sm:$0xff]
    %v54 = vld [vmem:[#allocation7 + $0x8] sm:$0xff]
    %v55 = vld [vmem:[#allocation7 + $0x10] sm:$0xff]
    %v56 = vld [vmem:[#allocation7 + $0x18] sm:$0xff]
    %v57 = vld [vmem:[#allocation7 + $0x20] sm:$0xff]
    %v58 = vld [vmem:[#allocation7 + $0x28] sm:$0xff]
    %v59 = vld [vmem:[#allocation7 + $0x30] sm:$0xff]
    %v60 = vld [vmem:[#allocation7 + $0x38] sm:$0xff]
    %v61 = vld [vmem:[#allocation7 + $0x40] sm:$0xff]
    %v62 = vld [vmem:[#allocation7 + $0x48] sm:$0xff]
    %v63 = vld [vmem:[#allocation7 + $0x50] sm:$0xff]
    %v64 = vld [vmem:[#allocation7 + $0x58] sm:$0xff]
    %v65 = vld [vmem:[#allocation7 + $0x60] sm:$0xff]
    %v66 = vld [vmem:[#allocation7 + $0x68] sm:$0xff]
    %v67 = vld [vmem:[#allocation7 + $0x70] sm:$0xff]
    %v68 = vld [vmem:[#allocation7 + $0x78] sm:$0xff]
    %v69 = vld [vmem:[#allocation7 + $0x80] sm:$0xff]
    %v70 = vld [vmem:[#allocation7 + $0x88] sm:$0xff]
    %v71 = vld [vmem:[#allocation7 + $0x90] sm:$0xff]
    %v72 = vld [vmem:[#allocation7 + $0x98] sm:$0xff]
    %v73 = vld [vmem:[#allocation7 + $0xa0] sm:$0xff]
    %v74 = vld [vmem:[#allocation7 + $0xa8] sm:$0xff]
    %v75 = vld [vmem:[#allocation7 + $0xb0] sm:$0xff]
    %v76 = vld [vmem:[#allocation7 + $0xb8] sm:$0xff]
    %v77 = vld [vmem:[#allocation7 + $0xc0] sm:$0xff]
    %v78 = vld [vmem:[#allocation7 + $0xc8] sm:$0xff]
    %v79 = vld [vmem:[#allocation7 + $0xd0] sm:$0xff]
    %v80 = vld [vmem:[#allocation7 + $0xd8] sm:$0xff]
    %v81 = vld [vmem:[#allocation7 + $0xe0] sm:$0xff]
    %v82 = vld [vmem:[#allocation7 + $0xe8] sm:$0xff]
    %v83 = vld [vmem:[#allocation7 + $0xf0] sm:$0xff]
    %v84 = vld [vmem:[#allocation7 + $0xf8] sm:$0xff]
    %v117 = vunpack.c.l.b16 %v53
    %v118 = vunpack.c.h.b16 %v53
    %v119 = vunpack.c.l.b16 %v54
    %v120 = vunpack.c.h.b16 %v54
    %v121 = vunpack.c.l.b16 %v55
    %v122 = vunpack.c.h.b16 %v55
    %v123 = vunpack.c.l.b16 %v56
    %v124 = vunpack.c.h.b16 %v56
    %v125 = vunpack.c.l.b16 %v57
    %v126 = vunpack.c.h.b16 %v57
    %v127 = vunpack.c.l.b16 %v58
    %v128 = vunpack.c.h.b16 %v58
    %v129 = vunpack.c.l.b16 %v59
    %v130 = vunpack.c.h.b16 %v59
    %v131 = vunpack.c.l.b16 %v60
    %v132 = vunpack.c.h.b16 %v60
    %v133 = vunpack.c.l.b16 %v61
    %v134 = vunpack.c.h.b16 %v61
    %v135 = vunpack.c.l.b16 %v62
    %v136 = vunpack.c.h.b16 %v62
    %v137 = vunpack.c.l.b16 %v63
    %v138 = vunpack.c.h.b16 %v63
    %v139 = vunpack.c.l.b16 %v64
    %v140 = vunpack.c.h.b16 %v64
    %v141 = vunpack.c.l.b16 %v65
    %v142 = vunpack.c.h.b16 %v65
    %v143 = vunpack.c.l.b16 %v66
    %v144 = vunpack.c.h.b16 %v66
    %v145 = vunpack.c.l.b16 %v67
    %v146 = vunpack.c.h.b16 %v67
    %v147 = vunpack.c.l.b16 %v68
    %v148 = vunpack.c.h.b16 %v68
    %v149 = vunpack.c.l.b16 %v69
    %v150 = vunpack.c.h.b16 %v69
    %v151 = vunpack.c.l.b16 %v70
    %v152 = vunpack.c.h.b16 %v70
    %v153 = vunpack.c.l.b16 %v71
    %v154 = vunpack.c.h.b16 %v71
    %v155 = vunpack.c.l.b16 %v72
    %v156 = vunpack.c.h.b16 %v72
    %v157 = vunpack.c.l.b16 %v73
    %v158 = vunpack.c.h.b16 %v73
    %v159 = vunpack.c.l.b16 %v74
    %v160 = vunpack.c.h.b16 %v74
    %v161 = vunpack.c.l.b16 %v75
    %v162 = vunpack.c.h.b16 %v75
    %v163 = vunpack.c.l.b16 %v76
    %v164 = vunpack.c.h.b16 %v76
    %v165 = vunpack.c.l.b16 %v77
    %v166 = vunpack.c.h.b16 %v77
    %v167 = vunpack.c.l.b16 %v78
    %v168 = vunpack.c.h.b16 %v78
    %v169 = vunpack.c.l.b16 %v79
    %v170 = vunpack.c.h.b16 %v79
    %v171 = vunpack.c.l.b16 %v80
    %v172 = vunpack.c.h.b16 %v80
    %v173 = vunpack.c.l.b16 %v81
    %v174 = vunpack.c.h.b16 %v81
    %v175 = vunpack.c.l.b16 %v82
    %v176 = vunpack.c.h.b16 %v82
    %v177 = vunpack.c.l.b16 %v83
    %v178 = vunpack.c.h.b16 %v83
    %v179 = vunpack.c.l.b16 %v84
    %v180 = vunpack.c.h.b16 %v84
    %v181 = vpack.c.b16 %v121, %v117
    %v182 = vpack.c.b16 %v122, %v118
    %v183 = vpack.c.b16 %v123, %v119
    %v184 = vpack.c.b16 %v124, %v120
    %v185 = vpack.c.b16 %v129, %v125
    %v186 = vpack.c.b16 %v130, %v126
    %v187 = vpack.c.b16 %v131, %v127
    %v188 = vpack.c.b16 %v132, %v128
    %v189 = vpack.c.b16 %v137, %v133
    %v190 = vpack.c.b16 %v138, %v134
    %v191 = vpack.c.b16 %v139, %v135
    %v192 = vpack.c.b16 %v140, %v136
    %v193 = vpack.c.b16 %v145, %v141
    %v194 = vpack.c.b16 %v146, %v142
    %v195 = vpack.c.b16 %v147, %v143
    %v196 = vpack.c.b16 %v148, %v144
    %v197 = vpack.c.b16 %v153, %v149
    %v198 = vpack.c.b16 %v154, %v150
    %v199 = vpack.c.b16 %v155, %v151
    %v200 = vpack.c.b16 %v156, %v152
    %v201 = vpack.c.b16 %v161, %v157
    %v202 = vpack.c.b16 %v162, %v158
    %v203 = vpack.c.b16 %v163, %v159
    %v204 = vpack.c.b16 %v164, %v160
    %v205 = vpack.c.b16 %v169, %v165
    %v206 = vpack.c.b16 %v170, %v166
    %v207 = vpack.c.b16 %v171, %v167
    %v208 = vpack.c.b16 %v172, %v168
    %v209 = vpack.c.b16 %v177, %v173
    %v210 = vpack.c.b16 %v178, %v174
    %v211 = vpack.c.b16 %v179, %v175
    %v212 = vpack.c.b16 %v180, %v176
    %245 = vmatprep.subr.bf16.mxu0 %v182
    %246 = vmatpush1.bf16.msra.mxu0 %v181
    %247 = vmatprep.subr.bf16.mxu0 %v186
    %248 = vmatpush1.bf16.msra.mxu0 %v185
    %249 = vmatprep.subr.bf16.mxu0 %v190
    %250 = vmatpush1.bf16.msra.mxu0 %v189
    %251 = vmatprep.subr.bf16.mxu0 %v194
    %252 = vmatpush1.bf16.msra.mxu0 %v193
    %253 = vmatprep.subr.bf16.mxu0 %v198
    %254 = vmatpush1.bf16.msra.mxu0 %v197
    %255 = vmatprep.subr.bf16.mxu0 %v202
    %256 = vmatpush1.bf16.msra.mxu0 %v201
    %257 = vmatprep.subr.bf16.mxu0 %v206
    %258 = vmatpush1.bf16.msra.mxu0 %v205
    %259 = vmatprep.subr.bf16.mxu0 %v210
    %260 = vmatpush1.bf16.msra.mxu0 %v209
    %261 = vmatprep.subr.bf16.mxu0 0
    %262 = vmatpush1.bf16.msra.mxu0 0
    %263 = vmatprep.subr.bf16.mxu0 0
    %264 = vmatpush1.bf16.msra.mxu0 0
    %265 = vmatprep.subr.bf16.mxu0 0
    %266 = vmatpush1.bf16.msra.mxu0 0
    %267 = vmatprep.subr.bf16.mxu0 0
    %268 = vmatpush1.bf16.msra.mxu0 0
    %269 = vmatprep.subr.bf16.mxu0 0
    %270 = vmatpush1.bf16.msra.mxu0 0
    %271 = vmatprep.subr.bf16.mxu0 0
    %272 = vmatpush1.bf16.msra.mxu0 0
    %273 = vmatprep.subr.bf16.mxu0 0
    %274 = vmatpush1.bf16.msra.mxu0 0
    %275 = vmatprep.subr.bf16.mxu0 0
    %276 = vmatpush1.bf16.msra.mxu0 0
    %277 = vmatprep.mubr.bf16.mxu0 0
    %278 = vmatmul.mubr.bf16.gmra.mrb[0].mxu0 %v52
    %v279 = vpop.f32.mrb[0].mxu0
    %v280 = vadd.f32 0.0, %v279
    %v281 = vpop.f32.mrb[0].mxu0
    %v282 = vadd.f32 0.0, %v281
    %v283 = vpop.f32.mrb[0].mxu0
    %v284 = vpop.f32.mrb[0].mxu0
    %285 = vdwg.mxu0
    %286 = vmatprep.subr.bf16.mxu0 %v184
    %287 = vmatpush1.bf16.msra.mxu0 %v183
    %288 = vmatprep.subr.bf16.mxu0 %v188
    %289 = vmatpush1.bf16.msra.mxu0 %v187
    %290 = vmatprep.subr.bf16.mxu0 %v192
    %291 = vmatpush1.bf16.msra.mxu0 %v191
    %292 = vmatprep.subr.bf16.mxu0 %v196
    %293 = vmatpush1.bf16.msra.mxu0 %v195
    %294 = vmatprep.subr.bf16.mxu0 %v200
    %295 = vmatpush1.bf16.msra.mxu0 %v199
    %296 = vmatprep.subr.bf16.mxu0 %v204
    %297 = vmatpush1.bf16.msra.mxu0 %v203
    %298 = vmatprep.subr.bf16.mxu0 %v208
    %299 = vmatpush1.bf16.msra.mxu0 %v207
    %300 = vmatprep.subr.bf16.mxu0 %v212
    %301 = vmatpush1.bf16.msra.mxu0 %v211
    %302 = vmatprep.subr.bf16.mxu0 0
    %303 = vmatpush1.bf16.msra.mxu0 0
    %304 = vmatprep.subr.bf16.mxu0 0
    %305 = vmatpush1.bf16.msra.mxu0 0
    %306 = vmatprep.subr.bf16.mxu0 0
    %307 = vmatpush1.bf16.msra.mxu0 0
    %308 = vmatprep.subr.bf16.mxu0 0
    %309 = vmatpush1.bf16.msra.mxu0 0
    %310 = vmatprep.subr.bf16.mxu0 0
    %311 = vmatpush1.bf16.msra.mxu0 0
    %312 = vmatprep.subr.bf16.mxu0 0
    %313 = vmatpush1.bf16.msra.mxu0 0
    %314 = vmatprep.subr.bf16.mxu0 0
    %315 = vmatpush1.bf16.msra.mxu0 0
    %316 = vmatprep.subr.bf16.mxu0 0
    %317 = vmatpush1.bf16.msra.mxu0 0
    %318 = vmatprep.mubr.bf16.mxu0 0
    %319 = vmatmul.mubr.bf16.gmra.mrb[0].mxu0 %v52
    %v320 = vpop.f32.mrb[0].mxu0
    %v321 = vadd.f32 0.0, %v320
    %v322 = vpop.f32.mrb[0].mxu0
    %v323 = vadd.f32 0.0, %v322
    %v324 = vpop.f32.mrb[0].mxu0
    %v325 = vpop.f32.mrb[0].mxu0
    %326 = vdwg.mxu0
    %v327 = vld [vmem:[#allocation4] sm:$0xff]
    %v328 = vld [vmem:[#allocation4 + $0x8] sm:$0xff]
    %v329 = vld [vmem:[#allocation4 + $0x10] sm:$0xff]
    %v330 = vld [vmem:[#allocation4 + $0x18] sm:$0xff]
    %v331 = vadd.f32 %v327, %v280
    %v332 = vadd.f32 %v328, %v282
    %v333 = vadd.f32 %v329, %v321
    %v334 = vadd.f32 %v330, %v323
    %v335 = vxor.u32 %v331, 2147483648
    %v336 = vmul.f32 %v335, 1.442695
    %v337 = vpow.pop %v336
    %v338 = vadd.f32 %v337, 1.0
    %v339 = vrcp.pop %v338
    %v340 = vmul.f32 1.0, %v339
    %v341 = vxor.u32 %v332, 2147483648
    %v342 = vmul.f32 %v341, 1.442695
    %v343 = vpow.pop %v342
    %v344 = vadd.f32 %v343, 1.0
    %v345 = vrcp.pop %v344
    %v346 = vmul.f32 1.0, %v345
    %v347 = vtanh.pop %v333
    %v348 = vxor.u32 %v334, 2147483648
    %v349 = vmul.f32 %v348, 1.442695
    %v350 = vpow.pop %v349
    %v351 = vadd.f32 %v350, 1.0
    %v352 = vrcp.pop %v351
    %v353 = vmul.f32 1.0, %v352
    %v354 = vmul.f32 %v346, %v51
    %v355 = vmul.f32 %v340, %v347
    %v356 = vadd.f32 %v354, %v355
    %v357 = vtanh.pop %v356
    %v358 = vmul.f32 %v353, %v357
    %359 = vst [vmem:[#allocation3] sm:$0xff] %v356
    %360 = vst [vmem:[#allocation2] sm:$0xff] %v358
    %361 = vst [vmem:[#allocation9] sm:$0xff] %v358
    %v362 = vld [vmem:[#allocation2] sm:$0xff]
    %v363 = vld [vmem:[#allocation3] sm:$0xff]
    %v364 = vpack.c.bf16 %v362, %v362
    %v365 = vld [vmem:[#allocation7] sm:$0xff]
    %v366 = vld [vmem:[#allocation7 + $0x8] sm:$0xff]
    %v367 = vld [vmem:[#allocation7 + $0x10] sm:$0xff]
    %v368 = vld [vmem:[#allocation7 + $0x18] sm:$0xff]
    %v369 = vld [vmem:[#allocation7 + $0x20] sm:$0xff]
    %v370 = vld [vmem:[#allocation7 + $0x28] sm:$0xff]
    %v371 = vld [vmem:[#allocation7 + $0x30] sm:$0xff]
    %v372 = vld [vmem:[#allocation7 + $0x38] sm:$0xff]
    %v373 = vld [vmem:[#allocation7 + $0x40] sm:$0xff]
    %v374 = vld [vmem:[#allocation7 + $0x48] sm:$0xff]
    %v375 = vld [vmem:[#allocation7 + $0x50] sm:$0xff]
    %v376 = vld [vmem:[#allocation7 + $0x58] sm:$0xff]
    %v377 = vld [vmem:[#allocation7 + $0x60] sm:$0xff]
    %v378 = vld [vmem:[#allocation7 + $0x68] sm:$0xff]
    %v379 = vld [vmem:[#allocation7 + $0x70] sm:$0xff]
    %v380 = vld [vmem:[#allocation7 + $0x78] sm:$0xff]
    %v381 = vld [vmem:[#allocation7 + $0x80] sm:$0xff]
    %v382 = vld [vmem:[#allocation7 + $0x88] sm:$0xff]
    %v383 = vld [vmem:[#allocation7 + $0x90] sm:$0xff]
    %v384 = vld [vmem:[#allocation7 + $0x98] sm:$0xff]
    %v385 = vld [vmem:[#allocation7 + $0xa0] sm:$0xff]
    %v386 = vld [vmem:[#allocation7 + $0xa8] sm:$0xff]
    %v387 = vld [vmem:[#allocation7 + $0xb0] sm:$0xff]
    %v388 = vld [vmem:[#allocation7 + $0xb8] sm:$0xff]
    %v389 = vld [vmem:[#allocation7 + $0xc0] sm:$0xff]
    %v390 = vld [vmem:[#allocation7 + $0xc8] sm:$0xff]
    %v391 = vld [vmem:[#allocation7 + $0xd0] sm:$0xff]
    %v392 = vld [vmem:[#allocation7 + $0xd8] sm:$0xff]
    %v393 = vld [vmem:[#allocation7 + $0xe0] sm:$0xff]
    %v394 = vld [vmem:[#allocation7 + $0xe8] sm:$0xff]
    %v395 = vld [vmem:[#allocation7 + $0xf0] sm:$0xff]
    %v396 = vld [vmem:[#allocation7 + $0xf8] sm:$0xff]
    %v429 = vunpack.c.l.b16 %v365
    %v430 = vunpack.c.h.b16 %v365
    %v431 = vunpack.c.l.b16 %v366
    %v432 = vunpack.c.h.b16 %v366
    %v433 = vunpack.c.l.b16 %v367
    %v434 = vunpack.c.h.b16 %v367
    %v435 = vunpack.c.l.b16 %v368
    %v436 = vunpack.c.h.b16 %v368
    %v437 = vunpack.c.l.b16 %v369
    %v438 = vunpack.c.h.b16 %v369
    %v439 = vunpack.c.l.b16 %v370
    %v440 = vunpack.c.h.b16 %v370
    %v441 = vunpack.c.l.b16 %v371
    %v442 = vunpack.c.h.b16 %v371
    %v443 = vunpack.c.l.b16 %v372
    %v444 = vunpack.c.h.b16 %v372
    %v445 = vunpack.c.l.b16 %v373
    %v446 = vunpack.c.h.b16 %v373
    %v447 = vunpack.c.l.b16 %v374
    %v448 = vunpack.c.h.b16 %v374
    %v449 = vunpack.c.l.b16 %v375
    %v450 = vunpack.c.h.b16 %v375
    %v451 = vunpack.c.l.b16 %v376
    %v452 = vunpack.c.h.b16 %v376
    %v453 = vunpack.c.l.b16 %v377
    %v454 = vunpack.c.h.b16 %v377
    %v455 = vunpack.c.l.b16 %v378
    %v456 = vunpack.c.h.b16 %v378
    %v457 = vunpack.c.l.b16 %v379
    %v458 = vunpack.c.h.b16 %v379
    %v459 = vunpack.c.l.b16 %v380
    %v460 = vunpack.c.h.b16 %v380
    %v461 = vunpack.c.l.b16 %v381
    %v462 = vunpack.c.h.b16 %v381
    %v463 = vunpack.c.l.b16 %v382
    %v464 = vunpack.c.h.b16 %v382
    %v465 = vunpack.c.l.b16 %v383
    %v466 = vunpack.c.h.b16 %v383
    %v467 = vunpack.c.l.b16 %v384
    %v468 = vunpack.c.h.b16 %v384
    %v469 = vunpack.c.l.b16 %v385
    %v470 = vunpack.c.h.b16 %v385
    %v471 = vunpack.c.l.b16 %v386
    %v472 = vunpack.c.h.b16 %v386
    %v473 = vunpack.c.l.b16 %v387
    %v474 = vunpack.c.h.b16 %v387
    %v475 = vunpack.c.l.b16 %v388
    %v476 = vunpack.c.h.b16 %v388
    %v477 = vunpack.c.l.b16 %v389
    %v478 = vunpack.c.h.b16 %v389
    %v479 = vunpack.c.l.b16 %v390
    %v480 = vunpack.c.h.b16 %v390
    %v481 = vunpack.c.l.b16 %v391
    %v482 = vunpack.c.h.b16 %v391
    %v483 = vunpack.c.l.b16 %v392
    %v484 = vunpack.c.h.b16 %v392
    %v485 = vunpack.c.l.b16 %v393
    %v486 = vunpack.c.h.b16 %v393
    %v487 = vunpack.c.l.b16 %v394
    %v488 = vunpack.c.h.b16 %v394
    %v489 = vunpack.c.l.b16 %v395
    %v490 = vunpack.c.h.b16 %v395
    %v491 = vunpack.c.l.b16 %v396
    %v492 = vunpack.c.h.b16 %v396
    %v493 = vpack.c.b16 %v433, %v429
    %v494 = vpack.c.b16 %v434, %v430
    %v495 = vpack.c.b16 %v435, %v431
    %v496 = vpack.c.b16 %v436, %v432
    %v497 = vpack.c.b16 %v441, %v437
    %v498 = vpack.c.b16 %v442, %v438
    %v499 = vpack.c.b16 %v443, %v439
    %v500 = vpack.c.b16 %v444, %v440
    %v501 = vpack.c.b16 %v449, %v445
    %v502 = vpack.c.b16 %v450, %v446
    %v503 = vpack.c.b16 %v451, %v447
    %v504 = vpack.c.b16 %v452, %v448
    %v505 = vpack.c.b16 %v457, %v453
    %v506 = vpack.c.b16 %v458, %v454
    %v507 = vpack.c.b16 %v459, %v455
    %v508 = vpack.c.b16 %v460, %v456
    %v509 = vpack.c.b16 %v465, %v461
    %v510 = vpack.c.b16 %v466, %v462
    %v511 = vpack.c.b16 %v467, %v463
    %v512 = vpack.c.b16 %v468, %v464
    %v513 = vpack.c.b16 %v473, %v469
    %v514 = vpack.c.b16 %v474, %v470
    %v515 = vpack.c.b16 %v475, %v471
    %v516 = vpack.c.b16 %v476, %v472
    %v517 = vpack.c.b16 %v481, %v477
    %v518 = vpack.c.b16 %v482, %v478
    %v519 = vpack.c.b16 %v483, %v479
    %v520 = vpack.c.b16 %v484, %v480
    %v521 = vpack.c.b16 %v489, %v485
    %v522 = vpack.c.b16 %v490, %v486
    %v523 = vpack.c.b16 %v491, %v487
    %v524 = vpack.c.b16 %v492, %v488
    %557 = vmatprep.subr.bf16.mxu0 %v494
    %558 = vmatpush1.bf16.msra.mxu0 %v493
    %559 = vmatprep.subr.bf16.mxu0 %v498
    %560 = vmatpush1.bf16.msra.mxu0 %v497
    %561 = vmatprep.subr.bf16.mxu0 %v502
    %562 = vmatpush1.bf16.msra.mxu0 %v501
    %563 = vmatprep.subr.bf16.mxu0 %v506
    %564 = vmatpush1.bf16.msra.mxu0 %v505
    %565 = vmatprep.subr.bf16.mxu0 %v510
    %566 = vmatpush1.bf16.msra.mxu0 %v509
    %567 = vmatprep.subr.bf16.mxu0 %v514
    %568 = vmatpush1.bf16.msra.mxu0 %v513
    %569 = vmatprep.subr.bf16.mxu0 %v518
    %570 = vmatpush1.bf16.msra.mxu0 %v517
    %571 = vmatprep.subr.bf16.mxu0 %v522
    %572 = vmatpush1.bf16.msra.mxu0 %v521
    %573 = vmatprep.subr.bf16.mxu0 0
    %574 = vmatpush1.bf16.msra.mxu0 0
    %575 = vmatprep.subr.bf16.mxu0 0
    %576 = vmatpush1.bf16.msra.mxu0 0
    %577 = vmatprep.subr.bf16.mxu0 0
    %578 = vmatpush1.bf16.msra.mxu0 0
    %579 = vmatprep.subr.bf16.mxu0 0
    %580 = vmatpush1.bf16.msra.mxu0 0
    %581 = vmatprep.subr.bf16.mxu0 0
    %582 = vmatpush1.bf16.msra.mxu0 0
    %583 = vmatprep.subr.bf16.mxu0 0
    %584 = vmatpush1.bf16.msra.mxu0 0
    %585 = vmatprep.subr.bf16.mxu0 0
    %586 = vmatpush1.bf16.msra.mxu0 0
    %587 = vmatprep.subr.bf16.mxu0 0
    %588 = vmatpush1.bf16.msra.mxu0 0
    %589 = vmatprep.mubr.bf16.mxu0 0
    %590 = vmatmul.mubr.bf16.gmra.mrb[0].mxu0 %v364
    %v591 = vpop.f32.mrb[0].mxu0
    %v592 = vadd.f32 0.0, %v591
    %v593 = vpop.f32.mrb[0].mxu0
    %v594 = vadd.f32 0.0, %v593
    %v595 = vpop.f32.mrb[0].mxu0
    %v596 = vpop.f32.mrb[0].mxu0
    %597 = vdwg.mxu0
    %598 = vmatprep.subr.bf16.mxu0 %v496
    %599 = vmatpush1.bf16.msra.mxu0 %v495
    %600 = vmatprep.subr.bf16.mxu0 %v500
    %601 = vmatpush1.bf16.msra.mxu0 %v499
    %602 = vmatprep.subr.bf16.mxu0 %v504
    %603 = vmatpush1.bf16.msra.mxu0 %v503
    %604 = vmatprep.subr.bf16.mxu0 %v508
    %605 = vmatpush1.bf16.msra.mxu0 %v507
    %606 = vmatprep.subr.bf16.mxu0 %v512
    %607 = vmatpush1.bf16.msra.mxu0 %v511
    %608 = vmatprep.subr.bf16.mxu0 %v516
    %609 = vmatpush1.bf16.msra.mxu0 %v515
    %610 = vmatprep.subr.bf16.mxu0 %v520
    %611 = vmatpush1.bf16.msra.mxu0 %v519
    %612 = vmatprep.subr.bf16.mxu0 %v524
    %613 = vmatpush1.bf16.msra.mxu0 %v523
    %614 = vmatprep.subr.bf16.mxu0 0
    %615 = vmatpush1.bf16.msra.mxu0 0
    %616 = vmatprep.subr.bf16.mxu0 0
    %617 = vmatpush1.bf16.msra.mxu0 0
    %618 = vmatprep.subr.bf16.mxu0 0
    %619 = vmatpush1.bf16.msra.mxu0 0
    %620 = vmatprep.subr.bf16.mxu0 0
    %621 = vmatpush1.bf16.msra.mxu0 0
    %622 = vmatprep.subr.bf16.mxu0 0
    %623 = vmatpush1.bf16.msra.mxu0 0
    %624 = vmatprep.subr.bf16.mxu0 0
    %625 = vmatpush1.bf16.msra.mxu0 0
    %626 = vmatprep.subr.bf16.mxu0 0
    %627 = vmatpush1.bf16.msra.mxu0 0
    %628 = vmatprep.subr.bf16.mxu0 0
    %629 = vmatpush1.bf16.msra.mxu0 0
    %630 = vmatprep.mubr.bf16.mxu0 0
    %631 = vmatmul.mubr.bf16.gmra.mrb[0].mxu0 %v364
    %v632 = vpop.f32.mrb[0].mxu0
    %v633 = vadd.f32 0.0, %v632
    %v634 = vpop.f32.mrb[0].mxu0
    %v635 = vadd.f32 0.0, %v634
    %v636 = vpop.f32.mrb[0].mxu0
    %v637 = vpop.f32.mrb[0].mxu0
    %638 = vdwg.mxu0
    %s639 = scalar_lea.vmem [#allocation4], 32
    %v640 = vld [vmem:[%s639] sm:$0xff]
    %v641 = vld [vmem:[%s639 + $0x8] sm:$0xff]
    %v642 = vld [vmem:[%s639 + $0x10] sm:$0xff]
    %v643 = vld [vmem:[%s639 + $0x18] sm:$0xff]
    %v644 = vadd.f32 %v640, %v592
    %v645 = vadd.f32 %v641, %v594
    %v646 = vadd.f32 %v642, %v633
    %v647 = vadd.f32 %v643, %v635
    %v648 = vxor.u32 %v644, 2147483648
    %v649 = vmul.f32 %v648, 1.442695
    %v650 = vpow.pop %v649
    %v651 = vadd.f32 %v650, 1.0
    %v652 = vrcp.pop %v651
    %v653 = vmul.f32 1.0, %v652
    %v654 = vxor.u32 %v645, 2147483648
    %v655 = vmul.f32 %v654, 1.442695
    %v656 = vpow.pop %v655
    %v657 = vadd.f32 %v656, 1.0
    %v658 = vrcp.pop %v657
    %v659 = vmul.f32 1.0, %v658
    %v660 = vtanh.pop %v646
    %v661 = vxor.u32 %v647, 2147483648
    %v662 = vmul.f32 %v661, 1.442695
    %v663 = vpow.pop %v662
    %v664 = vadd.f32 %v663, 1.0
    %v665 = vrcp.pop %v664
    %v666 = vmul.f32 1.0, %v665
    %v667 = vmul.f32 %v659, %v363
    %v668 = vmul.f32 %v653, %v660
    %v669 = vadd.f32 %v667, %v668
    %v670 = vtanh.pop %v669
    %v671 = vmul.f32 %v666, %v670
    %672 = vst [vmem:[#allocation3] sm:$0xff] %v669
    %673 = vst [vmem:[#allocation2] sm:$0xff] %v671
    %s674 = scalar_lea.vmem [#allocation9], 8
    %675 = vst [vmem:[%s674] sm:$0xff] %v671
    %v676 = vld [vmem:[#allocation2] sm:$0xff]
    %v677 = vld [vmem:[#allocation3] sm:$0xff]
    %v678 = vpack.c.bf16 %v676, %v676
    %v679 = vld [vmem:[#allocation7] sm:$0xff]
    %v680 = vld [vmem:[#allocation7 + $0x8] sm:$0xff]
    %v681 = vld [vmem:[#allocation7 + $0x10] sm:$0xff]
    %v682 = vld [vmem:[#allocation7 + $0x18] sm:$0xff]
    %v683 = vld [vmem:[#allocation7 + $0x20] sm:$0xff]
    %v684 = vld [vmem:[#allocation7 + $0x28] sm:$0xff]
    %v685 = vld [vmem:[#allocation7 + $0x30] sm:$0xff]
    %v686 = vld [vmem:[#allocation7 + $0x38] sm:$0xff]
    %v687 = vld [vmem:[#allocation7 + $0x40] sm:$0xff]
    %v688 = vld [vmem:[#allocation7 + $0x48] sm:$0xff]
    %v689 = vld [vmem:[#allocation7 + $0x50] sm:$0xff]
    %v690 = vld [vmem:[#allocation7 + $0x58] sm:$0xff]
    %v691 = vld [vmem:[#allocation7 + $0x60] sm:$0xff]
    %v692 = vld [vmem:[#allocation7 + $0x68] sm:$0xff]
    %v693 = vld [vmem:[#allocation7 + $0x70] sm:$0xff]
    %v694 = vld [vmem:[#allocation7 + $0x78] sm:$0xff]
    %v695 = vld [vmem:[#allocation7 + $0x80] sm:$0xff]
    %v696 = vld [vmem:[#allocation7 + $0x88] sm:$0xff]
    %v697 = vld [vmem:[#allocation7 + $0x90] sm:$0xff]
    %v698 = vld [vmem:[#allocation7 + $0x98] sm:$0xff]
    %v699 = vld [vmem:[#allocation7 + $0xa0] sm:$0xff]
    %v700 = vld [vmem:[#allocation7 + $0xa8] sm:$0xff]
    %v701 = vld [vmem:[#allocation7 + $0xb0] sm:$0xff]
    %v702 = vld [vmem:[#allocation7 + $0xb8] sm:$0xff]
    %v703 = vld [vmem:[#allocation7 + $0xc0] sm:$0xff]
    %v704 = vld [vmem:[#allocation7 + $0xc8] sm:$0xff]
    %v705 = vld [vmem:[#allocation7 + $0xd0] sm:$0xff]
    %v706 = vld [vmem:[#allocation7 + $0xd8] sm:$0xff]
    %v707 = vld [vmem:[#allocation7 + $0xe0] sm:$0xff]
    %v708 = vld [vmem:[#allocation7 + $0xe8] sm:$0xff]
    %v709 = vld [vmem:[#allocation7 + $0xf0] sm:$0xff]
    %v710 = vld [vmem:[#allocation7 + $0xf8] sm:$0xff]
    %v743 = vunpack.c.l.b16 %v679
    %v744 = vunpack.c.h.b16 %v679
    %v745 = vunpack.c.l.b16 %v680
    %v746 = vunpack.c.h.b16 %v680
    %v747 = vunpack.c.l.b16 %v681
    %v748 = vunpack.c.h.b16 %v681
    %v749 = vunpack.c.l.b16 %v682
    %v750 = vunpack.c.h.b16 %v682
    %v751 = vunpack.c.l.b16 %v683
    %v752 = vunpack.c.h.b16 %v683
    %v753 = vunpack.c.l.b16 %v684
    %v754 = vunpack.c.h.b16 %v684
    %v755 = vunpack.c.l.b16 %v685
    %v756 = vunpack.c.h.b16 %v685
    %v757 = vunpack.c.l.b16 %v686
    %v758 = vunpack.c.h.b16 %v686
    %v759 = vunpack.c.l.b16 %v687
    %v760 = vunpack.c.h.b16 %v687
    %v761 = vunpack.c.l.b16 %v688
    %v762 = vunpack.c.h.b16 %v688
    %v763 = vunpack.c.l.b16 %v689
    %v764 = vunpack.c.h.b16 %v689
    %v765 = vunpack.c.l.b16 %v690
    %v766 = vunpack.c.h.b16 %v690
    %v767 = vunpack.c.l.b16 %v691
    %v768 = vunpack.c.h.b16 %v691
    %v769 = vunpack.c.l.b16 %v692
    %v770 = vunpack.c.h.b16 %v692
    %v771 = vunpack.c.l.b16 %v693
    %v772 = vunpack.c.h.b16 %v693
    %v773 = vunpack.c.l.b16 %v694
    %v774 = vunpack.c.h.b16 %v694
    %v775 = vunpack.c.l.b16 %v695
    %v776 = vunpack.c.h.b16 %v695
    %v777 = vunpack.c.l.b16 %v696
    %v778 = vunpack.c.h.b16 %v696
    %v779 = vunpack.c.l.b16 %v697
    %v780 = vunpack.c.h.b16 %v697
    %v781 = vunpack.c.l.b16 %v698
    %v782 = vunpack.c.h.b16 %v698
    %v783 = vunpack.c.l.b16 %v699
    %v784 = vunpack.c.h.b16 %v699
    %v785 = vunpack.c.l.b16 %v700
    %v786 = vunpack.c.h.b16 %v700
    %v787 = vunpack.c.l.b16 %v701
    %v788 = vunpack.c.h.b16 %v701
    %v789 = vunpack.c.l.b16 %v702
    %v790 = vunpack.c.h.b16 %v702
    %v791 = vunpack.c.l.b16 %v703
    %v792 = vunpack.c.h.b16 %v703
    %v793 = vunpack.c.l.b16 %v704
    %v794 = vunpack.c.h.b16 %v704
    %v795 = vunpack.c.l.b16 %v705
    %v796 = vunpack.c.h.b16 %v705
    %v797 = vunpack.c.l.b16 %v706
    %v798 = vunpack.c.h.b16 %v706
    %v799 = vunpack.c.l.b16 %v707
    %v800 = vunpack.c.h.b16 %v707
    %v801 = vunpack.c.l.b16 %v708
    %v802 = vunpack.c.h.b16 %v708
    %v803 = vunpack.c.l.b16 %v709
    %v804 = vunpack.c.h.b16 %v709
    %v805 = vunpack.c.l.b16 %v710
    %v806 = vunpack.c.h.b16 %v710
    %v807 = vpack.c.b16 %v747, %v743
    %v808 = vpack.c.b16 %v748, %v744
    %v809 = vpack.c.b16 %v749, %v745
    %v810 = vpack.c.b16 %v750, %v746
    %v811 = vpack.c.b16 %v755, %v751
    %v812 = vpack.c.b16 %v756, %v752
    %v813 = vpack.c.b16 %v757, %v753
    %v814 = vpack.c.b16 %v758, %v754
    %v815 = vpack.c.b16 %v763, %v759
    %v816 = vpack.c.b16 %v764, %v760
    %v817 = vpack.c.b16 %v765, %v761
    %v818 = vpack.c.b16 %v766, %v762
    %v819 = vpack.c.b16 %v771, %v767
    %v820 = vpack.c.b16 %v772, %v768
    %v821 = vpack.c.b16 %v773, %v769
    %v822 = vpack.c.b16 %v774, %v770
    %v823 = vpack.c.b16 %v779, %v775
    %v824 = vpack.c.b16 %v780, %v776
    %v825 = vpack.c.b16 %v781, %v777
    %v826 = vpack.c.b16 %v782, %v778
    %v827 = vpack.c.b16 %v787, %v783
    %v828 = vpack.c.b16 %v788, %v784
    %v829 = vpack.c.b16 %v789, %v785
    %v830 = vpack.c.b16 %v790, %v786
    %v831 = vpack.c.b16 %v795, %v791
    %v832 = vpack.c.b16 %v796, %v792
    %v833 = vpack.c.b16 %v797, %v793
    %v834 = vpack.c.b16 %v798, %v794
    %v835 = vpack.c.b16 %v803, %v799
    %v836 = vpack.c.b16 %v804, %v800
    %v837 = vpack.c.b16 %v805, %v801
    %v838 = vpack.c.b16 %v806, %v802
    %871 = vmatprep.subr.bf16.mxu0 %v808
    %872 = vmatpush1.bf16.msra.mxu0 %v807
    %873 = vmatprep.subr.bf16.mxu0 %v812
    %874 = vmatpush1.bf16.msra.mxu0 %v811
    %875 = vmatprep.subr.bf16.mxu0 %v816
    %876 = vmatpush1.bf16.msra.mxu0 %v815
    %877 = vmatprep.subr.bf16.mxu0 %v820
    %878 = vmatpush1.bf16.msra.mxu0 %v819
    %879 = vmatprep.subr.bf16.mxu0 %v824
    %880 = vmatpush1.bf16.msra.mxu0 %v823
    %881 = vmatprep.subr.bf16.mxu0 %v828
    %882 = vmatpush1.bf16.msra.mxu0 %v827
    %883 = vmatprep.subr.bf16.mxu0 %v832
    %884 = vmatpush1.bf16.msra.mxu0 %v831
    %885 = vmatprep.subr.bf16.mxu0 %v836
    %886 = vmatpush1.bf16.msra.mxu0 %v835
    %887 = vmatprep.subr.bf16.mxu0 0
    %888 = vmatpush1.bf16.msra.mxu0 0
    %889 = vmatprep.subr.bf16.mxu0 0
    %890 = vmatpush1.bf16.msra.mxu0 0
    %891 = vmatprep.subr.bf16.mxu0 0
    %892 = vmatpush1.bf16.msra.mxu0 0
    %893 = vmatprep.subr.bf16.mxu0 0
    %894 = vmatpush1.bf16.msra.mxu0 0
    %895 = vmatprep.subr.bf16.mxu0 0
    %896 = vmatpush1.bf16.msra.mxu0 0
    %897 = vmatprep.subr.bf16.mxu0 0
    %898 = vmatpush1.bf16.msra.mxu0 0
    %899 = vmatprep.subr.bf16.mxu0 0
    %900 = vmatpush1.bf16.msra.mxu0 0
    %901 = vmatprep.subr.bf16.mxu0 0
    %902 = vmatpush1.bf16.msra.mxu0 0
    %903 = vmatprep.mubr.bf16.mxu0 0
    %904 = vmatmul.mubr.bf16.gmra.mrb[0].mxu0 %v678
    %v905 = vpop.f32.mrb[0].mxu0
    %v906 = vadd.f32 0.0, %v905
    %v907 = vpop.f32.mrb[0].mxu0
    %v908 = vadd.f32 0.0, %v907
    %v909 = vpop.f32.mrb[0].mxu0
    %v910 = vpop.f32.mrb[0].mxu0
    %911 = vdwg.mxu0
    %912 = vmatprep.subr.bf16.mxu0 %v810
    %913 = vmatpush1.bf16.msra.mxu0 %v809
    %914 = vmatprep.subr.bf16.mxu0 %v814
    %915 = vmatpush1.bf16.msra.mxu0 %v813
    %916 = vmatprep.subr.bf16.mxu0 %v818
    %917 = vmatpush1.bf16.msra.mxu0 %v817
    %918 = vmatprep.subr.bf16.mxu0 %v822
    %919 = vmatpush1.bf16.msra.mxu0 %v821
    %920 = vmatprep.subr.bf16.mxu0 %v826
    %921 = vmatpush1.bf16.msra.mxu0 %v825
    %922 = vmatprep.subr.bf16.mxu0 %v830
    %923 = vmatpush1.bf16.msra.mxu0 %v829
    %924 = vmatprep.subr.bf16.mxu0 %v834
    %925 = vmatpush1.bf16.msra.mxu0 %v833
    %926 = vmatprep.subr.bf16.mxu0 %v838
    %927 = vmatpush1.bf16.msra.mxu0 %v837
    %928 = vmatprep.subr.bf16.mxu0 0
    %929 = vmatpush1.bf16.msra.mxu0 0
    %930 = vmatprep.subr.bf16.mxu0 0
    %931 = vmatpush1.bf16.msra.mxu0 0
    %932 = vmatprep.subr.bf16.mxu0 0
    %933 = vmatpush1.bf16.msra.mxu0 0
    %934 = vmatprep.subr.bf16.mxu0 0
    %935 = vmatpush1.bf16.msra.mxu0 0
    %936 = vmatprep.subr.bf16.mxu0 0
    %937 = vmatpush1.bf16.msra.mxu0 0
    %938 = vmatprep.subr.bf16.mxu0 0
    %939 = vmatpush1.bf16.msra.mxu0 0
    %940 = vmatprep.subr.bf16.mxu0 0
    %941 = vmatpush1.bf16.msra.mxu0 0
    %942 = vmatprep.subr.bf16.mxu0 0
    %943 = vmatpush1.bf16.msra.mxu0 0
    %944 = vmatprep.mubr.bf16.mxu0 0
    %945 = vmatmul.mubr.bf16.gmra.mrb[0].mxu0 %v678
    %v946 = vpop.f32.mrb[0].mxu0
    %v947 = vadd.f32 0.0, %v946
    %v948 = vpop.f32.mrb[0].mxu0
    %v949 = vadd.f32 0.0, %v948
    %v950 = vpop.f32.mrb[0].mxu0
    %v951 = vpop.f32.mrb[0].mxu0
    %952 = vdwg.mxu0
    %s953 = scalar_lea.vmem [#allocation4], 64
    %v954 = vld [vmem:[%s953] sm:$0xff]
    %v955 = vld [vmem:[%s953 + $0x8] sm:$0xff]
    %v956 = vld [vmem:[%s953 + $0x10] sm:$0xff]
    %v957 = vld [vmem:[%s953 + $0x18] sm:$0xff]
    %v958 = vadd.f32 %v954, %v906
    %v959 = vadd.f32 %v955, %v908
    %v960 = vadd.f32 %v956, %v947
    %v961 = vadd.f32 %v957, %v949
    %v962 = vxor.u32 %v958, 2147483648
    %v963 = vmul.f32 %v962, 1.442695
    %v964 = vpow.pop %v963
    %v965 = vadd.f32 %v964, 1.0
    %v966 = vrcp.pop %v965
    %v967 = vmul.f32 1.0, %v966
    %v968 = vxor.u32 %v959, 2147483648
    %v969 = vmul.f32 %v968, 1.442695
    %v970 = vpow.pop %v969
    %v971 = vadd.f32 %v970, 1.0
    %v972 = vrcp.pop %v971
    %v973 = vmul.f32 1.0, %v972
    %v974 = vtanh.pop %v960
    %v975 = vxor.u32 %v961, 2147483648
    %v976 = vmul.f32 %v975, 1.442695
    %v977 = vpow.pop %v976
    %v978 = vadd.f32 %v977, 1.0
    %v979 = vrcp.pop %v978
    %v980 = vmul.f32 1.0, %v979
    %v981 = vmul.f32 %v973, %v677
    %v982 = vmul.f32 %v967, %v974
    %v983 = vadd.f32 %v981, %v982
    %v984 = vtanh.pop %v983
    %v985 = vmul.f32 %v980, %v984
    %986 = vst [vmem:[#allocation3] sm:$0xff] %v983
    %987 = vst [vmem:[#allocation2] sm:$0xff] %v985
    %s988 = scalar_lea.vmem [#allocation9], 16
    %989 = vst [vmem:[%s988] sm:$0xff] %v985
    %v990 = vld [vmem:[#allocation2] sm:$0xff]
    %v991 = vld [vmem:[#allocation3] sm:$0xff]
    %v992 = vpack.c.bf16 %v990, %v990
    %v993 = vld [vmem:[#allocation7] sm:$0xff]
    %v994 = vld [vmem:[#allocation7 + $0x8] sm:$0xff]
    %v995 = vld [vmem:[#allocation7 + $0x10] sm:$0xff]
    %v996 = vld [vmem:[#allocation7 + $0x18] sm:$0xff]
    %v997 = vld [vmem:[#allocation7 + $0x20] sm:$0xff]
    %v998 = vld [vmem:[#allocation7 + $0x28] sm:$0xff]
    %v999 = vld [vmem:[#allocation7 + $0x30] sm:$0xff]
    %v1000 = vld [vmem:[#allocation7 + $0x38] sm:$0xff]
    %v1001 = vld [vmem:[#allocation7 + $0x40] sm:$0xff]
    %v1002 = vld [vmem:[#allocation7 + $0x48] sm:$0xff]
    %v1003 = vld [vmem:[#allocation7 + $0x50] sm:$0xff]
    %v1004 = vld [vmem:[#allocation7 + $0x58] sm:$0xff]
    %v1005 = vld [vmem:[#allocation7 + $0x60] sm:$0xff]
    %v1006 = vld [vmem:[#allocation7 + $0x68] sm:$0xff]
    %v1007 = vld [vmem:[#allocation7 + $0x70] sm:$0xff]
    %v1008 = vld [vmem:[#allocation7 + $0x78] sm:$0xff]
    %v1009 = vld [vmem:[#allocation7 + $0x80] sm:$0xff]
    %v1010 = vld [vmem:[#allocation7 + $0x88] sm:$0xff]
    %v1011 = vld [vmem:[#allocation7 + $0x90] sm:$0xff]
    %v1012 = vld [vmem:[#allocation7 + $0x98] sm:$0xff]
    %v1013 = vld [vmem:[#allocation7 + $0xa0] sm:$0xff]
    %v1014 = vld [vmem:[#allocation7 + $0xa8] sm:$0xff]
    %v1015 = vld [vmem:[#allocation7 + $0xb0] sm:$0xff]
    %v1016 = vld [vmem:[#allocation7 + $0xb8] sm:$0xff]
    %v1017 = vld [vmem:[#allocation7 + $0xc0] sm:$0xff]
    %v1018 = vld [vmem:[#allocation7 + $0xc8] sm:$0xff]
    %v1019 = vld [vmem:[#allocation7 + $0xd0] sm:$0xff]
    %v1020 = vld [vmem:[#allocation7 + $0xd8] sm:$0xff]
    %v1021 = vld [vmem:[#allocation7 + $0xe0] sm:$0xff]
    %v1022 = vld [vmem:[#allocation7 + $0xe8] sm:$0xff]
    %v1023 = vld [vmem:[#allocation7 + $0xf0] sm:$0xff]
    %v1024 = vld [vmem:[#allocation7 + $0xf8] sm:$0xff]
    %v1057 = vunpack.c.l.b16 %v993
    %v1058 = vunpack.c.h.b16 %v993
    %v1059 = vunpack.c.l.b16 %v994
    %v1060 = vunpack.c.h.b16 %v994
    %v1061 = vunpack.c.l.b16 %v995
    %v1062 = vunpack.c.h.b16 %v995
    %v1063 = vunpack.c.l.b16 %v996
    %v1064 = vunpack.c.h.b16 %v996
    %v1065 = vunpack.c.l.b16 %v997
    %v1066 = vunpack.c.h.b16 %v997
    %v1067 = vunpack.c.l.b16 %v998
    %v1068 = vunpack.c.h.b16 %v998
    %v1069 = vunpack.c.l.b16 %v999
    %v1070 = vunpack.c.h.b16 %v999
    %v1071 = vunpack.c.l.b16 %v1000
    %v1072 = vunpack.c.h.b16 %v1000
    %v1073 = vunpack.c.l.b16 %v1001
    %v1074 = vunpack.c.h.b16 %v1001
    %v1075 = vunpack.c.l.b16 %v1002
    %v1076 = vunpack.c.h.b16 %v1002
    %v1077 = vunpack.c.l.b16 %v1003
    %v1078 = vunpack.c.h.b16 %v1003
    %v1079 = vunpack.c.l.b16 %v1004
    %v1080 = vunpack.c.h.b16 %v1004
    %v1081 = vunpack.c.l.b16 %v1005
    %v1082 = vunpack.c.h.b16 %v1005
    %v1083 = vunpack.c.l.b16 %v1006
    %v1084 = vunpack.c.h.b16 %v1006
    %v1085 = vunpack.c.l.b16 %v1007
    %v1086 = vunpack.c.h.b16 %v1007
    %v1087 = vunpack.c.l.b16 %v1008
    %v1088 = vunpack.c.h.b16 %v1008
    %v1089 = vunpack.c.l.b16 %v1009
    %v1090 = vunpack.c.h.b16 %v1009
    %v1091 = vunpack.c.l.b16 %v1010
    %v1092 = vunpack.c.h.b16 %v1010
    %v1093 = vunpack.c.l.b16 %v1011
    %v1094 = vunpack.c.h.b16 %v1011
    %v1095 = vunpack.c.l.b16 %v1012
    %v1096 = vunpack.c.h.b16 %v1012
    %v1097 = vunpack.c.l.b16 %v1013
    %v1098 = vunpack.c.h.b16 %v1013
    %v1099 = vunpack.c.l.b16 %v1014
    %v1100 = vunpack.c.h.b16 %v1014
    %v1101 = vunpack.c.l.b16 %v1015
    %v1102 = vunpack.c.h.b16 %v1015
    %v1103 = vunpack.c.l.b16 %v1016
    %v1104 = vunpack.c.h.b16 %v1016
    %v1105 = vunpack.c.l.b16 %v1017
    %v1106 = vunpack.c.h.b16 %v1017
    %v1107 = vunpack.c.l.b16 %v1018
    %v1108 = vunpack.c.h.b16 %v1018
    %v1109 = vunpack.c.l.b16 %v1019
    %v1110 = vunpack.c.h.b16 %v1019
    %v1111 = vunpack.c.l.b16 %v1020
    %v1112 = vunpack.c.h.b16 %v1020
    %v1113 = vunpack.c.l.b16 %v1021
    %v1114 = vunpack.c.h.b16 %v1021
    %v1115 = vunpack.c.l.b16 %v1022
    %v1116 = vunpack.c.h.b16 %v1022
    %v1117 = vunpack.c.l.b16 %v1023
    %v1118 = vunpack.c.h.b16 %v1023
    %v1119 = vunpack.c.l.b16 %v1024
    %v1120 = vunpack.c.h.b16 %v1024
    %v1121 = vpack.c.b16 %v1061, %v1057
    %v1122 = vpack.c.b16 %v1062, %v1058
    %v1123 = vpack.c.b16 %v1063, %v1059
    %v1124 = vpack.c.b16 %v1064, %v1060
    %v1125 = vpack.c.b16 %v1069, %v1065
    %v1126 = vpack.c.b16 %v1070, %v1066
    %v1127 = vpack.c.b16 %v1071, %v1067
    %v1128 = vpack.c.b16 %v1072, %v1068
    %v1129 = vpack.c.b16 %v1077, %v1073
    %v1130 = vpack.c.b16 %v1078, %v1074
    %v1131 = vpack.c.b16 %v1079, %v1075
    %v1132 = vpack.c.b16 %v1080, %v1076
    %v1133 = vpack.c.b16 %v1085, %v1081
    %v1134 = vpack.c.b16 %v1086, %v1082
    %v1135 = vpack.c.b16 %v1087, %v1083
    %v1136 = vpack.c.b16 %v1088, %v1084
    %v1137 = vpack.c.b16 %v1093, %v1089
    %v1138 = vpack.c.b16 %v1094, %v1090
    %v1139 = vpack.c.b16 %v1095, %v1091
    %v1140 = vpack.c.b16 %v1096, %v1092
    %v1141 = vpack.c.b16 %v1101, %v1097
    %v1142 = vpack.c.b16 %v1102, %v1098
    %v1143 = vpack.c.b16 %v1103, %v1099
    %v1144 = vpack.c.b16 %v1104, %v1100
    %v1145 = vpack.c.b16 %v1109, %v1105
    %v1146 = vpack.c.b16 %v1110, %v1106
    %v1147 = vpack.c.b16 %v1111, %v1107
    %v1148 = vpack.c.b16 %v1112, %v1108
    %v1149 = vpack.c.b16 %v1117, %v1113
    %v1150 = vpack.c.b16 %v1118, %v1114
    %v1151 = vpack.c.b16 %v1119, %v1115
    %v1152 = vpack.c.b16 %v1120, %v1116
    %1185 = vmatprep.subr.bf16.mxu0 %v1122
    %1186 = vmatpush1.bf16.msra.mxu0 %v1121
    %1187 = vmatprep.subr.bf16.mxu0 %v1126
    %1188 = vmatpush1.bf16.msra.mxu0 %v1125
    %1189 = vmatprep.subr.bf16.mxu0 %v1130
    %1190 = vmatpush1.bf16.msra.mxu0 %v1129
    %1191 = vmatprep.subr.bf16.mxu0 %v1134
    %1192 = vmatpush1.bf16.msra.mxu0 %v1133
    %1193 = vmatprep.subr.bf16.mxu0 %v1138
    %1194 = vmatpush1.bf16.msra.mxu0 %v1137
    %1195 = vmatprep.subr.bf16.mxu0 %v1142
    %1196 = vmatpush1.bf16.msra.mxu0 %v1141
    %1197 = vmatprep.subr.bf16.mxu0 %v1146
    %1198 = vmatpush1.bf16.msra.mxu0 %v1145
    %1199 = vmatprep.subr.bf16.mxu0 %v1150
    %1200 = vmatpush1.bf16.msra.mxu0 %v1149
    %1201 = vmatprep.subr.bf16.mxu0 0
    %1202 = vmatpush1.bf16.msra.mxu0 0
    %1203 = vmatprep.subr.bf16.mxu0 0
    %1204 = vmatpush1.bf16.msra.mxu0 0
    %1205 = vmatprep.subr.bf16.mxu0 0
    %1206 = vmatpush1.bf16.msra.mxu0 0
    %1207 = vmatprep.subr.bf16.mxu0 0
    %1208 = vmatpush1.bf16.msra.mxu0 0
    %1209 = vmatprep.subr.bf16.mxu0 0
    %1210 = vmatpush1.bf16.msra.mxu0 0
    %1211 = vmatprep.subr.bf16.mxu0 0
    %1212 = vmatpush1.bf16.msra.mxu0 0
    %1213 = vmatprep.subr.bf16.mxu0 0
    %1214 = vmatpush1.bf16.msra.mxu0 0
    %1215 = vmatprep.subr.bf16.mxu0 0
    %1216 = vmatpush1.bf16.msra.mxu0 0
    %1217 = vmatprep.mubr.bf16.mxu0 0
    %1218 = vmatmul.mubr.bf16.gmra.mrb[0].mxu0 %v992
    %v1219 = vpop.f32.mrb[0].mxu0
    %v1220 = vadd.f32 0.0, %v1219
    %v1221 = vpop.f32.mrb[0].mxu0
    %v1222 = vadd.f32 0.0, %v1221
    %v1223 = vpop.f32.mrb[0].mxu0
    %v1224 = vpop.f32.mrb[0].mxu0
    %1225 = vdwg.mxu0
    %1226 = vmatprep.subr.bf16.mxu0 %v1124
    %1227 = vmatpush1.bf16.msra.mxu0 %v1123
    %1228 = vmatprep.subr.bf16.mxu0 %v1128
    %1229 = vmatpush1.bf16.msra.mxu0 %v1127
    %1230 = vmatprep.subr.bf16.mxu0 %v1132
    %1231 = vmatpush1.bf16.msra.mxu0 %v1131
    %1232 = vmatprep.subr.bf16.mxu0 %v1136
    %1233 = vmatpush1.bf16.msra.mxu0 %v1135
    %1234 = vmatprep.subr.bf16.mxu0 %v1140
    %1235 = vmatpush1.bf16.msra.mxu0 %v1139
    %1236 = vmatprep.subr.bf16.mxu0 %v1144
    %1237 = vmatpush1.bf16.msra.mxu0 %v1143
    %1238 = vmatprep.subr.bf16.mxu0 %v1148
    %1239 = vmatpush1.bf16.msra.mxu0 %v1147
    %1240 = vmatprep.subr.bf16.mxu0 %v1152
    %1241 = vmatpush1.bf16.msra.mxu0 %v1151
    %1242 = vmatprep.subr.bf16.mxu0 0
    %1243 = vmatpush1.bf16.msra.mxu0 0
    %1244 = vmatprep.subr.bf16.mxu0 0
    %1245 = vmatpush1.bf16.msra.mxu0 0
    %1246 = vmatprep.subr.bf16.mxu0 0
    %1247 = vmatpush1.bf16.msra.mxu0 0
    %1248 = vmatprep.subr.bf16.mxu0 0
    %1249 = vmatpush1.bf16.msra.mxu0 0
    %1250 = vmatprep.subr.bf16.mxu0 0
    %1251 = vmatpush1.bf16.msra.mxu0 0
    %1252 = vmatprep.subr.bf16.mxu0 0
    %1253 = vmatpush1.bf16.msra.mxu0 0
    %1254 = vmatprep.subr.bf16.mxu0 0
    %1255 = vmatpush1.bf16.msra.mxu0 0
    %1256 = vmatprep.subr.bf16.mxu0 0
    %1257 = vmatpush1.bf16.msra.mxu0 0
    %1258 = vmatprep.mubr.bf16.mxu0 0
    %1259 = vmatmul.mubr.bf16.gmra.mrb[0].mxu0 %v992
    %v1260 = vpop.f32.mrb[0].mxu0
    %v1261 = vadd.f32 0.0, %v1260
    %v1262 = vpop.f32.mrb[0].mxu0
    %v1263 = vadd.f32 0.0, %v1262
    %v1264 = vpop.f32.mrb[0].mxu0
    %v1265 = vpop.f32.mrb[0].mxu0
    %1266 = vdwg.mxu0
    %s1267 = scalar_lea.vmem [#allocation4], 96
    %v1268 = vld [vmem:[%s1267] sm:$0xff]
    %v1269 = vld [vmem:[%s1267 + $0x8] sm:$0xff]
    %v1270 = vld [vmem:[%s1267 + $0x10] sm:$0xff]
    %v1271 = vld [vmem:[%s1267 + $0x18] sm:$0xff]
    %v1272 = vadd.f32 %v1268, %v1220
    %v1273 = vadd.f32 %v1269, %v1222
    %v1274 = vadd.f32 %v1270, %v1261
    %v1275 = vadd.f32 %v1271, %v1263
    %v1276 = vxor.u32 %v1272, 2147483648
    %v1277 = vmul.f32 %v1276, 1.442695
    %v1278 = vpow.pop %v1277
    %v1279 = vadd.f32 %v1278, 1.0
    %v1280 = vrcp.pop %v1279
    %v1281 = vmul.f32 1.0, %v1280
    %v1282 = vxor.u32 %v1273, 2147483648
    %v1283 = vmul.f32 %v1282, 1.442695
    %v1284 = vpow.pop %v1283
    %v1285 = vadd.f32 %v1284, 1.0
    %v1286 = vrcp.pop %v1285
    %v1287 = vmul.f32 1.0, %v1286
    %v1288 = vtanh.pop %v1274
    %v1289 = vxor.u32 %v1275, 2147483648
    %v1290 = vmul.f32 %v1289, 1.442695
    %v1291 = vpow.pop %v1290
    %v1292 = vadd.f32 %v1291, 1.0
    %v1293 = vrcp.pop %v1292
    %v1294 = vmul.f32 1.0, %v1293
    %v1295 = vmul.f32 %v1287, %v991
    %v1296 = vmul.f32 %v1281, %v1288
    %v1297 = vadd.f32 %v1295, %v1296
    %v1298 = vtanh.pop %v1297
    %v1299 = vmul.f32 %v1294, %v1298
    %1300 = vst [vmem:[#allocation3] sm:$0xff] %v1297
    %1301 = vst [vmem:[#allocation2] sm:$0xff] %v1299
    %s1302 = scalar_lea.vmem [#allocation9], 24
    %1303 = vst [vmem:[%s1302] sm:$0xff] %v1299
    %v1304 = vld [vmem:[#allocation2] sm:$0xff]
    %v1305 = vld [vmem:[#allocation3] sm:$0xff]
    %v1306 = vpack.c.bf16 %v1304, %v1304
    %v1307 = vld [vmem:[#allocation7] sm:$0xff]
    %v1308 = vld [vmem:[#allocation7 + $0x8] sm:$0xff]
    %v1309 = vld [vmem:[#allocation7 + $0x10] sm:$0xff]
    %v1310 = vld [vmem:[#allocation7 + $0x18] sm:$0xff]
    %v1311 = vld [vmem:[#allocation7 + $0x20] sm:$0xff]
    %v1312 = vld [vmem:[#allocation7 + $0x28] sm:$0xff]
    %v1313 = vld [vmem:[#allocation7 + $0x30] sm:$0xff]
    %v1314 = vld [vmem:[#allocation7 + $0x38] sm:$0xff]
    %v1315 = vld [vmem:[#allocation7 + $0x40] sm:$0xff]
    %v1316 = vld [vmem:[#allocation7 + $0x48] sm:$0xff]
    %v1317 = vld [vmem:[#allocation7 + $0x50] sm:$0xff]
    %v1318 = vld [vmem:[#allocation7 + $0x58] sm:$0xff]
    %v1319 = vld [vmem:[#allocation7 + $0x60] sm:$0xff]
    %v1320 = vld [vmem:[#allocation7 + $0x68] sm:$0xff]
    %v1321 = vld [vmem:[#allocation7 + $0x70] sm:$0xff]
    %v1322 = vld [vmem:[#allocation7 + $0x78] sm:$0xff]
    %v1323 = vld [vmem:[#allocation7 + $0x80] sm:$0xff]
    %v1324 = vld [vmem:[#allocation7 + $0x88] sm:$0xff]
    %v1325 = vld [vmem:[#allocation7 + $0x90] sm:$0xff]
    %v1326 = vld [vmem:[#allocation7 + $0x98] sm:$0xff]
    %v1327 = vld [vmem:[#allocation7 + $0xa0] sm:$0xff]
    %v1328 = vld [vmem:[#allocation7 + $0xa8] sm:$0xff]
    %v1329 = vld [vmem:[#allocation7 + $0xb0] sm:$0xff]
    %v1330 = vld [vmem:[#allocation7 + $0xb8] sm:$0xff]
    %v1331 = vld [vmem:[#allocation7 + $0xc0] sm:$0xff]
    %v1332 = vld [vmem:[#allocation7 + $0xc8] sm:$0xff]
    %v1333 = vld [vmem:[#allocation7 + $0xd0] sm:$0xff]
    %v1334 = vld [vmem:[#allocation7 + $0xd8] sm:$0xff]
    %v1335 = vld [vmem:[#allocation7 + $0xe0] sm:$0xff]
    %v1336 = vld [vmem:[#allocation7 + $0xe8] sm:$0xff]
    %v1337 = vld [vmem:[#allocation7 + $0xf0] sm:$0xff]
    %v1338 = vld [vmem:[#allocation7 + $0xf8] sm:$0xff]
    %v1371 = vunpack.c.l.b16 %v1307
    %v1372 = vunpack.c.h.b16 %v1307
    %v1373 = vunpack.c.l.b16 %v1308
    %v1374 = vunpack.c.h.b16 %v1308
    %v1375 = vunpack.c.l.b16 %v1309
    %v1376 = vunpack.c.h.b16 %v1309
    %v1377 = vunpack.c.l.b16 %v1310
    %v1378 = vunpack.c.h.b16 %v1310
    %v1379 = vunpack.c.l.b16 %v1311
    %v1380 = vunpack.c.h.b16 %v1311
    %v1381 = vunpack.c.l.b16 %v1312
    %v1382 = vunpack.c.h.b16 %v1312
    %v1383 = vunpack.c.l.b16 %v1313
    %v1384 = vunpack.c.h.b16 %v1313
    %v1385 = vunpack.c.l.b16 %v1314
    %v1386 = vunpack.c.h.b16 %v1314
    %v1387 = vunpack.c.l.b16 %v1315
    %v1388 = vunpack.c.h.b16 %v1315
    %v1389 = vunpack.c.l.b16 %v1316
    %v1390 = vunpack.c.h.b16 %v1316
    %v1391 = vunpack.c.l.b16 %v1317
    %v1392 = vunpack.c.h.b16 %v1317
    %v1393 = vunpack.c.l.b16 %v1318
    %v1394 = vunpack.c.h.b16 %v1318
    %v1395 = vunpack.c.l.b16 %v1319
    %v1396 = vunpack.c.h.b16 %v1319
    %v1397 = vunpack.c.l.b16 %v1320
    %v1398 = vunpack.c.h.b16 %v1320
    %v1399 = vunpack.c.l.b16 %v1321
    %v1400 = vunpack.c.h.b16 %v1321
    %v1401 = vunpack.c.l.b16 %v1322
    %v1402 = vunpack.c.h.b16 %v1322
    %v1403 = vunpack.c.l.b16 %v1323
    %v1404 = vunpack.c.h.b16 %v1323
    %v1405 = vunpack.c.l.b16 %v1324
    %v1406 = vunpack.c.h.b16 %v1324
    %v1407 = vunpack.c.l.b16 %v1325
    %v1408 = vunpack.c.h.b16 %v1325
    %v1409 = vunpack.c.l.b16 %v1326
    %v1410 = vunpack.c.h.b16 %v1326
    %v1411 = vunpack.c.l.b16 %v1327
    %v1412 = vunpack.c.h.b16 %v1327
    %v1413 = vunpack.c.l.b16 %v1328
    %v1414 = vunpack.c.h.b16 %v1328
    %v1415 = vunpack.c.l.b16 %v1329
    %v1416 = vunpack.c.h.b16 %v1329
    %v1417 = vunpack.c.l.b16 %v1330
    %v1418 = vunpack.c.h.b16 %v1330
    %v1419 = vunpack.c.l.b16 %v1331
    %v1420 = vunpack.c.h.b16 %v1331
    %v1421 = vunpack.c.l.b16 %v1332
    %v1422 = vunpack.c.h.b16 %v1332
    %v1423 = vunpack.c.l.b16 %v1333
    %v1424 = vunpack.c.h.b16 %v1333
    %v1425 = vunpack.c.l.b16 %v1334
    %v1426 = vunpack.c.h.b16 %v1334
    %v1427 = vunpack.c.l.b16 %v1335
    %v1428 = vunpack.c.h.b16 %v1335
    %v1429 = vunpack.c.l.b16 %v1336
    %v1430 = vunpack.c.h.b16 %v1336
    %v1431 = vunpack.c.l.b16 %v1337
    %v1432 = vunpack.c.h.b16 %v1337
    %v1433 = vunpack.c.l.b16 %v1338
    %v1434 = vunpack.c.h.b16 %v1338
    %v1435 = vpack.c.b16 %v1375, %v1371
    %v1436 = vpack.c.b16 %v1376, %v1372
    %v1437 = vpack.c.b16 %v1377, %v1373
    %v1438 = vpack.c.b16 %v1378, %v1374
    %v1439 = vpack.c.b16 %v1383, %v1379
    %v1440 = vpack.c.b16 %v1384, %v1380
    %v1441 = vpack.c.b16 %v1385, %v1381
    %v1442 = vpack.c.b16 %v1386, %v1382
    %v1443 = vpack.c.b16 %v1391, %v1387
    %v1444 = vpack.c.b16 %v1392, %v1388
    %v1445 = vpack.c.b16 %v1393, %v1389
    %v1446 = vpack.c.b16 %v1394, %v1390
    %v1447 = vpack.c.b16 %v1399, %v1395
    %v1448 = vpack.c.b16 %v1400, %v1396
    %v1449 = vpack.c.b16 %v1401, %v1397
    %v1450 = vpack.c.b16 %v1402, %v1398
    %v1451 = vpack.c.b16 %v1407, %v1403
    %v1452 = vpack.c.b16 %v1408, %v1404
    %v1453 = vpack.c.b16 %v1409, %v1405
    %v1454 = vpack.c.b16 %v1410, %v1406
    %v1455 = vpack.c.b16 %v1415, %v1411
    %v1456 = vpack.c.b16 %v1416, %v1412
    %v1457 = vpack.c.b16 %v1417, %v1413
    %v1458 = vpack.c.b16 %v1418, %v1414
    %v1459 = vpack.c.b16 %v1423, %v1419
    %v1460 = vpack.c.b16 %v1424, %v1420
    %v1461 = vpack.c.b16 %v1425, %v1421
    %v1462 = vpack.c.b16 %v1426, %v1422
    %v1463 = vpack.c.b16 %v1431, %v1427
    %v1464 = vpack.c.b16 %v1432, %v1428
    %v1465 = vpack.c.b16 %v1433, %v1429
    %v1466 = vpack.c.b16 %v1434, %v1430
    %1499 = vmatprep.subr.bf16.mxu0 %v1436
    %1500 = vmatpush1.bf16.msra.mxu0 %v1435
    %1501 = vmatprep.subr.bf16.mxu0 %v1440
    %1502 = vmatpush1.bf16.msra.mxu0 %v1439
    %1503 = vmatprep.subr.bf16.mxu0 %v1444
    %1504 = vmatpush1.bf16.msra.mxu0 %v1443
    %1505 = vmatprep.subr.bf16.mxu0 %v1448
    %1506 = vmatpush1.bf16.msra.mxu0 %v1447
    %1507 = vmatprep.subr.bf16.mxu0 %v1452
    %1508 = vmatpush1.bf16.msra.mxu0 %v1451
    %1509 = vmatprep.subr.bf16.mxu0 %v1456
    %1510 = vmatpush1.bf16.msra.mxu0 %v1455
    %1511 = vmatprep.subr.bf16.mxu0 %v1460
    %1512 = vmatpush1.bf16.msra.mxu0 %v1459
    %1513 = vmatprep.subr.bf16.mxu0 %v1464
    %1514 = vmatpush1.bf16.msra.mxu0 %v1463
    %1515 = vmatprep.subr.bf16.mxu0 0
    %1516 = vmatpush1.bf16.msra.mxu0 0
    %1517 = vmatprep.subr.bf16.mxu0 0
    %1518 = vmatpush1.bf16.msra.mxu0 0
    %1519 = vmatprep.subr.bf16.mxu0 0
    %1520 = vmatpush1.bf16.msra.mxu0 0
    %1521 = vmatprep.subr.bf16.mxu0 0
    %1522 = vmatpush1.bf16.msra.mxu0 0
    %1523 = vmatprep.subr.bf16.mxu0 0
    %1524 = vmatpush1.bf16.msra.mxu0 0
    %1525 = vmatprep.subr.bf16.mxu0 0
    %1526 = vmatpush1.bf16.msra.mxu0 0
    %1527 = vmatprep.subr.bf16.mxu0 0
    %1528 = vmatpush1.bf16.msra.mxu0 0
    %1529 = vmatprep.subr.bf16.mxu0 0
    %1530 = vmatpush1.bf16.msra.mxu0 0
    %1531 = vmatprep.mubr.bf16.mxu0 0
    %1532 = vmatmul.mubr.bf16.gmra.mrb[0].mxu0 %v1306
    %v1533 = vpop.f32.mrb[0].mxu0
    %v1534 = vadd.f32 0.0, %v1533
    %v1535 = vpop.f32.mrb[0].mxu0
    %v1536 = vadd.f32 0.0, %v1535
    %v1537 = vpop.f32.mrb[0].mxu0
    %v1538 = vpop.f32.mrb[0].mxu0
    %1539 = vdwg.mxu0
    %1540 = vmatprep.subr.bf16.mxu0 %v1438
    %1541 = vmatpush1.bf16.msra.mxu0 %v1437
    %1542 = vmatprep.subr.bf16.mxu0 %v1442
    %1543 = vmatpush1.bf16.msra.mxu0 %v1441
    %1544 = vmatprep.subr.bf16.mxu0 %v1446
    %1545 = vmatpush1.bf16.msra.mxu0 %v1445
    %1546 = vmatprep.subr.bf16.mxu0 %v1450
    %1547 = vmatpush1.bf16.msra.mxu0 %v1449
    %1548 = vmatprep.subr.bf16.mxu0 %v1454
    %1549 = vmatpush1.bf16.msra.mxu0 %v1453
    %1550 = vmatprep.subr.bf16.mxu0 %v1458
    %1551 = vmatpush1.bf16.msra.mxu0 %v1457
    %1552 = vmatprep.subr.bf16.mxu0 %v1462
    %1553 = vmatpush1.bf16.msra.mxu0 %v1461
    %1554 = vmatprep.subr.bf16.mxu0 %v1466
    %1555 = vmatpush1.bf16.msra.mxu0 %v1465
    %1556 = vmatprep.subr.bf16.mxu0 0
    %1557 = vmatpush1.bf16.msra.mxu0 0
    %1558 = vmatprep.subr.bf16.mxu0 0
    %1559 = vmatpush1.bf16.msra.mxu0 0
    %1560 = vmatprep.subr.bf16.mxu0 0
    %1561 = vmatpush1.bf16.msra.mxu0 0
    %1562 = vmatprep.subr.bf16.mxu0 0
    %1563 = vmatpush1.bf16.msra.mxu0 0
    %1564 = vmatprep.subr.bf16.mxu0 0
    %1565 = vmatpush1.bf16.msra.mxu0 0
    %1566 = vmatprep.subr.bf16.mxu0 0
    %1567 = vmatpush1.bf16.msra.mxu0 0
    %1568 = vmatprep.subr.bf16.mxu0 0
    %1569 = vmatpush1.bf16.msra.mxu0 0
    %1570 = vmatprep.subr.bf16.mxu0 0
    %1571 = vmatpush1.bf16.msra.mxu0 0
    %1572 = vmatprep.mubr.bf16.mxu0 0
    %1573 = vmatmul.mubr.bf16.gmra.mrb[0].mxu0 %v1306
    %v1574 = vpop.f32.mrb[0].mxu0
    %v1575 = vadd.f32 0.0, %v1574
    %v1576 = vpop.f32.mrb[0].mxu0
    %v1577 = vadd.f32 0.0, %v1576
    %v1578 = vpop.f32.mrb[0].mxu0
    %v1579 = vpop.f32.mrb[0].mxu0
    %1580 = vdwg.mxu0
    %s1581 = scalar_lea.vmem [#allocation4], 128
    %v1582 = vld [vmem:[%s1581] sm:$0xff]
    %v1583 = vld [vmem:[%s1581 + $0x8] sm:$0xff]
    %v1584 = vld [vmem:[%s1581 + $0x10] sm:$0xff]
    %v1585 = vld [vmem:[%s1581 + $0x18] sm:$0xff]
    %v1586 = vadd.f32 %v1582, %v1534
    %v1587 = vadd.f32 %v1583, %v1536
    %v1588 = vadd.f32 %v1584, %v1575
    %v1589 = vadd.f32 %v1585, %v1577
    %v1590 = vxor.u32 %v1586, 2147483648
    %v1591 = vmul.f32 %v1590, 1.442695
    %v1592 = vpow.pop %v1591
    %v1593 = vadd.f32 %v1592, 1.0
    %v1594 = vrcp.pop %v1593
    %v1595 = vmul.f32 1.0, %v1594
    %v1596 = vxor.u32 %v1587, 2147483648
    %v1597 = vmul.f32 %v1596, 1.442695
    %v1598 = vpow.pop %v1597
    %v1599 = vadd.f32 %v1598, 1.0
    %v1600 = vrcp.pop %v1599
    %v1601 = vmul.f32 1.0, %v1600
    %v1602 = vtanh.pop %v1588
    %v1603 = vxor.u32 %v1589, 2147483648
    %v1604 = vmul.f32 %v1603, 1.442695
    %v1605 = vpow.pop %v1604
    %v1606 = vadd.f32 %v1605, 1.0
    %v1607 = vrcp.pop %v1606
    %v1608 = vmul.f32 1.0, %v1607
    %v1609 = vmul.f32 %v1601, %v1305
    %v1610 = vmul.f32 %v1595, %v1602
    %v1611 = vadd.f32 %v1609, %v1610
    %v1612 = vtanh.pop %v1611
    %v1613 = vmul.f32 %v1608, %v1612
    %1614 = vst [vmem:[#allocation3] sm:$0xff] %v1611
    %1615 = vst [vmem:[#allocation2] sm:$0xff] %v1613
    %s1616 = scalar_lea.vmem [#allocation9], 32
    %1617 = vst [vmem:[%s1616] sm:$0xff] %v1613
    %v1618 = vld [vmem:[#allocation2] sm:$0xff]
    %v1619 = vld [vmem:[#allocation3] sm:$0xff]
    %v1620 = vpack.c.bf16 %v1618, %v1618
    %v1621 = vld [vmem:[#allocation7] sm:$0xff]
    %v1622 = vld [vmem:[#allocation7 + $0x8] sm:$0xff]
    %v1623 = vld [vmem:[#allocation7 + $0x10] sm:$0xff]
    %v1624 = vld [vmem:[#allocation7 + $0x18] sm:$0xff]
    %v1625 = vld [vmem:[#allocation7 + $0x20] sm:$0xff]
    %v1626 = vld [vmem:[#allocation7 + $0x28] sm:$0xff]
    %v1627 = vld [vmem:[#allocation7 + $0x30] sm:$0xff]
    %v1628 = vld [vmem:[#allocation7 + $0x38] sm:$0xff]
    %v1629 = vld [vmem:[#allocation7 + $0x40] sm:$0xff]
    %v1630 = vld [vmem:[#allocation7 + $0x48] sm:$0xff]
    %v1631 = vld [vmem:[#allocation7 + $0x50] sm:$0xff]
    %v1632 = vld [vmem:[#allocation7 + $0x58] sm:$0xff]
    %v1633 = vld [vmem:[#allocation7 + $0x60] sm:$0xff]
    %v1634 = vld [vmem:[#allocation7 + $0x68] sm:$0xff]
    %v1635 = vld [vmem:[#allocation7 + $0x70] sm:$0xff]
    %v1636 = vld [vmem:[#allocation7 + $0x78] sm:$0xff]
    %v1637 = vld [vmem:[#allocation7 + $0x80] sm:$0xff]
    %v1638 = vld [vmem:[#allocation7 + $0x88] sm:$0xff]
    %v1639 = vld [vmem:[#allocation7 + $0x90] sm:$0xff]
    %v1640 = vld [vmem:[#allocation7 + $0x98] sm:$0xff]
    %v1641 = vld [vmem:[#allocation7 + $0xa0] sm:$0xff]
    %v1642 = vld [vmem:[#allocation7 + $0xa8] sm:$0xff]
    %v1643 = vld [vmem:[#allocation7 + $0xb0] sm:$0xff]
    %v1644 = vld [vmem:[#allocation7 + $0xb8] sm:$0xff]
    %v1645 = vld [vmem:[#allocation7 + $0xc0] sm:$0xff]
    %v1646 = vld [vmem:[#allocation7 + $0xc8] sm:$0xff]
    %v1647 = vld [vmem:[#allocation7 + $0xd0] sm:$0xff]
    %v1648 = vld [vmem:[#allocation7 + $0xd8] sm:$0xff]
    %v1649 = vld [vmem:[#allocation7 + $0xe0] sm:$0xff]
    %v1650 = vld [vmem:[#allocation7 + $0xe8] sm:$0xff]
    %v1651 = vld [vmem:[#allocation7 + $0xf0] sm:$0xff]
    %v1652 = vld [vmem:[#allocation7 + $0xf8] sm:$0xff]
    %v1685 = vunpack.c.l.b16 %v1621
    %v1686 = vunpack.c.h.b16 %v1621
    %v1687 = vunpack.c.l.b16 %v1622
    %v1688 = vunpack.c.h.b16 %v1622
    %v1689 = vunpack.c.l.b16 %v1623
    %v1690 = vunpack.c.h.b16 %v1623
    %v1691 = vunpack.c.l.b16 %v1624
    %v1692 = vunpack.c.h.b16 %v1624
    %v1693 = vunpack.c.l.b16 %v1625
    %v1694 = vunpack.c.h.b16 %v1625
    %v1695 = vunpack.c.l.b16 %v1626
    %v1696 = vunpack.c.h.b16 %v1626
    %v1697 = vunpack.c.l.b16 %v1627
    %v1698 = vunpack.c.h.b16 %v1627
    %v1699 = vunpack.c.l.b16 %v1628
    %v1700 = vunpack.c.h.b16 %v1628
    %v1701 = vunpack.c.l.b16 %v1629
    %v1702 = vunpack.c.h.b16 %v1629
    %v1703 = vunpack.c.l.b16 %v1630
    %v1704 = vunpack.c.h.b16 %v1630
    %v1705 = vunpack.c.l.b16 %v1631
    %v1706 = vunpack.c.h.b16 %v1631
    %v1707 = vunpack.c.l.b16 %v1632
    %v1708 = vunpack.c.h.b16 %v1632
    %v1709 = vunpack.c.l.b16 %v1633
    %v1710 = vunpack.c.h.b16 %v1633
    %v1711 = vunpack.c.l.b16 %v1634
    %v1712 = vunpack.c.h.b16 %v1634
    %v1713 = vunpack.c.l.b16 %v1635
    %v1714 = vunpack.c.h.b16 %v1635
    %v1715 = vunpack.c.l.b16 %v1636
    %v1716 = vunpack.c.h.b16 %v1636
    %v1717 = vunpack.c.l.b16 %v1637
    %v1718 = vunpack.c.h.b16 %v1637
    %v1719 = vunpack.c.l.b16 %v1638
    %v1720 = vunpack.c.h.b16 %v1638
    %v1721 = vunpack.c.l.b16 %v1639
    %v1722 = vunpack.c.h.b16 %v1639
    %v1723 = vunpack.c.l.b16 %v1640
    %v1724 = vunpack.c.h.b16 %v1640
    %v1725 = vunpack.c.l.b16 %v1641
    %v1726 = vunpack.c.h.b16 %v1641
    %v1727 = vunpack.c.l.b16 %v1642
    %v1728 = vunpack.c.h.b16 %v1642
    %v1729 = vunpack.c.l.b16 %v1643
    %v1730 = vunpack.c.h.b16 %v1643
    %v1731 = vunpack.c.l.b16 %v1644
    %v1732 = vunpack.c.h.b16 %v1644
    %v1733 = vunpack.c.l.b16 %v1645
    %v1734 = vunpack.c.h.b16 %v1645
    %v1735 = vunpack.c.l.b16 %v1646
    %v1736 = vunpack.c.h.b16 %v1646
    %v1737 = vunpack.c.l.b16 %v1647
    %v1738 = vunpack.c.h.b16 %v1647
    %v1739 = vunpack.c.l.b16 %v1648
    %v1740 = vunpack.c.h.b16 %v1648
    %v1741 = vunpack.c.l.b16 %v1649
    %v1742 = vunpack.c.h.b16 %v1649
    %v1743 = vunpack.c.l.b16 %v1650
    %v1744 = vunpack.c.h.b16 %v1650
    %v1745 = vunpack.c.l.b16 %v1651
    %v1746 = vunpack.c.h.b16 %v1651
    %v1747 = vunpack.c.l.b16 %v1652
    %v1748 = vunpack.c.h.b16 %v1652
    %v1749 = vpack.c.b16 %v1689, %v1685
    %v1750 = vpack.c.b16 %v1690, %v1686
    %v1751 = vpack.c.b16 %v1691, %v1687
    %v1752 = vpack.c.b16 %v1692, %v1688
    %v1753 = vpack.c.b16 %v1697, %v1693
    %v1754 = vpack.c.b16 %v1698, %v1694
    %v1755 = vpack.c.b16 %v1699, %v1695
    %v1756 = vpack.c.b16 %v1700, %v1696
    %v1757 = vpack.c.b16 %v1705, %v1701
    %v1758 = vpack.c.b16 %v1706, %v1702
    %v1759 = vpack.c.b16 %v1707, %v1703
    %v1760 = vpack.c.b16 %v1708, %v1704
    %v1761 = vpack.c.b16 %v1713, %v1709
    %v1762 = vpack.c.b16 %v1714, %v1710
    %v1763 = vpack.c.b16 %v1715, %v1711
    %v1764 = vpack.c.b16 %v1716, %v1712
    %v1765 = vpack.c.b16 %v1721, %v1717
    %v1766 = vpack.c.b16 %v1722, %v1718
    %v1767 = vpack.c.b16 %v1723, %v1719
    %v1768 = vpack.c.b16 %v1724, %v1720
    %v1769 = vpack.c.b16 %v1729, %v1725
    %v1770 = vpack.c.b16 %v1730, %v1726
    %v1771 = vpack.c.b16 %v1731, %v1727
    %v1772 = vpack.c.b16 %v1732, %v1728
    %v1773 = vpack.c.b16 %v1737, %v1733
    %v1774 = vpack.c.b16 %v1738, %v1734
    %v1775 = vpack.c.b16 %v1739, %v1735
    %v1776 = vpack.c.b16 %v1740, %v1736
    %v1777 = vpack.c.b16 %v1745, %v1741
    %v1778 = vpack.c.b16 %v1746, %v1742
    %v1779 = vpack.c.b16 %v1747, %v1743
    %v1780 = vpack.c.b16 %v1748, %v1744
    %1813 = vmatprep.subr.bf16.mxu0 %v1750
    %1814 = vmatpush1.bf16.msra.mxu0 %v1749
    %1815 = vmatprep.subr.bf16.mxu0 %v1754
    %1816 = vmatpush1.bf16.msra.mxu0 %v1753
    %1817 = vmatprep.subr.bf16.mxu0 %v1758
    %1818 = vmatpush1.bf16.msra.mxu0 %v1757
    %1819 = vmatprep.subr.bf16.mxu0 %v1762
    %1820 = vmatpush1.bf16.msra.mxu0 %v1761
    %1821 = vmatprep.subr.bf16.mxu0 %v1766
    %1822 = vmatpush1.bf16.msra.mxu0 %v1765
    %1823 = vmatprep.subr.bf16.mxu0 %v1770
    %1824 = vmatpush1.bf16.msra.mxu0 %v1769
    %1825 = vmatprep.subr.bf16.mxu0 %v1774
    %1826 = vmatpush1.bf16.msra.mxu0 %v1773
    %1827 = vmatprep.subr.bf16.mxu0 %v1778
    %1828 = vmatpush1.bf16.msra.mxu0 %v1777
    %1829 = vmatprep.subr.bf16.mxu0 0
    %1830 = vmatpush1.bf16.msra.mxu0 0
    %1831 = vmatprep.subr.bf16.mxu0 0
    %1832 = vmatpush1.bf16.msra.mxu0 0
    %1833 = vmatprep.subr.bf16.mxu0 0
    %1834 = vmatpush1.bf16.msra.mxu0 0
    %1835 = vmatprep.subr.bf16.mxu0 0
    %1836 = vmatpush1.bf16.msra.mxu0 0
    %1837 = vmatprep.subr.bf16.mxu0 0
    %1838 = vmatpush1.bf16.msra.mxu0 0
    %1839 = vmatprep.subr.bf16.mxu0 0
    %1840 = vmatpush1.bf16.msra.mxu0 0
    %1841 = vmatprep.subr.bf16.mxu0 0
    %1842 = vmatpush1.bf16.msra.mxu0 0
    %1843 = vmatprep.subr.bf16.mxu0 0
    %1844 = vmatpush1.bf16.msra.mxu0 0
    %1845 = vmatprep.mubr.bf16.mxu0 0
    %1846 = vmatmul.mubr.bf16.gmra.mrb[0].mxu0 %v1620
    %v1847 = vpop.f32.mrb[0].mxu0
    %v1848 = vadd.f32 0.0, %v1847
    %v1849 = vpop.f32.mrb[0].mxu0
    %v1850 = vadd.f32 0.0, %v1849
    %v1851 = vpop.f32.mrb[0].mxu0
    %v1852 = vpop.f32.mrb[0].mxu0
    %1853 = vdwg.mxu0
    %1854 = vmatprep.subr.bf16.mxu0 %v1752
    %1855 = vmatpush1.bf16.msra.mxu0 %v1751
    %1856 = vmatprep.subr.bf16.mxu0 %v1756
    %1857 = vmatpush1.bf16.msra.mxu0 %v1755
    %1858 = vmatprep.subr.bf16.mxu0 %v1760
    %1859 = vmatpush1.bf16.msra.mxu0 %v1759
    %1860 = vmatprep.subr.bf16.mxu0 %v1764
    %1861 = vmatpush1.bf16.msra.mxu0 %v1763
    %1862 = vmatprep.subr.bf16.mxu0 %v1768
    %1863 = vmatpush1.bf16.msra.mxu0 %v1767
    %1864 = vmatprep.subr.bf16.mxu0 %v1772
    %1865 = vmatpush1.bf16.msra.mxu0 %v1771
    %1866 = vmatprep.subr.bf16.mxu0 %v1776
    %1867 = vmatpush1.bf16.msra.mxu0 %v1775
    %1868 = vmatprep.subr.bf16.mxu0 %v1780
    %1869 = vmatpush1.bf16.msra.mxu0 %v1779
    %1870 = vmatprep.subr.bf16.mxu0 0
    %1871 = vmatpush1.bf16.msra.mxu0 0
    %1872 = vmatprep.subr.bf16.mxu0 0
    %1873 = vmatpush1.bf16.msra.mxu0 0
    %1874 = vmatprep.subr.bf16.mxu0 0
    %1875 = vmatpush1.bf16.msra.mxu0 0
    %1876 = vmatprep.subr.bf16.mxu0 0
    %1877 = vmatpush1.bf16.msra.mxu0 0
    %1878 = vmatprep.subr.bf16.mxu0 0
    %1879 = vmatpush1.bf16.msra.mxu0 0
    %1880 = vmatprep.subr.bf16.mxu0 0
    %1881 = vmatpush1.bf16.msra.mxu0 0
    %1882 = vmatprep.subr.bf16.mxu0 0
    %1883 = vmatpush1.bf16.msra.mxu0 0
    %1884 = vmatprep.subr.bf16.mxu0 0
    %1885 = vmatpush1.bf16.msra.mxu0 0
    %1886 = vmatprep.mubr.bf16.mxu0 0
    %1887 = vmatmul.mubr.bf16.gmra.mrb[0].mxu0 %v1620
    %v1888 = vpop.f32.mrb[0].mxu0
    %v1889 = vadd.f32 0.0, %v1888
    %v1890 = vpop.f32.mrb[0].mxu0
    %v1891 = vadd.f32 0.0, %v1890
    %v1892 = vpop.f32.mrb[0].mxu0
    %v1893 = vpop.f32.mrb[0].mxu0
    %1894 = vdwg.mxu0
    %s1895 = scalar_lea.vmem [#allocation4], 160
    %v1896 = vld [vmem:[%s1895] sm:$0xff]
    %v1897 = vld [vmem:[%s1895 + $0x8] sm:$0xff]
    %v1898 = vld [vmem:[%s1895 + $0x10] sm:$0xff]
    %v1899 = vld [vmem:[%s1895 + $0x18] sm:$0xff]
    %v1900 = vadd.f32 %v1896, %v1848
    %v1901 = vadd.f32 %v1897, %v1850
    %v1902 = vadd.f32 %v1898, %v1889
    %v1903 = vadd.f32 %v1899, %v1891
    %v1904 = vxor.u32 %v1900, 2147483648
    %v1905 = vmul.f32 %v1904, 1.442695
    %v1906 = vpow.pop %v1905
    %v1907 = vadd.f32 %v1906, 1.0
    %v1908 = vrcp.pop %v1907
    %v1909 = vmul.f32 1.0, %v1908
    %v1910 = vxor.u32 %v1901, 2147483648
    %v1911 = vmul.f32 %v1910, 1.442695
    %v1912 = vpow.pop %v1911
    %v1913 = vadd.f32 %v1912, 1.0
    %v1914 = vrcp.pop %v1913
    %v1915 = vmul.f32 1.0, %v1914
    %v1916 = vtanh.pop %v1902
    %v1917 = vxor.u32 %v1903, 2147483648
    %v1918 = vmul.f32 %v1917, 1.442695
    %v1919 = vpow.pop %v1918
    %v1920 = vadd.f32 %v1919, 1.0
    %v1921 = vrcp.pop %v1920
    %v1922 = vmul.f32 1.0, %v1921
    %v1923 = vmul.f32 %v1915, %v1619
    %v1924 = vmul.f32 %v1909, %v1916
    %v1925 = vadd.f32 %v1923, %v1924
    %v1926 = vtanh.pop %v1925
    %v1927 = vmul.f32 %v1922, %v1926
    %1928 = vst [vmem:[#allocation3] sm:$0xff] %v1925
    %1929 = vst [vmem:[#allocation2] sm:$0xff] %v1927
    %s1930 = scalar_lea.vmem [#allocation9], 40
    %1931 = vst [vmem:[%s1930] sm:$0xff] %v1927
    %v1932 = vld [vmem:[#allocation2] sm:$0xff]
    %v1933 = vld [vmem:[#allocation3] sm:$0xff]
    %v1934 = vpack.c.bf16 %v1932, %v1932
    %v1935 = vld [vmem:[#allocation7] sm:$0xff]
    %v1936 = vld [vmem:[#allocation7 + $0x8] sm:$0xff]
    %v1937 = vld [vmem:[#allocation7 + $0x10] sm:$0xff]
    %v1938 = vld [vmem:[#allocation7 + $0x18] sm:$0xff]
    %v1939 = vld [vmem:[#allocation7 + $0x20] sm:$0xff]
    %v1940 = vld [vmem:[#allocation7 + $0x28] sm:$0xff]
    %v1941 = vld [vmem:[#allocation7 + $0x30] sm:$0xff]
    %v1942 = vld [vmem:[#allocation7 + $0x38] sm:$0xff]
    %v1943 = vld [vmem:[#allocation7 + $0x40] sm:$0xff]
    %v1944 = vld [vmem:[#allocation7 + $0x48] sm:$0xff]
    %v1945 = vld [vmem:[#allocation7 + $0x50] sm:$0xff]
    %v1946 = vld [vmem:[#allocation7 + $0x58] sm:$0xff]
    %v1947 = vld [vmem:[#allocation7 + $0x60] sm:$0xff]
    %v1948 = vld [vmem:[#allocation7 + $0x68] sm:$0xff]
    %v1949 = vld [vmem:[#allocation7 + $0x70] sm:$0xff]
    %v1950 = vld [vmem:[#allocation7 + $0x78] sm:$0xff]
    %v1951 = vld [vmem:[#allocation7 + $0x80] sm:$0xff]
    %v1952 = vld [vmem:[#allocation7 + $0x88] sm:$0xff]
    %v1953 = vld [vmem:[#allocation7 + $0x90] sm:$0xff]
    %v1954 = vld [vmem:[#allocation7 + $0x98] sm:$0xff]
    %v1955 = vld [vmem:[#allocation7 + $0xa0] sm:$0xff]
    %v1956 = vld [vmem:[#allocation7 + $0xa8] sm:$0xff]
    %v1957 = vld [vmem:[#allocation7 + $0xb0] sm:$0xff]
    %v1958 = vld [vmem:[#allocation7 + $0xb8] sm:$0xff]
    %v1959 = vld [vmem:[#allocation7 + $0xc0] sm:$0xff]
    %v1960 = vld [vmem:[#allocation7 + $0xc8] sm:$0xff]
    %v1961 = vld [vmem:[#allocation7 + $0xd0] sm:$0xff]
    %v1962 = vld [vmem:[#allocation7 + $0xd8] sm:$0xff]
    %v1963 = vld [vmem:[#allocation7 + $0xe0] sm:$0xff]
    %v1964 = vld [vmem:[#allocation7 + $0xe8] sm:$0xff]
    %v1965 = vld [vmem:[#allocation7 + $0xf0] sm:$0xff]
    %v1966 = vld [vmem:[#allocation7 + $0xf8] sm:$0xff]
    %v1999 = vunpack.c.l.b16 %v1935
    %v2000 = vunpack.c.h.b16 %v1935
    %v2001 = vunpack.c.l.b16 %v1936
    %v2002 = vunpack.c.h.b16 %v1936
    %v2003 = vunpack.c.l.b16 %v1937
    %v2004 = vunpack.c.h.b16 %v1937
    %v2005 = vunpack.c.l.b16 %v1938
    %v2006 = vunpack.c.h.b16 %v1938
    %v2007 = vunpack.c.l.b16 %v1939
    %v2008 = vunpack.c.h.b16 %v1939
    %v2009 = vunpack.c.l.b16 %v1940
    %v2010 = vunpack.c.h.b16 %v1940
    %v2011 = vunpack.c.l.b16 %v1941
    %v2012 = vunpack.c.h.b16 %v1941
    %v2013 = vunpack.c.l.b16 %v1942
    %v2014 = vunpack.c.h.b16 %v1942
    %v2015 = vunpack.c.l.b16 %v1943
    %v2016 = vunpack.c.h.b16 %v1943
    %v2017 = vunpack.c.l.b16 %v1944
    %v2018 = vunpack.c.h.b16 %v1944
    %v2019 = vunpack.c.l.b16 %v1945
    %v2020 = vunpack.c.h.b16 %v1945
    %v2021 = vunpack.c.l.b16 %v1946
    %v2022 = vunpack.c.h.b16 %v1946
    %v2023 = vunpack.c.l.b16 %v1947
    %v2024 = vunpack.c.h.b16 %v1947
    %v2025 = vunpack.c.l.b16 %v1948
    %v2026 = vunpack.c.h.b16 %v1948
    %v2027 = vunpack.c.l.b16 %v1949
    %v2028 = vunpack.c.h.b16 %v1949
    %v2029 = vunpack.c.l.b16 %v1950
    %v2030 = vunpack.c.h.b16 %v1950
    %v2031 = vunpack.c.l.b16 %v1951
    %v2032 = vunpack.c.h.b16 %v1951
    %v2033 = vunpack.c.l.b16 %v1952
    %v2034 = vunpack.c.h.b16 %v1952
    %v2035 = vunpack.c.l.b16 %v1953
    %v2036 = vunpack.c.h.b16 %v1953
    %v2037 = vunpack.c.l.b16 %v1954
    %v2038 = vunpack.c.h.b16 %v1954
    %v2039 = vunpack.c.l.b16 %v1955
    %v2040 = vunpack.c.h.b16 %v1955
    %v2041 = vunpack.c.l.b16 %v1956
    %v2042 = vunpack.c.h.b16 %v1956
    %v2043 = vunpack.c.l.b16 %v1957
    %v2044 = vunpack.c.h.b16 %v1957
    %v2045 = vunpack.c.l.b16 %v1958
    %v2046 = vunpack.c.h.b16 %v1958
    %v2047 = vunpack.c.l.b16 %v1959
    %v2048 = vunpack.c.h.b16 %v1959
    %v2049 = vunpack.c.l.b16 %v1960
    %v2050 = vunpack.c.h.b16 %v1960
    %v2051 = vunpack.c.l.b16 %v1961
    %v2052 = vunpack.c.h.b16 %v1961
    %v2053 = vunpack.c.l.b16 %v1962
    %v2054 = vunpack.c.h.b16 %v1962
    %v2055 = vunpack.c.l.b16 %v1963
    %v2056 = vunpack.c.h.b16 %v1963
    %v2057 = vunpack.c.l.b16 %v1964
    %v2058 = vunpack.c.h.b16 %v1964
    %v2059 = vunpack.c.l.b16 %v1965
    %v2060 = vunpack.c.h.b16 %v1965
    %v2061 = vunpack.c.l.b16 %v1966
    %v2062 = vunpack.c.h.b16 %v1966
    %v2063 = vpack.c.b16 %v2003, %v1999
    %v2064 = vpack.c.b16 %v2004, %v2000
    %v2065 = vpack.c.b16 %v2005, %v2001
    %v2066 = vpack.c.b16 %v2006, %v2002
    %v2067 = vpack.c.b16 %v2011, %v2007
    %v2068 = vpack.c.b16 %v2012, %v2008
    %v2069 = vpack.c.b16 %v2013, %v2009
    %v2070 = vpack.c.b16 %v2014, %v2010
    %v2071 = vpack.c.b16 %v2019, %v2015
    %v2072 = vpack.c.b16 %v2020, %v2016
    %v2073 = vpack.c.b16 %v2021, %v2017
    %v2074 = vpack.c.b16 %v2022, %v2018
    %v2075 = vpack.c.b16 %v2027, %v2023
    %v2076 = vpack.c.b16 %v2028, %v2024
    %v2077 = vpack.c.b16 %v2029, %v2025
    %v2078 = vpack.c.b16 %v2030, %v2026
    %v2079 = vpack.c.b16 %v2035, %v2031
    %v2080 = vpack.c.b16 %v2036, %v2032
    %v2081 = vpack.c.b16 %v2037, %v2033
    %v2082 = vpack.c.b16 %v2038, %v2034
    %v2083 = vpack.c.b16 %v2043, %v2039
    %v2084 = vpack.c.b16 %v2044, %v2040
    %v2085 = vpack.c.b16 %v2045, %v2041
    %v2086 = vpack.c.b16 %v2046, %v2042
    %v2087 = vpack.c.b16 %v2051, %v2047
    %v2088 = vpack.c.b16 %v2052, %v2048
    %v2089 = vpack.c.b16 %v2053, %v2049
    %v2090 = vpack.c.b16 %v2054, %v2050
    %v2091 = vpack.c.b16 %v2059, %v2055
    %v2092 = vpack.c.b16 %v2060, %v2056
    %v2093 = vpack.c.b16 %v2061, %v2057
    %v2094 = vpack.c.b16 %v2062, %v2058
    %2127 = vmatprep.subr.bf16.mxu0 %v2064
    %2128 = vmatpush1.bf16.msra.mxu0 %v2063
    %2129 = vmatprep.subr.bf16.mxu0 %v2068
    %2130 = vmatpush1.bf16.msra.mxu0 %v2067
    %2131 = vmatprep.subr.bf16.mxu0 %v2072
    %2132 = vmatpush1.bf16.msra.mxu0 %v2071
    %2133 = vmatprep.subr.bf16.mxu0 %v2076
    %2134 = vmatpush1.bf16.msra.mxu0 %v2075
    %2135 = vmatprep.subr.bf16.mxu0 %v2080
    %2136 = vmatpush1.bf16.msra.mxu0 %v2079
    %2137 = vmatprep.subr.bf16.mxu0 %v2084
    %2138 = vmatpush1.bf16.msra.mxu0 %v2083
    %2139 = vmatprep.subr.bf16.mxu0 %v2088
    %2140 = vmatpush1.bf16.msra.mxu0 %v2087
    %2141 = vmatprep.subr.bf16.mxu0 %v2092
    %2142 = vmatpush1.bf16.msra.mxu0 %v2091
    %2143 = vmatprep.subr.bf16.mxu0 0
    %2144 = vmatpush1.bf16.msra.mxu0 0
    %2145 = vmatprep.subr.bf16.mxu0 0
    %2146 = vmatpush1.bf16.msra.mxu0 0
    %2147 = vmatprep.subr.bf16.mxu0 0
    %2148 = vmatpush1.bf16.msra.mxu0 0
    %2149 = vmatprep.subr.bf16.mxu0 0
    %2150 = vmatpush1.bf16.msra.mxu0 0
    %2151 = vmatprep.subr.bf16.mxu0 0
    %2152 = vmatpush1.bf16.msra.mxu0 0
    %2153 = vmatprep.subr.bf16.mxu0 0
    %2154 = vmatpush1.bf16.msra.mxu0 0
    %2155 = vmatprep.subr.bf16.mxu0 0
    %2156 = vmatpush1.bf16.msra.mxu0 0
    %2157 = vmatprep.subr.bf16.mxu0 0
    %2158 = vmatpush1.bf16.msra.mxu0 0
    %2159 = vmatprep.mubr.bf16.mxu0 0
    %2160 = vmatmul.mubr.bf16.gmra.mrb[0].mxu0 %v1934
    %v2161 = vpop.f32.mrb[0].mxu0
    %v2162 = vadd.f32 0.0, %v2161
    %v2163 = vpop.f32.mrb[0].mxu0
    %v2164 = vadd.f32 0.0, %v2163
    %v2165 = vpop.f32.mrb[0].mxu0
    %v2166 = vpop.f32.mrb[0].mxu0
    %2167 = vdwg.mxu0
    %2168 = vmatprep.subr.bf16.mxu0 %v2066
    %2169 = vmatpush1.bf16.msra.mxu0 %v2065
    %2170 = vmatprep.subr.bf16.mxu0 %v2070
    %2171 = vmatpush1.bf16.msra.mxu0 %v2069
    %2172 = vmatprep.subr.bf16.mxu0 %v2074
    %2173 = vmatpush1.bf16.msra.mxu0 %v2073
    %2174 = vmatprep.subr.bf16.mxu0 %v2078
    %2175 = vmatpush1.bf16.msra.mxu0 %v2077
    %2176 = vmatprep.subr.bf16.mxu0 %v2082
    %2177 = vmatpush1.bf16.msra.mxu0 %v2081
    %2178 = vmatprep.subr.bf16.mxu0 %v2086
    %2179 = vmatpush1.bf16.msra.mxu0 %v2085
    %2180 = vmatprep.subr.bf16.mxu0 %v2090
    %2181 = vmatpush1.bf16.msra.mxu0 %v2089
    %2182 = vmatprep.subr.bf16.mxu0 %v2094
    %2183 = vmatpush1.bf16.msra.mxu0 %v2093
    %2184 = vmatprep.subr.bf16.mxu0 0
    %2185 = vmatpush1.bf16.msra.mxu0 0
    %2186 = vmatprep.subr.bf16.mxu0 0
    %2187 = vmatpush1.bf16.msra.mxu0 0
    %2188 = vmatprep.subr.bf16.mxu0 0
    %2189 = vmatpush1.bf16.msra.mxu0 0
    %2190 = vmatprep.subr.bf16.mxu0 0
    %2191 = vmatpush1.bf16.msra.mxu0 0
    %2192 = vmatprep.subr.bf16.mxu0 0
    %2193 = vmatpush1.bf16.msra.mxu0 0
    %2194 = vmatprep.subr.bf16.mxu0 0
    %2195 = vmatpush1.bf16.msra.mxu0 0
    %2196 = vmatprep.subr.bf16.mxu0 0
    %2197 = vmatpush1.bf16.msra.mxu0 0
    %2198 = vmatprep.subr.bf16.mxu0 0
    %2199 = vmatpush1.bf16.msra.mxu0 0
    %2200 = vmatprep.mubr.bf16.mxu0 0
    %2201 = vmatmul.mubr.bf16.gmra.mrb[0].mxu0 %v1934
    %v2202 = vpop.f32.mrb[0].mxu0
    %v2203 = vadd.f32 0.0, %v2202
    %v2204 = vpop.f32.mrb[0].mxu0
    %v2205 = vadd.f32 0.0, %v2204
    %v2206 = vpop.f32.mrb[0].mxu0
    %v2207 = vpop.f32.mrb[0].mxu0
    %2208 = vdwg.mxu0
    %s2209 = scalar_lea.vmem [#allocation4], 192
    %v2210 = vld [vmem:[%s2209] sm:$0xff]
    %v2211 = vld [vmem:[%s2209 + $0x8] sm:$0xff]
    %v2212 = vld [vmem:[%s2209 + $0x10] sm:$0xff]
    %v2213 = vld [vmem:[%s2209 + $0x18] sm:$0xff]
    %v2214 = vadd.f32 %v2210, %v2162
    %v2215 = vadd.f32 %v2211, %v2164
    %v2216 = vadd.f32 %v2212, %v2203
    %v2217 = vadd.f32 %v2213, %v2205
    %v2218 = vxor.u32 %v2214, 2147483648
    %v2219 = vmul.f32 %v2218, 1.442695
    %v2220 = vpow.pop %v2219
    %v2221 = vadd.f32 %v2220, 1.0
    %v2222 = vrcp.pop %v2221
    %v2223 = vmul.f32 1.0, %v2222
    %v2224 = vxor.u32 %v2215, 2147483648
    %v2225 = vmul.f32 %v2224, 1.442695
    %v2226 = vpow.pop %v2225
    %v2227 = vadd.f32 %v2226, 1.0
    %v2228 = vrcp.pop %v2227
    %v2229 = vmul.f32 1.0, %v2228
    %v2230 = vtanh.pop %v2216
    %v2231 = vxor.u32 %v2217, 2147483648
    %v2232 = vmul.f32 %v2231, 1.442695
    %v2233 = vpow.pop %v2232
    %v2234 = vadd.f32 %v2233, 1.0
    %v2235 = vrcp.pop %v2234
    %v2236 = vmul.f32 1.0, %v2235
    %v2237 = vmul.f32 %v2229, %v1933
    %v2238 = vmul.f32 %v2223, %v2230
    %v2239 = vadd.f32 %v2237, %v2238
    %v2240 = vtanh.pop %v2239
    %v2241 = vmul.f32 %v2236, %v2240
    %2242 = vst [vmem:[#allocation3] sm:$0xff] %v2239
    %2243 = vst [vmem:[#allocation2] sm:$0xff] %v2241
    %s2244 = scalar_lea.vmem [#allocation9], 48
    %2245 = vst [vmem:[%s2244] sm:$0xff] %v2241
    %v2246 = vld [vmem:[#allocation2] sm:$0xff]
    %v2247 = vld [vmem:[#allocation3] sm:$0xff]
    %v2248 = vpack.c.bf16 %v2246, %v2246
    %v2249 = vld [vmem:[#allocation7] sm:$0xff]
    %v2250 = vld [vmem:[#allocation7 + $0x8] sm:$0xff]
    %v2251 = vld [vmem:[#allocation7 + $0x10] sm:$0xff]
    %v2252 = vld [vmem:[#allocation7 + $0x18] sm:$0xff]
    %v2253 = vld [vmem:[#allocation7 + $0x20] sm:$0xff]
    %v2254 = vld [vmem:[#allocation7 + $0x28] sm:$0xff]
    %v2255 = vld [vmem:[#allocation7 + $0x30] sm:$0xff]
    %v2256 = vld [vmem:[#allocation7 + $0x38] sm:$0xff]
    %v2257 = vld [vmem:[#allocation7 + $0x40] sm:$0xff]
    %v2258 = vld [vmem:[#allocation7 + $0x48] sm:$0xff]
    %v2259 = vld [vmem:[#allocation7 + $0x50] sm:$0xff]
    %v2260 = vld [vmem:[#allocation7 + $0x58] sm:$0xff]
    %v2261 = vld [vmem:[#allocation7 + $0x60] sm:$0xff]
    %v2262 = vld [vmem:[#allocation7 + $0x68] sm:$0xff]
    %v2263 = vld [vmem:[#allocation7 + $0x70] sm:$0xff]
    %v2264 = vld [vmem:[#allocation7 + $0x78] sm:$0xff]
    %v2265 = vld [vmem:[#allocation7 + $0x80] sm:$0xff]
    %v2266 = vld [vmem:[#allocation7 + $0x88] sm:$0xff]
    %v2267 = vld [vmem:[#allocation7 + $0x90] sm:$0xff]
    %v2268 = vld [vmem:[#allocation7 + $0x98] sm:$0xff]
    %v2269 = vld [vmem:[#allocation7 + $0xa0] sm:$0xff]
    %v2270 = vld [vmem:[#allocation7 + $0xa8] sm:$0xff]
    %v2271 = vld [vmem:[#allocation7 + $0xb0] sm:$0xff]
    %v2272 = vld [vmem:[#allocation7 + $0xb8] sm:$0xff]
    %v2273 = vld [vmem:[#allocation7 + $0xc0] sm:$0xff]
    %v2274 = vld [vmem:[#allocation7 + $0xc8] sm:$0xff]
    %v2275 = vld [vmem:[#allocation7 + $0xd0] sm:$0xff]
    %v2276 = vld [vmem:[#allocation7 + $0xd8] sm:$0xff]
    %v2277 = vld [vmem:[#allocation7 + $0xe0] sm:$0xff]
    %v2278 = vld [vmem:[#allocation7 + $0xe8] sm:$0xff]
    %v2279 = vld [vmem:[#allocation7 + $0xf0] sm:$0xff]
    %v2280 = vld [vmem:[#allocation7 + $0xf8] sm:$0xff]
    %v2313 = vunpack.c.l.b16 %v2249
    %v2314 = vunpack.c.h.b16 %v2249
    %v2315 = vunpack.c.l.b16 %v2250
    %v2316 = vunpack.c.h.b16 %v2250
    %v2317 = vunpack.c.l.b16 %v2251
    %v2318 = vunpack.c.h.b16 %v2251
    %v2319 = vunpack.c.l.b16 %v2252
    %v2320 = vunpack.c.h.b16 %v2252
    %v2321 = vunpack.c.l.b16 %v2253
    %v2322 = vunpack.c.h.b16 %v2253
    %v2323 = vunpack.c.l.b16 %v2254
    %v2324 = vunpack.c.h.b16 %v2254
    %v2325 = vunpack.c.l.b16 %v2255
    %v2326 = vunpack.c.h.b16 %v2255
    %v2327 = vunpack.c.l.b16 %v2256
    %v2328 = vunpack.c.h.b16 %v2256
    %v2329 = vunpack.c.l.b16 %v2257
    %v2330 = vunpack.c.h.b16 %v2257
    %v2331 = vunpack.c.l.b16 %v2258
    %v2332 = vunpack.c.h.b16 %v2258
    %v2333 = vunpack.c.l.b16 %v2259
    %v2334 = vunpack.c.h.b16 %v2259
    %v2335 = vunpack.c.l.b16 %v2260
    %v2336 = vunpack.c.h.b16 %v2260
    %v2337 = vunpack.c.l.b16 %v2261
    %v2338 = vunpack.c.h.b16 %v2261
    %v2339 = vunpack.c.l.b16 %v2262
    %v2340 = vunpack.c.h.b16 %v2262
    %v2341 = vunpack.c.l.b16 %v2263
    %v2342 = vunpack.c.h.b16 %v2263
    %v2343 = vunpack.c.l.b16 %v2264
    %v2344 = vunpack.c.h.b16 %v2264
    %v2345 = vunpack.c.l.b16 %v2265
    %v2346 = vunpack.c.h.b16 %v2265
    %v2347 = vunpack.c.l.b16 %v2266
    %v2348 = vunpack.c.h.b16 %v2266
    %v2349 = vunpack.c.l.b16 %v2267
    %v2350 = vunpack.c.h.b16 %v2267
    %v2351 = vunpack.c.l.b16 %v2268
    %v2352 = vunpack.c.h.b16 %v2268
    %v2353 = vunpack.c.l.b16 %v2269
    %v2354 = vunpack.c.h.b16 %v2269
    %v2355 = vunpack.c.l.b16 %v2270
    %v2356 = vunpack.c.h.b16 %v2270
    %v2357 = vunpack.c.l.b16 %v2271
    %v2358 = vunpack.c.h.b16 %v2271
    %v2359 = vunpack.c.l.b16 %v2272
    %v2360 = vunpack.c.h.b16 %v2272
    %v2361 = vunpack.c.l.b16 %v2273
    %v2362 = vunpack.c.h.b16 %v2273
    %v2363 = vunpack.c.l.b16 %v2274
    %v2364 = vunpack.c.h.b16 %v2274
    %v2365 = vunpack.c.l.b16 %v2275
    %v2366 = vunpack.c.h.b16 %v2275
    %v2367 = vunpack.c.l.b16 %v2276
    %v2368 = vunpack.c.h.b16 %v2276
    %v2369 = vunpack.c.l.b16 %v2277
    %v2370 = vunpack.c.h.b16 %v2277
    %v2371 = vunpack.c.l.b16 %v2278
    %v2372 = vunpack.c.h.b16 %v2278
    %v2373 = vunpack.c.l.b16 %v2279
    %v2374 = vunpack.c.h.b16 %v2279
    %v2375 = vunpack.c.l.b16 %v2280
    %v2376 = vunpack.c.h.b16 %v2280
    %v2377 = vpack.c.b16 %v2317, %v2313
    %v2378 = vpack.c.b16 %v2318, %v2314
    %v2379 = vpack.c.b16 %v2319, %v2315
    %v2380 = vpack.c.b16 %v2320, %v2316
    %v2381 = vpack.c.b16 %v2325, %v2321
    %v2382 = vpack.c.b16 %v2326, %v2322
    %v2383 = vpack.c.b16 %v2327, %v2323
    %v2384 = vpack.c.b16 %v2328, %v2324
    %v2385 = vpack.c.b16 %v2333, %v2329
    %v2386 = vpack.c.b16 %v2334, %v2330
    %v2387 = vpack.c.b16 %v2335, %v2331
    %v2388 = vpack.c.b16 %v2336, %v2332
    %v2389 = vpack.c.b16 %v2341, %v2337
    %v2390 = vpack.c.b16 %v2342, %v2338
    %v2391 = vpack.c.b16 %v2343, %v2339
    %v2392 = vpack.c.b16 %v2344, %v2340
    %v2393 = vpack.c.b16 %v2349, %v2345
    %v2394 = vpack.c.b16 %v2350, %v2346
    %v2395 = vpack.c.b16 %v2351, %v2347
    %v2396 = vpack.c.b16 %v2352, %v2348
    %v2397 = vpack.c.b16 %v2357, %v2353
    %v2398 = vpack.c.b16 %v2358, %v2354
    %v2399 = vpack.c.b16 %v2359, %v2355
    %v2400 = vpack.c.b16 %v2360, %v2356
    %v2401 = vpack.c.b16 %v2365, %v2361
    %v2402 = vpack.c.b16 %v2366, %v2362
    %v2403 = vpack.c.b16 %v2367, %v2363
    %v2404 = vpack.c.b16 %v2368, %v2364
    %v2405 = vpack.c.b16 %v2373, %v2369
    %v2406 = vpack.c.b16 %v2374, %v2370
    %v2407 = vpack.c.b16 %v2375, %v2371
    %v2408 = vpack.c.b16 %v2376, %v2372
    %2441 = vmatprep.subr.bf16.mxu0 %v2378
    %2442 = vmatpush1.bf16.msra.mxu0 %v2377
    %2443 = vmatprep.subr.bf16.mxu0 %v2382
    %2444 = vmatpush1.bf16.msra.mxu0 %v2381
    %2445 = vmatprep.subr.bf16.mxu0 %v2386
    %2446 = vmatpush1.bf16.msra.mxu0 %v2385
    %2447 = vmatprep.subr.bf16.mxu0 %v2390
    %2448 = vmatpush1.bf16.msra.mxu0 %v2389
    %2449 = vmatprep.subr.bf16.mxu0 %v2394
    %2450 = vmatpush1.bf16.msra.mxu0 %v2393
    %2451 = vmatprep.subr.bf16.mxu0 %v2398
    %2452 = vmatpush1.bf16.msra.mxu0 %v2397
    %2453 = vmatprep.subr.bf16.mxu0 %v2402
    %2454 = vmatpush1.bf16.msra.mxu0 %v2401
    %2455 = vmatprep.subr.bf16.mxu0 %v2406
    %2456 = vmatpush1.bf16.msra.mxu0 %v2405
    %2457 = vmatprep.subr.bf16.mxu0 0
    %2458 = vmatpush1.bf16.msra.mxu0 0
    %2459 = vmatprep.subr.bf16.mxu0 0
    %2460 = vmatpush1.bf16.msra.mxu0 0
    %2461 = vmatprep.subr.bf16.mxu0 0
    %2462 = vmatpush1.bf16.msra.mxu0 0
    %2463 = vmatprep.subr.bf16.mxu0 0
    %2464 = vmatpush1.bf16.msra.mxu0 0
    %2465 = vmatprep.subr.bf16.mxu0 0
    %2466 = vmatpush1.bf16.msra.mxu0 0
    %2467 = vmatprep.subr.bf16.mxu0 0
    %2468 = vmatpush1.bf16.msra.mxu0 0
    %2469 = vmatprep.subr.bf16.mxu0 0
    %2470 = vmatpush1.bf16.msra.mxu0 0
    %2471 = vmatprep.subr.bf16.mxu0 0
    %2472 = vmatpush1.bf16.msra.mxu0 0
    %2473 = vmatprep.mubr.bf16.mxu0 0
    %2474 = vmatmul.mubr.bf16.gmra.mrb[0].mxu0 %v2248
    %v2475 = vpop.f32.mrb[0].mxu0
    %v2476 = vadd.f32 0.0, %v2475
    %v2477 = vpop.f32.mrb[0].mxu0
    %v2478 = vadd.f32 0.0, %v2477
    %v2479 = vpop.f32.mrb[0].mxu0
    %v2480 = vpop.f32.mrb[0].mxu0
    %2481 = vdwg.mxu0
    %2482 = vmatprep.subr.bf16.mxu0 %v2380
    %2483 = vmatpush1.bf16.msra.mxu0 %v2379
    %2484 = vmatprep.subr.bf16.mxu0 %v2384
    %2485 = vmatpush1.bf16.msra.mxu0 %v2383
    %2486 = vmatprep.subr.bf16.mxu0 %v2388
    %2487 = vmatpush1.bf16.msra.mxu0 %v2387
    %2488 = vmatprep.subr.bf16.mxu0 %v2392
    %2489 = vmatpush1.bf16.msra.mxu0 %v2391
    %2490 = vmatprep.subr.bf16.mxu0 %v2396
    %2491 = vmatpush1.bf16.msra.mxu0 %v2395
    %2492 = vmatprep.subr.bf16.mxu0 %v2400
    %2493 = vmatpush1.bf16.msra.mxu0 %v2399
    %2494 = vmatprep.subr.bf16.mxu0 %v2404
    %2495 = vmatpush1.bf16.msra.mxu0 %v2403
    %2496 = vmatprep.subr.bf16.mxu0 %v2408
    %2497 = vmatpush1.bf16.msra.mxu0 %v2407
    %2498 = vmatprep.subr.bf16.mxu0 0
    %2499 = vmatpush1.bf16.msra.mxu0 0
    %2500 = vmatprep.subr.bf16.mxu0 0
    %2501 = vmatpush1.bf16.msra.mxu0 0
    %2502 = vmatprep.subr.bf16.mxu0 0
    %2503 = vmatpush1.bf16.msra.mxu0 0
    %2504 = vmatprep.subr.bf16.mxu0 0
    %2505 = vmatpush1.bf16.msra.mxu0 0
    %2506 = vmatprep.subr.bf16.mxu0 0
    %2507 = vmatpush1.bf16.msra.mxu0 0
    %2508 = vmatprep.subr.bf16.mxu0 0
    %2509 = vmatpush1.bf16.msra.mxu0 0
    %2510 = vmatprep.subr.bf16.mxu0 0
    %2511 = vmatpush1.bf16.msra.mxu0 0
    %2512 = vmatprep.subr.bf16.mxu0 0
    %2513 = vmatpush1.bf16.msra.mxu0 0
    %2514 = vmatprep.mubr.bf16.mxu0 0
    %2515 = vmatmul.mubr.bf16.gmra.mrb[0].mxu0 %v2248
    %v2516 = vpop.f32.mrb[0].mxu0
    %v2517 = vadd.f32 0.0, %v2516
    %v2518 = vpop.f32.mrb[0].mxu0
    %v2519 = vadd.f32 0.0, %v2518
    %v2520 = vpop.f32.mrb[0].mxu0
    %v2521 = vpop.f32.mrb[0].mxu0
    %2522 = vdwg.mxu0
    %s2523 = scalar_lea.vmem [#allocation4], 224
    %v2524 = vld [vmem:[%s2523] sm:$0xff]
    %v2525 = vld [vmem:[%s2523 + $0x8] sm:$0xff]
    %v2526 = vld [vmem:[%s2523 + $0x10] sm:$0xff]
    %v2527 = vld [vmem:[%s2523 + $0x18] sm:$0xff]
    %v2528 = vadd.f32 %v2524, %v2476
    %v2529 = vadd.f32 %v2525, %v2478
    %v2530 = vadd.f32 %v2526, %v2517
    %v2531 = vadd.f32 %v2527, %v2519
    %v2532 = vxor.u32 %v2528, 2147483648
    %v2533 = vmul.f32 %v2532, 1.442695
    %v2534 = vpow.pop %v2533
    %v2535 = vadd.f32 %v2534, 1.0
    %v2536 = vrcp.pop %v2535
    %v2537 = vmul.f32 1.0, %v2536
    %v2538 = vxor.u32 %v2529, 2147483648
    %v2539 = vmul.f32 %v2538, 1.442695
    %v2540 = vpow.pop %v2539
    %v2541 = vadd.f32 %v2540, 1.0
    %v2542 = vrcp.pop %v2541
    %v2543 = vmul.f32 1.0, %v2542
    %v2544 = vtanh.pop %v2530
    %v2545 = vxor.u32 %v2531, 2147483648
    %v2546 = vmul.f32 %v2545, 1.442695
    %v2547 = vpow.pop %v2546
    %v2548 = vadd.f32 %v2547, 1.0
    %v2549 = vrcp.pop %v2548
    %v2550 = vmul.f32 1.0, %v2549
    %v2551 = vmul.f32 %v2543, %v2247
    %v2552 = vmul.f32 %v2537, %v2544
    %v2553 = vadd.f32 %v2551, %v2552
    %v2554 = vtanh.pop %v2553
    %v2555 = vmul.f32 %v2550, %v2554
    %2556 = vst [vmem:[#allocation3] sm:$0xff] %v2553
    %2557 = vst [vmem:[#allocation2] sm:$0xff] %v2555
    %s2558 = scalar_lea.vmem [#allocation9], 56
    %2559 = vst [vmem:[%s2558] sm:$0xff] %v2555
    %v2560 = vld [vmem:[#allocation2] sm:$0xff]
    %v2561 = vld [vmem:[#allocation3] sm:$0xff]
    %v2562 = vpack.c.bf16 %v2560, %v2560
    %v2563 = vld [vmem:[#allocation7] sm:$0xff]
    %v2564 = vld [vmem:[#allocation7 + $0x8] sm:$0xff]
    %v2565 = vld [vmem:[#allocation7 + $0x10] sm:$0xff]
    %v2566 = vld [vmem:[#allocation7 + $0x18] sm:$0xff]
    %v2567 = vld [vmem:[#allocation7 + $0x20] sm:$0xff]
    %v2568 = vld [vmem:[#allocation7 + $0x28] sm:$0xff]
    %v2569 = vld [vmem:[#allocation7 + $0x30] sm:$0xff]
    %v2570 = vld [vmem:[#allocation7 + $0x38] sm:$0xff]
    %v2571 = vld [vmem:[#allocation7 + $0x40] sm:$0xff]
    %v2572 = vld [vmem:[#allocation7 + $0x48] sm:$0xff]
    %v2573 = vld [vmem:[#allocation7 + $0x50] sm:$0xff]
    %v2574 = vld [vmem:[#allocation7 + $0x58] sm:$0xff]
    %v2575 = vld [vmem:[#allocation7 + $0x60] sm:$0xff]
    %v2576 = vld [vmem:[#allocation7 + $0x68] sm:$0xff]
    %v2577 = vld [vmem:[#allocation7 + $0x70] sm:$0xff]
    %v2578 = vld [vmem:[#allocation7 + $0x78] sm:$0xff]
    %v2579 = vld [vmem:[#allocation7 + $0x80] sm:$0xff]
    %v2580 = vld [vmem:[#allocation7 + $0x88] sm:$0xff]
    %v2581 = vld [vmem:[#allocation7 + $0x90] sm:$0xff]
    %v2582 = vld [vmem:[#allocation7 + $0x98] sm:$0xff]
    %v2583 = vld [vmem:[#allocation7 + $0xa0] sm:$0xff]
    %v2584 = vld [vmem:[#allocation7 + $0xa8] sm:$0xff]
    %v2585 = vld [vmem:[#allocation7 + $0xb0] sm:$0xff]
    %v2586 = vld [vmem:[#allocation7 + $0xb8] sm:$0xff]
    %v2587 = vld [vmem:[#allocation7 + $0xc0] sm:$0xff]
    %v2588 = vld [vmem:[#allocation7 + $0xc8] sm:$0xff]
    %v2589 = vld [vmem:[#allocation7 + $0xd0] sm:$0xff]
    %v2590 = vld [vmem:[#allocation7 + $0xd8] sm:$0xff]
    %v2591 = vld [vmem:[#allocation7 + $0xe0] sm:$0xff]
    %v2592 = vld [vmem:[#allocation7 + $0xe8] sm:$0xff]
    %v2593 = vld [vmem:[#allocation7 + $0xf0] sm:$0xff]
    %v2594 = vld [vmem:[#allocation7 + $0xf8] sm:$0xff]
    %v2627 = vunpack.c.l.b16 %v2563
    %v2628 = vunpack.c.h.b16 %v2563
    %v2629 = vunpack.c.l.b16 %v2564
    %v2630 = vunpack.c.h.b16 %v2564
    %v2631 = vunpack.c.l.b16 %v2565
    %v2632 = vunpack.c.h.b16 %v2565
    %v2633 = vunpack.c.l.b16 %v2566
    %v2634 = vunpack.c.h.b16 %v2566
    %v2635 = vunpack.c.l.b16 %v2567
    %v2636 = vunpack.c.h.b16 %v2567
    %v2637 = vunpack.c.l.b16 %v2568
    %v2638 = vunpack.c.h.b16 %v2568
    %v2639 = vunpack.c.l.b16 %v2569
    %v2640 = vunpack.c.h.b16 %v2569
    %v2641 = vunpack.c.l.b16 %v2570
    %v2642 = vunpack.c.h.b16 %v2570
    %v2643 = vunpack.c.l.b16 %v2571
    %v2644 = vunpack.c.h.b16 %v2571
    %v2645 = vunpack.c.l.b16 %v2572
    %v2646 = vunpack.c.h.b16 %v2572
    %v2647 = vunpack.c.l.b16 %v2573
    %v2648 = vunpack.c.h.b16 %v2573
    %v2649 = vunpack.c.l.b16 %v2574
    %v2650 = vunpack.c.h.b16 %v2574
    %v2651 = vunpack.c.l.b16 %v2575
    %v2652 = vunpack.c.h.b16 %v2575
    %v2653 = vunpack.c.l.b16 %v2576
    %v2654 = vunpack.c.h.b16 %v2576
    %v2655 = vunpack.c.l.b16 %v2577
    %v2656 = vunpack.c.h.b16 %v2577
    %v2657 = vunpack.c.l.b16 %v2578
    %v2658 = vunpack.c.h.b16 %v2578
    %v2659 = vunpack.c.l.b16 %v2579
    %v2660 = vunpack.c.h.b16 %v2579
    %v2661 = vunpack.c.l.b16 %v2580
    %v2662 = vunpack.c.h.b16 %v2580
    %v2663 = vunpack.c.l.b16 %v2581
    %v2664 = vunpack.c.h.b16 %v2581
    %v2665 = vunpack.c.l.b16 %v2582
    %v2666 = vunpack.c.h.b16 %v2582
    %v2667 = vunpack.c.l.b16 %v2583
    %v2668 = vunpack.c.h.b16 %v2583
    %v2669 = vunpack.c.l.b16 %v2584
    %v2670 = vunpack.c.h.b16 %v2584
    %v2671 = vunpack.c.l.b16 %v2585
    %v2672 = vunpack.c.h.b16 %v2585
    %v2673 = vunpack.c.l.b16 %v2586
    %v2674 = vunpack.c.h.b16 %v2586
    %v2675 = vunpack.c.l.b16 %v2587
    %v2676 = vunpack.c.h.b16 %v2587
    %v2677 = vunpack.c.l.b16 %v2588
    %v2678 = vunpack.c.h.b16 %v2588
    %v2679 = vunpack.c.l.b16 %v2589
    %v2680 = vunpack.c.h.b16 %v2589
    %v2681 = vunpack.c.l.b16 %v2590
    %v2682 = vunpack.c.h.b16 %v2590
    %v2683 = vunpack.c.l.b16 %v2591
    %v2684 = vunpack.c.h.b16 %v2591
    %v2685 = vunpack.c.l.b16 %v2592
    %v2686 = vunpack.c.h.b16 %v2592
    %v2687 = vunpack.c.l.b16 %v2593
    %v2688 = vunpack.c.h.b16 %v2593
    %v2689 = vunpack.c.l.b16 %v2594
    %v2690 = vunpack.c.h.b16 %v2594
    %v2691 = vpack.c.b16 %v2631, %v2627
    %v2692 = vpack.c.b16 %v2632, %v2628
    %v2693 = vpack.c.b16 %v2633, %v2629
    %v2694 = vpack.c.b16 %v2634, %v2630
    %v2695 = vpack.c.b16 %v2639, %v2635
    %v2696 = vpack.c.b16 %v2640, %v2636
    %v2697 = vpack.c.b16 %v2641, %v2637
    %v2698 = vpack.c.b16 %v2642, %v2638
    %v2699 = vpack.c.b16 %v2647, %v2643
    %v2700 = vpack.c.b16 %v2648, %v2644
    %v2701 = vpack.c.b16 %v2649, %v2645
    %v2702 = vpack.c.b16 %v2650, %v2646
    %v2703 = vpack.c.b16 %v2655, %v2651
    %v2704 = vpack.c.b16 %v2656, %v2652
    %v2705 = vpack.c.b16 %v2657, %v2653
    %v2706 = vpack.c.b16 %v2658, %v2654
    %v2707 = vpack.c.b16 %v2663, %v2659
    %v2708 = vpack.c.b16 %v2664, %v2660
    %v2709 = vpack.c.b16 %v2665, %v2661
    %v2710 = vpack.c.b16 %v2666, %v2662
    %v2711 = vpack.c.b16 %v2671, %v2667
    %v2712 = vpack.c.b16 %v2672, %v2668
    %v2713 = vpack.c.b16 %v2673, %v2669
    %v2714 = vpack.c.b16 %v2674, %v2670
    %v2715 = vpack.c.b16 %v2679, %v2675
    %v2716 = vpack.c.b16 %v2680, %v2676
    %v2717 = vpack.c.b16 %v2681, %v2677
    %v2718 = vpack.c.b16 %v2682, %v2678
    %v2719 = vpack.c.b16 %v2687, %v2683
    %v2720 = vpack.c.b16 %v2688, %v2684
    %v2721 = vpack.c.b16 %v2689, %v2685
    %v2722 = vpack.c.b16 %v2690, %v2686
    %2755 = vmatprep.subr.bf16.mxu0 %v2692
    %2756 = vmatpush1.bf16.msra.mxu0 %v2691
    %2757 = vmatprep.subr.bf16.mxu0 %v2696
    %2758 = vmatpush1.bf16.msra.mxu0 %v2695
    %2759 = vmatprep.subr.bf16.mxu0 %v2700
    %2760 = vmatpush1.bf16.msra.mxu0 %v2699
    %2761 = vmatprep.subr.bf16.mxu0 %v2704
    %2762 = vmatpush1.bf16.msra.mxu0 %v2703
    %2763 = vmatprep.subr.bf16.mxu0 %v2708
    %2764 = vmatpush1.bf16.msra.mxu0 %v2707
    %2765 = vmatprep.subr.bf16.mxu0 %v2712
    %2766 = vmatpush1.bf16.msra.mxu0 %v2711
    %2767 = vmatprep.subr.bf16.mxu0 %v2716
    %2768 = vmatpush1.bf16.msra.mxu0 %v2715
    %2769 = vmatprep.subr.bf16.mxu0 %v2720
    %2770 = vmatpush1.bf16.msra.mxu0 %v2719
    %2771 = vmatprep.subr.bf16.mxu0 0
    %2772 = vmatpush1.bf16.msra.mxu0 0
    %2773 = vmatprep.subr.bf16.mxu0 0
    %2774 = vmatpush1.bf16.msra.mxu0 0
    %2775 = vmatprep.subr.bf16.mxu0 0
    %2776 = vmatpush1.bf16.msra.mxu0 0
    %2777 = vmatprep.subr.bf16.mxu0 0
    %2778 = vmatpush1.bf16.msra.mxu0 0
    %2779 = vmatprep.subr.bf16.mxu0 0
    %2780 = vmatpush1.bf16.msra.mxu0 0
    %2781 = vmatprep.subr.bf16.mxu0 0
    %2782 = vmatpush1.bf16.msra.mxu0 0
    %2783 = vmatprep.subr.bf16.mxu0 0
    %2784 = vmatpush1.bf16.msra.mxu0 0
    %2785 = vmatprep.subr.bf16.mxu0 0
    %2786 = vmatpush1.bf16.msra.mxu0 0
    %2787 = vmatprep.mubr.bf16.mxu0 0
    %2788 = vmatmul.mubr.bf16.gmra.mrb[0].mxu0 %v2562
    %v2789 = vpop.f32.mrb[0].mxu0
    %v2790 = vadd.f32 0.0, %v2789
    %v2791 = vpop.f32.mrb[0].mxu0
    %v2792 = vadd.f32 0.0, %v2791
    %v2793 = vpop.f32.mrb[0].mxu0
    %v2794 = vpop.f32.mrb[0].mxu0
    %2795 = vdwg.mxu0
    %2796 = vmatprep.subr.bf16.mxu0 %v2694
    %2797 = vmatpush1.bf16.msra.mxu0 %v2693
    %2798 = vmatprep.subr.bf16.mxu0 %v2698
    %2799 = vmatpush1.bf16.msra.mxu0 %v2697
    %2800 = vmatprep.subr.bf16.mxu0 %v2702
    %2801 = vmatpush1.bf16.msra.mxu0 %v2701
    %2802 = vmatprep.subr.bf16.mxu0 %v2706
    %2803 = vmatpush1.bf16.msra.mxu0 %v2705
    %2804 = vmatprep.subr.bf16.mxu0 %v2710
    %2805 = vmatpush1.bf16.msra.mxu0 %v2709
    %2806 = vmatprep.subr.bf16.mxu0 %v2714
    %2807 = vmatpush1.bf16.msra.mxu0 %v2713
    %2808 = vmatprep.subr.bf16.mxu0 %v2718
    %2809 = vmatpush1.bf16.msra.mxu0 %v2717
    %2810 = vmatprep.subr.bf16.mxu0 %v2722
    %2811 = vmatpush1.bf16.msra.mxu0 %v2721
    %2812 = vmatprep.subr.bf16.mxu0 0
    %2813 = vmatpush1.bf16.msra.mxu0 0
    %2814 = vmatprep.subr.bf16.mxu0 0
    %2815 = vmatpush1.bf16.msra.mxu0 0
    %2816 = vmatprep.subr.bf16.mxu0 0
    %2817 = vmatpush1.bf16.msra.mxu0 0
    %2818 = vmatprep.subr.bf16.mxu0 0
    %2819 = vmatpush1.bf16.msra.mxu0 0
    %2820 = vmatprep.subr.bf16.mxu0 0
    %2821 = vmatpush1.bf16.msra.mxu0 0
    %2822 = vmatprep.subr.bf16.mxu0 0
    %2823 = vmatpush1.bf16.msra.mxu0 0
    %2824 = vmatprep.subr.bf16.mxu0 0
    %2825 = vmatpush1.bf16.msra.mxu0 0
    %2826 = vmatprep.subr.bf16.mxu0 0
    %2827 = vmatpush1.bf16.msra.mxu0 0
    %2828 = vmatprep.mubr.bf16.mxu0 0
    %2829 = vmatmul.mubr.bf16.gmra.mrb[0].mxu0 %v2562
    %v2830 = vpop.f32.mrb[0].mxu0
    %v2831 = vadd.f32 0.0, %v2830
    %v2832 = vpop.f32.mrb[0].mxu0
    %v2833 = vadd.f32 0.0, %v2832
    %v2834 = vpop.f32.mrb[0].mxu0
    %v2835 = vpop.f32.mrb[0].mxu0
    %2836 = vdwg.mxu0
    %s2837 = scalar_lea.vmem [#allocation4], 256
    %v2838 = vld [vmem:[%s2837] sm:$0xff]
    %v2839 = vld [vmem:[%s2837 + $0x8] sm:$0xff]
    %v2840 = vld [vmem:[%s2837 + $0x10] sm:$0xff]
    %v2841 = vld [vmem:[%s2837 + $0x18] sm:$0xff]
    %v2842 = vadd.f32 %v2838, %v2790
    %v2843 = vadd.f32 %v2839, %v2792
    %v2844 = vadd.f32 %v2840, %v2831
    %v2845 = vadd.f32 %v2841, %v2833
    %v2846 = vxor.u32 %v2842, 2147483648
    %v2847 = vmul.f32 %v2846, 1.442695
    %v2848 = vpow.pop %v2847
    %v2849 = vadd.f32 %v2848, 1.0
    %v2850 = vrcp.pop %v2849
    %v2851 = vmul.f32 1.0, %v2850
    %v2852 = vxor.u32 %v2843, 2147483648
    %v2853 = vmul.f32 %v2852, 1.442695
    %v2854 = vpow.pop %v2853
    %v2855 = vadd.f32 %v2854, 1.0
    %v2856 = vrcp.pop %v2855
    %v2857 = vmul.f32 1.0, %v2856
    %v2858 = vtanh.pop %v2844
    %v2859 = vxor.u32 %v2845, 2147483648
    %v2860 = vmul.f32 %v2859, 1.442695
    %v2861 = vpow.pop %v2860
    %v2862 = vadd.f32 %v2861, 1.0
    %v2863 = vrcp.pop %v2862
    %v2864 = vmul.f32 1.0, %v2863
    %v2865 = vmul.f32 %v2857, %v2561
    %v2866 = vmul.f32 %v2851, %v2858
    %v2867 = vadd.f32 %v2865, %v2866
    %v2868 = vtanh.pop %v2867
    %v2869 = vmul.f32 %v2864, %v2868
    %2870 = vst [vmem:[#allocation3] sm:$0xff] %v2867
    %2871 = vst [vmem:[#allocation2] sm:$0xff] %v2869
    %s2872 = scalar_lea.vmem [#allocation9], 64
    %2873 = vst [vmem:[%s2872] sm:$0xff] %v2869
    %v2874 = vld [vmem:[#allocation2] sm:$0xff]
    %v2875 = vld [vmem:[#allocation3] sm:$0xff]
    %v2876 = vpack.c.bf16 %v2874, %v2874
    %v2877 = vld [vmem:[#allocation7] sm:$0xff]
    %v2878 = vld [vmem:[#allocation7 + $0x8] sm:$0xff]
    %v2879 = vld [vmem:[#allocation7 + $0x10] sm:$0xff]
    %v2880 = vld [vmem:[#allocation7 + $0x18] sm:$0xff]
    %v2881 = vld [vmem:[#allocation7 + $0x20] sm:$0xff]
    %v2882 = vld [vmem:[#allocation7 + $0x28] sm:$0xff]
    %v2883 = vld [vmem:[#allocation7 + $0x30] sm:$0xff]
    %v2884 = vld [vmem:[#allocation7 + $0x38] sm:$0xff]
    %v2885 = vld [vmem:[#allocation7 + $0x40] sm:$0xff]
    %v2886 = vld [vmem:[#allocation7 + $0x48] sm:$0xff]
    %v2887 = vld [vmem:[#allocation7 + $0x50] sm:$0xff]
    %v2888 = vld [vmem:[#allocation7 + $0x58] sm:$0xff]
    %v2889 = vld [vmem:[#allocation7 + $0x60] sm:$0xff]
    %v2890 = vld [vmem:[#allocation7 + $0x68] sm:$0xff]
    %v2891 = vld [vmem:[#allocation7 + $0x70] sm:$0xff]
    %v2892 = vld [vmem:[#allocation7 + $0x78] sm:$0xff]
    %v2893 = vld [vmem:[#allocation7 + $0x80] sm:$0xff]
    %v2894 = vld [vmem:[#allocation7 + $0x88] sm:$0xff]
    %v2895 = vld [vmem:[#allocation7 + $0x90] sm:$0xff]
    %v2896 = vld [vmem:[#allocation7 + $0x98] sm:$0xff]
    %v2897 = vld [vmem:[#allocation7 + $0xa0] sm:$0xff]
    %v2898 = vld [vmem:[#allocation7 + $0xa8] sm:$0xff]
    %v2899 = vld [vmem:[#allocation7 + $0xb0] sm:$0xff]
    %v2900 = vld [vmem:[#allocation7 + $0xb8] sm:$0xff]
    %v2901 = vld [vmem:[#allocation7 + $0xc0] sm:$0xff]
    %v2902 = vld [vmem:[#allocation7 + $0xc8] sm:$0xff]
    %v2903 = vld [vmem:[#allocation7 + $0xd0] sm:$0xff]
    %v2904 = vld [vmem:[#allocation7 + $0xd8] sm:$0xff]
    %v2905 = vld [vmem:[#allocation7 + $0xe0] sm:$0xff]
    %v2906 = vld [vmem:[#allocation7 + $0xe8] sm:$0xff]
    %v2907 = vld [vmem:[#allocation7 + $0xf0] sm:$0xff]
    %v2908 = vld [vmem:[#allocation7 + $0xf8] sm:$0xff]
    %v2941 = vunpack.c.l.b16 %v2877
    %v2942 = vunpack.c.h.b16 %v2877
    %v2943 = vunpack.c.l.b16 %v2878
    %v2944 = vunpack.c.h.b16 %v2878
    %v2945 = vunpack.c.l.b16 %v2879
    %v2946 = vunpack.c.h.b16 %v2879
    %v2947 = vunpack.c.l.b16 %v2880
    %v2948 = vunpack.c.h.b16 %v2880
    %v2949 = vunpack.c.l.b16 %v2881
    %v2950 = vunpack.c.h.b16 %v2881
    %v2951 = vunpack.c.l.b16 %v2882
    %v2952 = vunpack.c.h.b16 %v2882
    %v2953 = vunpack.c.l.b16 %v2883
    %v2954 = vunpack.c.h.b16 %v2883
    %v2955 = vunpack.c.l.b16 %v2884
    %v2956 = vunpack.c.h.b16 %v2884
    %v2957 = vunpack.c.l.b16 %v2885
    %v2958 = vunpack.c.h.b16 %v2885
    %v2959 = vunpack.c.l.b16 %v2886
    %v2960 = vunpack.c.h.b16 %v2886
    %v2961 = vunpack.c.l.b16 %v2887
    %v2962 = vunpack.c.h.b16 %v2887
    %v2963 = vunpack.c.l.b16 %v2888
    %v2964 = vunpack.c.h.b16 %v2888
    %v2965 = vunpack.c.l.b16 %v2889
    %v2966 = vunpack.c.h.b16 %v2889
    %v2967 = vunpack.c.l.b16 %v2890
    %v2968 = vunpack.c.h.b16 %v2890
    %v2969 = vunpack.c.l.b16 %v2891
    %v2970 = vunpack.c.h.b16 %v2891
    %v2971 = vunpack.c.l.b16 %v2892
    %v2972 = vunpack.c.h.b16 %v2892
    %v2973 = vunpack.c.l.b16 %v2893
    %v2974 = vunpack.c.h.b16 %v2893
    %v2975 = vunpack.c.l.b16 %v2894
    %v2976 = vunpack.c.h.b16 %v2894
    %v2977 = vunpack.c.l.b16 %v2895
    %v2978 = vunpack.c.h.b16 %v2895
    %v2979 = vunpack.c.l.b16 %v2896
    %v2980 = vunpack.c.h.b16 %v2896
    %v2981 = vunpack.c.l.b16 %v2897
    %v2982 = vunpack.c.h.b16 %v2897
    %v2983 = vunpack.c.l.b16 %v2898
    %v2984 = vunpack.c.h.b16 %v2898
    %v2985 = vunpack.c.l.b16 %v2899
    %v2986 = vunpack.c.h.b16 %v2899
    %v2987 = vunpack.c.l.b16 %v2900
    %v2988 = vunpack.c.h.b16 %v2900
    %v2989 = vunpack.c.l.b16 %v2901
    %v2990 = vunpack.c.h.b16 %v2901
    %v2991 = vunpack.c.l.b16 %v2902
    %v2992 = vunpack.c.h.b16 %v2902
    %v2993 = vunpack.c.l.b16 %v2903
    %v2994 = vunpack.c.h.b16 %v2903
    %v2995 = vunpack.c.l.b16 %v2904
    %v2996 = vunpack.c.h.b16 %v2904
    %v2997 = vunpack.c.l.b16 %v2905
    %v2998 = vunpack.c.h.b16 %v2905
    %v2999 = vunpack.c.l.b16 %v2906
    %v3000 = vunpack.c.h.b16 %v2906
    %v3001 = vunpack.c.l.b16 %v2907
    %v3002 = vunpack.c.h.b16 %v2907
    %v3003 = vunpack.c.l.b16 %v2908
    %v3004 = vunpack.c.h.b16 %v2908
    %v3005 = vpack.c.b16 %v2945, %v2941
    %v3006 = vpack.c.b16 %v2946, %v2942
    %v3007 = vpack.c.b16 %v2947, %v2943
    %v3008 = vpack.c.b16 %v2948, %v2944
    %v3009 = vpack.c.b16 %v2953, %v2949
    %v3010 = vpack.c.b16 %v2954, %v2950
    %v3011 = vpack.c.b16 %v2955, %v2951
    %v3012 = vpack.c.b16 %v2956, %v2952
    %v3013 = vpack.c.b16 %v2961, %v2957
    %v3014 = vpack.c.b16 %v2962, %v2958
    %v3015 = vpack.c.b16 %v2963, %v2959
    %v3016 = vpack.c.b16 %v2964, %v2960
    %v3017 = vpack.c.b16 %v2969, %v2965
    %v3018 = vpack.c.b16 %v2970, %v2966
    %v3019 = vpack.c.b16 %v2971, %v2967
    %v3020 = vpack.c.b16 %v2972, %v2968
    %v3021 = vpack.c.b16 %v2977, %v2973
    %v3022 = vpack.c.b16 %v2978, %v2974
    %v3023 = vpack.c.b16 %v2979, %v2975
    %v3024 = vpack.c.b16 %v2980, %v2976
    %v3025 = vpack.c.b16 %v2985, %v2981
    %v3026 = vpack.c.b16 %v2986, %v2982
    %v3027 = vpack.c.b16 %v2987, %v2983
    %v3028 = vpack.c.b16 %v2988, %v2984
    %v3029 = vpack.c.b16 %v2993, %v2989
    %v3030 = vpack.c.b16 %v2994, %v2990
    %v3031 = vpack.c.b16 %v2995, %v2991
    %v3032 = vpack.c.b16 %v2996, %v2992
    %v3033 = vpack.c.b16 %v3001, %v2997
    %v3034 = vpack.c.b16 %v3002, %v2998
    %v3035 = vpack.c.b16 %v3003, %v2999
    %v3036 = vpack.c.b16 %v3004, %v3000
    %3069 = vmatprep.subr.bf16.mxu0 %v3006
    %3070 = vmatpush1.bf16.msra.mxu0 %v3005
    %3071 = vmatprep.subr.bf16.mxu0 %v3010
    %3072 = vmatpush1.bf16.msra.mxu0 %v3009
    %3073 = vmatprep.subr.bf16.mxu0 %v3014
    %3074 = vmatpush1.bf16.msra.mxu0 %v3013
    %3075 = vmatprep.subr.bf16.mxu0 %v3018
    %3076 = vmatpush1.bf16.msra.mxu0 %v3017
    %3077 = vmatprep.subr.bf16.mxu0 %v3022
    %3078 = vmatpush1.bf16.msra.mxu0 %v3021
    %3079 = vmatprep.subr.bf16.mxu0 %v3026
    %3080 = vmatpush1.bf16.msra.mxu0 %v3025
    %3081 = vmatprep.subr.bf16.mxu0 %v3030
    %3082 = vmatpush1.bf16.msra.mxu0 %v3029
    %3083 = vmatprep.subr.bf16.mxu0 %v3034
    %3084 = vmatpush1.bf16.msra.mxu0 %v3033
    %3085 = vmatprep.subr.bf16.mxu0 0
    %3086 = vmatpush1.bf16.msra.mxu0 0
    %3087 = vmatprep.subr.bf16.mxu0 0
    %3088 = vmatpush1.bf16.msra.mxu0 0
    %3089 = vmatprep.subr.bf16.mxu0 0
    %3090 = vmatpush1.bf16.msra.mxu0 0
    %3091 = vmatprep.subr.bf16.mxu0 0
    %3092 = vmatpush1.bf16.msra.mxu0 0
    %3093 = vmatprep.subr.bf16.mxu0 0
    %3094 = vmatpush1.bf16.msra.mxu0 0
    %3095 = vmatprep.subr.bf16.mxu0 0
    %3096 = vmatpush1.bf16.msra.mxu0 0
    %3097 = vmatprep.subr.bf16.mxu0 0
    %3098 = vmatpush1.bf16.msra.mxu0 0
    %3099 = vmatprep.subr.bf16.mxu0 0
    %3100 = vmatpush1.bf16.msra.mxu0 0
    %3101 = vmatprep.mubr.bf16.mxu0 0
    %3102 = vmatmul.mubr.bf16.gmra.mrb[0].mxu0 %v2876
    %v3103 = vpop.f32.mrb[0].mxu0
    %v3104 = vadd.f32 0.0, %v3103
    %v3105 = vpop.f32.mrb[0].mxu0
    %v3106 = vadd.f32 0.0, %v3105
    %v3107 = vpop.f32.mrb[0].mxu0
    %v3108 = vpop.f32.mrb[0].mxu0
    %3109 = vdwg.mxu0
    %3110 = vmatprep.subr.bf16.mxu0 %v3008
    %3111 = vmatpush1.bf16.msra.mxu0 %v3007
    %3112 = vmatprep.subr.bf16.mxu0 %v3012
    %3113 = vmatpush1.bf16.msra.mxu0 %v3011
    %3114 = vmatprep.subr.bf16.mxu0 %v3016
    %3115 = vmatpush1.bf16.msra.mxu0 %v3015
    %3116 = vmatprep.subr.bf16.mxu0 %v3020
    %3117 = vmatpush1.bf16.msra.mxu0 %v3019
    %3118 = vmatprep.subr.bf16.mxu0 %v3024
    %3119 = vmatpush1.bf16.msra.mxu0 %v3023
    %3120 = vmatprep.subr.bf16.mxu0 %v3028
    %3121 = vmatpush1.bf16.msra.mxu0 %v3027
    %3122 = vmatprep.subr.bf16.mxu0 %v3032
    %3123 = vmatpush1.bf16.msra.mxu0 %v3031
    %3124 = vmatprep.subr.bf16.mxu0 %v3036
    %3125 = vmatpush1.bf16.msra.mxu0 %v3035
    %3126 = vmatprep.subr.bf16.mxu0 0
    %3127 = vmatpush1.bf16.msra.mxu0 0
    %3128 = vmatprep.subr.bf16.mxu0 0
    %3129 = vmatpush1.bf16.msra.mxu0 0
    %3130 = vmatprep.subr.bf16.mxu0 0
    %3131 = vmatpush1.bf16.msra.mxu0 0
    %3132 = vmatprep.subr.bf16.mxu0 0
    %3133 = vmatpush1.bf16.msra.mxu0 0
    %3134 = vmatprep.subr.bf16.mxu0 0
    %3135 = vmatpush1.bf16.msra.mxu0 0
    %3136 = vmatprep.subr.bf16.mxu0 0
    %3137 = vmatpush1.bf16.msra.mxu0 0
    %3138 = vmatprep.subr.bf16.mxu0 0
    %3139 = vmatpush1.bf16.msra.mxu0 0
    %3140 = vmatprep.subr.bf16.mxu0 0
    %3141 = vmatpush1.bf16.msra.mxu0 0
    %3142 = vmatprep.mubr.bf16.mxu0 0
    %3143 = vmatmul.mubr.bf16.gmra.mrb[0].mxu0 %v2876
    %v3144 = vpop.f32.mrb[0].mxu0
    %v3145 = vadd.f32 0.0, %v3144
    %v3146 = vpop.f32.mrb[0].mxu0
    %v3147 = vadd.f32 0.0, %v3146
    %v3148 = vpop.f32.mrb[0].mxu0
    %v3149 = vpop.f32.mrb[0].mxu0
    %3150 = vdwg.mxu0
    %s3151 = scalar_lea.vmem [#allocation4], 288
    %v3152 = vld [vmem:[%s3151] sm:$0xff]
    %v3153 = vld [vmem:[%s3151 + $0x8] sm:$0xff]
    %v3154 = vld [vmem:[%s3151 + $0x10] sm:$0xff]
    %v3155 = vld [vmem:[%s3151 + $0x18] sm:$0xff]
    %v3156 = vadd.f32 %v3152, %v3104
    %v3157 = vadd.f32 %v3153, %v3106
    %v3158 = vadd.f32 %v3154, %v3145
    %v3159 = vadd.f32 %v3155, %v3147
    %v3160 = vxor.u32 %v3156, 2147483648
    %v3161 = vmul.f32 %v3160, 1.442695
    %v3162 = vpow.pop %v3161
    %v3163 = vadd.f32 %v3162, 1.0
    %v3164 = vrcp.pop %v3163
    %v3165 = vmul.f32 1.0, %v3164
    %v3166 = vxor.u32 %v3157, 2147483648
    %v3167 = vmul.f32 %v3166, 1.442695
    %v3168 = vpow.pop %v3167
    %v3169 = vadd.f32 %v3168, 1.0
    %v3170 = vrcp.pop %v3169
    %v3171 = vmul.f32 1.0, %v3170
    %v3172 = vtanh.pop %v3158
    %v3173 = vxor.u32 %v3159, 2147483648
    %v3174 = vmul.f32 %v3173, 1.442695
    %v3175 = vpow.pop %v3174
    %v3176 = vadd.f32 %v3175, 1.0
    %v3177 = vrcp.pop %v3176
    %v3178 = vmul.f32 1.0, %v3177
    %v3179 = vmul.f32 %v3171, %v2875
    %v3180 = vmul.f32 %v3165, %v3172
    %v3181 = vadd.f32 %v3179, %v3180
    %v3182 = vtanh.pop %v3181
    %v3183 = vmul.f32 %v3178, %v3182
    %3184 = vst [vmem:[#allocation3] sm:$0xff] %v3181
    %3185 = vst [vmem:[#allocation2] sm:$0xff] %v3183
    %s3186 = scalar_lea.vmem [#allocation9], 72
    %3187 = vst [vmem:[%s3186] sm:$0xff] %v3183
    %v3188 = vld [vmem:[#allocation2] sm:$0xff]
    %v3189 = vld [vmem:[#allocation3] sm:$0xff]
    %v3190 = vpack.c.bf16 %v3188, %v3188
    %v3191 = vld [vmem:[#allocation7] sm:$0xff]
    %v3192 = vld [vmem:[#allocation7 + $0x8] sm:$0xff]
    %v3193 = vld [vmem:[#allocation7 + $0x10] sm:$0xff]
    %v3194 = vld [vmem:[#allocation7 + $0x18] sm:$0xff]
    %v3195 = vld [vmem:[#allocation7 + $0x20] sm:$0xff]
    %v3196 = vld [vmem:[#allocation7 + $0x28] sm:$0xff]
    %v3197 = vld [vmem:[#allocation7 + $0x30] sm:$0xff]
    %v3198 = vld [vmem:[#allocation7 + $0x38] sm:$0xff]
    %v3199 = vld [vmem:[#allocation7 + $0x40] sm:$0xff]
    %v3200 = vld [vmem:[#allocation7 + $0x48] sm:$0xff]
    %v3201 = vld [vmem:[#allocation7 + $0x50] sm:$0xff]
    %v3202 = vld [vmem:[#allocation7 + $0x58] sm:$0xff]
    %v3203 = vld [vmem:[#allocation7 + $0x60] sm:$0xff]
    %v3204 = vld [vmem:[#allocation7 + $0x68] sm:$0xff]
    %v3205 = vld [vmem:[#allocation7 + $0x70] sm:$0xff]
    %v3206 = vld [vmem:[#allocation7 + $0x78] sm:$0xff]
    %v3207 = vld [vmem:[#allocation7 + $0x80] sm:$0xff]
    %v3208 = vld [vmem:[#allocation7 + $0x88] sm:$0xff]
    %v3209 = vld [vmem:[#allocation7 + $0x90] sm:$0xff]
    %v3210 = vld [vmem:[#allocation7 + $0x98] sm:$0xff]
    %v3211 = vld [vmem:[#allocation7 + $0xa0] sm:$0xff]
    %v3212 = vld [vmem:[#allocation7 + $0xa8] sm:$0xff]
    %v3213 = vld [vmem:[#allocation7 + $0xb0] sm:$0xff]
    %v3214 = vld [vmem:[#allocation7 + $0xb8] sm:$0xff]
    %v3215 = vld [vmem:[#allocation7 + $0xc0] sm:$0xff]
    %v3216 = vld [vmem:[#allocation7 + $0xc8] sm:$0xff]
    %v3217 = vld [vmem:[#allocation7 + $0xd0] sm:$0xff]
    %v3218 = vld [vmem:[#allocation7 + $0xd8] sm:$0xff]
    %v3219 = vld [vmem:[#allocation7 + $0xe0] sm:$0xff]
    %v3220 = vld [vmem:[#allocation7 + $0xe8] sm:$0xff]
    %v3221 = vld [vmem:[#allocation7 + $0xf0] sm:$0xff]
    %v3222 = vld [vmem:[#allocation7 + $0xf8] sm:$0xff]
    %v3255 = vunpack.c.l.b16 %v3191
    %v3256 = vunpack.c.h.b16 %v3191
    %v3257 = vunpack.c.l.b16 %v3192
    %v3258 = vunpack.c.h.b16 %v3192
    %v3259 = vunpack.c.l.b16 %v3193
    %v3260 = vunpack.c.h.b16 %v3193
    %v3261 = vunpack.c.l.b16 %v3194
    %v3262 = vunpack.c.h.b16 %v3194
    %v3263 = vunpack.c.l.b16 %v3195
    %v3264 = vunpack.c.h.b16 %v3195
    %v3265 = vunpack.c.l.b16 %v3196
    %v3266 = vunpack.c.h.b16 %v3196
    %v3267 = vunpack.c.l.b16 %v3197
    %v3268 = vunpack.c.h.b16 %v3197
    %v3269 = vunpack.c.l.b16 %v3198
    %v3270 = vunpack.c.h.b16 %v3198
    %v3271 = vunpack.c.l.b16 %v3199
    %v3272 = vunpack.c.h.b16 %v3199
    %v3273 = vunpack.c.l.b16 %v3200
    %v3274 = vunpack.c.h.b16 %v3200
    %v3275 = vunpack.c.l.b16 %v3201
    %v3276 = vunpack.c.h.b16 %v3201
    %v3277 = vunpack.c.l.b16 %v3202
    %v3278 = vunpack.c.h.b16 %v3202
    %v3279 = vunpack.c.l.b16 %v3203
    %v3280 = vunpack.c.h.b16 %v3203
    %v3281 = vunpack.c.l.b16 %v3204
    %v3282 = vunpack.c.h.b16 %v3204
    %v3283 = vunpack.c.l.b16 %v3205
    %v3284 = vunpack.c.h.b16 %v3205
    %v3285 = vunpack.c.l.b16 %v3206
    %v3286 = vunpack.c.h.b16 %v3206
    %v3287 = vunpack.c.l.b16 %v3207
    %v3288 = vunpack.c.h.b16 %v3207
    %v3289 = vunpack.c.l.b16 %v3208
    %v3290 = vunpack.c.h.b16 %v3208
    %v3291 = vunpack.c.l.b16 %v3209
    %v3292 = vunpack.c.h.b16 %v3209
    %v3293 = vunpack.c.l.b16 %v3210
    %v3294 = vunpack.c.h.b16 %v3210
    %v3295 = vunpack.c.l.b16 %v3211
    %v3296 = vunpack.c.h.b16 %v3211
    %v3297 = vunpack.c.l.b16 %v3212
    %v3298 = vunpack.c.h.b16 %v3212
    %v3299 = vunpack.c.l.b16 %v3213
    %v3300 = vunpack.c.h.b16 %v3213
    %v3301 = vunpack.c.l.b16 %v3214
    %v3302 = vunpack.c.h.b16 %v3214
    %v3303 = vunpack.c.l.b16 %v3215
    %v3304 = vunpack.c.h.b16 %v3215
    %v3305 = vunpack.c.l.b16 %v3216
    %v3306 = vunpack.c.h.b16 %v3216
    %v3307 = vunpack.c.l.b16 %v3217
    %v3308 = vunpack.c.h.b16 %v3217
    %v3309 = vunpack.c.l.b16 %v3218
    %v3310 = vunpack.c.h.b16 %v3218
    %v3311 = vunpack.c.l.b16 %v3219
    %v3312 = vunpack.c.h.b16 %v3219
    %v3313 = vunpack.c.l.b16 %v3220
    %v3314 = vunpack.c.h.b16 %v3220
    %v3315 = vunpack.c.l.b16 %v3221
    %v3316 = vunpack.c.h.b16 %v3221
    %v3317 = vunpack.c.l.b16 %v3222
    %v3318 = vunpack.c.h.b16 %v3222
    %v3319 = vpack.c.b16 %v3259, %v3255
    %v3320 = vpack.c.b16 %v3260, %v3256
    %v3321 = vpack.c.b16 %v3261, %v3257
    %v3322 = vpack.c.b16 %v3262, %v3258
    %v3323 = vpack.c.b16 %v3267, %v3263
    %v3324 = vpack.c.b16 %v3268, %v3264
    %v3325 = vpack.c.b16 %v3269, %v3265
    %v3326 = vpack.c.b16 %v3270, %v3266
    %v3327 = vpack.c.b16 %v3275, %v3271
    %v3328 = vpack.c.b16 %v3276, %v3272
    %v3329 = vpack.c.b16 %v3277, %v3273
    %v3330 = vpack.c.b16 %v3278, %v3274
    %v3331 = vpack.c.b16 %v3283, %v3279
    %v3332 = vpack.c.b16 %v3284, %v3280
    %v3333 = vpack.c.b16 %v3285, %v3281
    %v3334 = vpack.c.b16 %v3286, %v3282
    %v3335 = vpack.c.b16 %v3291, %v3287
    %v3336 = vpack.c.b16 %v3292, %v3288
    %v3337 = vpack.c.b16 %v3293, %v3289
    %v3338 = vpack.c.b16 %v3294, %v3290
    %v3339 = vpack.c.b16 %v3299, %v3295
    %v3340 = vpack.c.b16 %v3300, %v3296
    %v3341 = vpack.c.b16 %v3301, %v3297
    %v3342 = vpack.c.b16 %v3302, %v3298
    %v3343 = vpack.c.b16 %v3307, %v3303
    %v3344 = vpack.c.b16 %v3308, %v3304
    %v3345 = vpack.c.b16 %v3309, %v3305
    %v3346 = vpack.c.b16 %v3310, %v3306
    %v3347 = vpack.c.b16 %v3315, %v3311
    %v3348 = vpack.c.b16 %v3316, %v3312
    %v3349 = vpack.c.b16 %v3317, %v3313
    %v3350 = vpack.c.b16 %v3318, %v3314
    %3383 = vmatprep.subr.bf16.mxu0 %v3320
    %3384 = vmatpush1.bf16.msra.mxu0 %v3319
    %3385 = vmatprep.subr.bf16.mxu0 %v3324
    %3386 = vmatpush1.bf16.msra.mxu0 %v3323
    %3387 = vmatprep.subr.bf16.mxu0 %v3328
    %3388 = vmatpush1.bf16.msra.mxu0 %v3327
    %3389 = vmatprep.subr.bf16.mxu0 %v3332
    %3390 = vmatpush1.bf16.msra.mxu0 %v3331
    %3391 = vmatprep.subr.bf16.mxu0 %v3336
    %3392 = vmatpush1.bf16.msra.mxu0 %v3335
    %3393 = vmatprep.subr.bf16.mxu0 %v3340
    %3394 = vmatpush1.bf16.msra.mxu0 %v3339
    %3395 = vmatprep.subr.bf16.mxu0 %v3344
    %3396 = vmatpush1.bf16.msra.mxu0 %v3343
    %3397 = vmatprep.subr.bf16.mxu0 %v3348
    %3398 = vmatpush1.bf16.msra.mxu0 %v3347
    %3399 = vmatprep.subr.bf16.mxu0 0
    %3400 = vmatpush1.bf16.msra.mxu0 0
    %3401 = vmatprep.subr.bf16.mxu0 0
    %3402 = vmatpush1.bf16.msra.mxu0 0
    %3403 = vmatprep.subr.bf16.mxu0 0
    %3404 = vmatpush1.bf16.msra.mxu0 0
    %3405 = vmatprep.subr.bf16.mxu0 0
    %3406 = vmatpush1.bf16.msra.mxu0 0
    %3407 = vmatprep.subr.bf16.mxu0 0
    %3408 = vmatpush1.bf16.msra.mxu0 0
    %3409 = vmatprep.subr.bf16.mxu0 0
    %3410 = vmatpush1.bf16.msra.mxu0 0
    %3411 = vmatprep.subr.bf16.mxu0 0
    %3412 = vmatpush1.bf16.msra.mxu0 0
    %3413 = vmatprep.subr.bf16.mxu0 0
    %3414 = vmatpush1.bf16.msra.mxu0 0
    %3415 = vmatprep.mubr.bf16.mxu0 0
    %3416 = vmatmul.mubr.bf16.gmra.mrb[0].mxu0 %v3190
    %v3417 = vpop.f32.mrb[0].mxu0
    %v3418 = vadd.f32 0.0, %v3417
    %v3419 = vpop.f32.mrb[0].mxu0
    %v3420 = vadd.f32 0.0, %v3419
    %v3421 = vpop.f32.mrb[0].mxu0
    %v3422 = vpop.f32.mrb[0].mxu0
    %3423 = vdwg.mxu0
    %3424 = vmatprep.subr.bf16.mxu0 %v3322
    %3425 = vmatpush1.bf16.msra.mxu0 %v3321
    %3426 = vmatprep.subr.bf16.mxu0 %v3326
    %3427 = vmatpush1.bf16.msra.mxu0 %v3325
    %3428 = vmatprep.subr.bf16.mxu0 %v3330
    %3429 = vmatpush1.bf16.msra.mxu0 %v3329
    %3430 = vmatprep.subr.bf16.mxu0 %v3334
    %3431 = vmatpush1.bf16.msra.mxu0 %v3333
    %3432 = vmatprep.subr.bf16.mxu0 %v3338
    %3433 = vmatpush1.bf16.msra.mxu0 %v3337
    %3434 = vmatprep.subr.bf16.mxu0 %v3342
    %3435 = vmatpush1.bf16.msra.mxu0 %v3341
    %3436 = vmatprep.subr.bf16.mxu0 %v3346
    %3437 = vmatpush1.bf16.msra.mxu0 %v3345
    %3438 = vmatprep.subr.bf16.mxu0 %v3350
    %3439 = vmatpush1.bf16.msra.mxu0 %v3349
    %3440 = vmatprep.subr.bf16.mxu0 0
    %3441 = vmatpush1.bf16.msra.mxu0 0
    %3442 = vmatprep.subr.bf16.mxu0 0
    %3443 = vmatpush1.bf16.msra.mxu0 0
    %3444 = vmatprep.subr.bf16.mxu0 0
    %3445 = vmatpush1.bf16.msra.mxu0 0
    %3446 = vmatprep.subr.bf16.mxu0 0
    %3447 = vmatpush1.bf16.msra.mxu0 0
    %3448 = vmatprep.subr.bf16.mxu0 0
    %3449 = vmatpush1.bf16.msra.mxu0 0
    %3450 = vmatprep.subr.bf16.mxu0 0
    %3451 = vmatpush1.bf16.msra.mxu0 0
    %3452 = vmatprep.subr.bf16.mxu0 0
    %3453 = vmatpush1.bf16.msra.mxu0 0
    %3454 = vmatprep.subr.bf16.mxu0 0
    %3455 = vmatpush1.bf16.msra.mxu0 0
    %3456 = vmatprep.mubr.bf16.mxu0 0
    %3457 = vmatmul.mubr.bf16.gmra.mrb[0].mxu0 %v3190
    %v3458 = vpop.f32.mrb[0].mxu0
    %v3459 = vadd.f32 0.0, %v3458
    %v3460 = vpop.f32.mrb[0].mxu0
    %v3461 = vadd.f32 0.0, %v3460
    %v3462 = vpop.f32.mrb[0].mxu0
    %v3463 = vpop.f32.mrb[0].mxu0
    %3464 = vdwg.mxu0
    %s3465 = scalar_lea.vmem [#allocation4], 320
    %v3466 = vld [vmem:[%s3465] sm:$0xff]
    %v3467 = vld [vmem:[%s3465 + $0x8] sm:$0xff]
    %v3468 = vld [vmem:[%s3465 + $0x10] sm:$0xff]
    %v3469 = vld [vmem:[%s3465 + $0x18] sm:$0xff]
    %v3470 = vadd.f32 %v3466, %v3418
    %v3471 = vadd.f32 %v3467, %v3420
    %v3472 = vadd.f32 %v3468, %v3459
    %v3473 = vadd.f32 %v3469, %v3461
    %v3474 = vxor.u32 %v3470, 2147483648
    %v3475 = vmul.f32 %v3474, 1.442695
    %v3476 = vpow.pop %v3475
    %v3477 = vadd.f32 %v3476, 1.0
    %v3478 = vrcp.pop %v3477
    %v3479 = vmul.f32 1.0, %v3478
    %v3480 = vxor.u32 %v3471, 2147483648
    %v3481 = vmul.f32 %v3480, 1.442695
    %v3482 = vpow.pop %v3481
    %v3483 = vadd.f32 %v3482, 1.0
    %v3484 = vrcp.pop %v3483
    %v3485 = vmul.f32 1.0, %v3484
    %v3486 = vtanh.pop %v3472
    %v3487 = vxor.u32 %v3473, 2147483648
    %v3488 = vmul.f32 %v3487, 1.442695
    %v3489 = vpow.pop %v3488
    %v3490 = vadd.f32 %v3489, 1.0
    %v3491 = vrcp.pop %v3490
    %v3492 = vmul.f32 1.0, %v3491
    %v3493 = vmul.f32 %v3485, %v3189
    %v3494 = vmul.f32 %v3479, %v3486
    %v3495 = vadd.f32 %v3493, %v3494
    %v3496 = vtanh.pop %v3495
    %v3497 = vmul.f32 %v3492, %v3496
    %3498 = vst [vmem:[#allocation3] sm:$0xff] %v3495
    %3499 = vst [vmem:[#allocation2] sm:$0xff] %v3497
    %s3500 = scalar_lea.vmem [#allocation9], 80
    %3501 = vst [vmem:[%s3500] sm:$0xff] %v3497
    %v3502 = vld [vmem:[#allocation2] sm:$0xff]
    %v3503 = vld [vmem:[#allocation3] sm:$0xff]
    %v3504 = vpack.c.bf16 %v3502, %v3502
    %v3505 = vld [vmem:[#allocation7] sm:$0xff]
    %v3506 = vld [vmem:[#allocation7 + $0x8] sm:$0xff]
    %v3507 = vld [vmem:[#allocation7 + $0x10] sm:$0xff]
    %v3508 = vld [vmem:[#allocation7 + $0x18] sm:$0xff]
    %v3509 = vld [vmem:[#allocation7 + $0x20] sm:$0xff]
    %v3510 = vld [vmem:[#allocation7 + $0x28] sm:$0xff]
    %v3511 = vld [vmem:[#allocation7 + $0x30] sm:$0xff]
    %v3512 = vld [vmem:[#allocation7 + $0x38] sm:$0xff]
    %v3513 = vld [vmem:[#allocation7 + $0x40] sm:$0xff]
    %v3514 = vld [vmem:[#allocation7 + $0x48] sm:$0xff]
    %v3515 = vld [vmem:[#allocation7 + $0x50] sm:$0xff]
    %v3516 = vld [vmem:[#allocation7 + $0x58] sm:$0xff]
    %v3517 = vld [vmem:[#allocation7 + $0x60] sm:$0xff]
    %v3518 = vld [vmem:[#allocation7 + $0x68] sm:$0xff]
    %v3519 = vld [vmem:[#allocation7 + $0x70] sm:$0xff]
    %v3520 = vld [vmem:[#allocation7 + $0x78] sm:$0xff]
    %v3521 = vld [vmem:[#allocation7 + $0x80] sm:$0xff]
    %v3522 = vld [vmem:[#allocation7 + $0x88] sm:$0xff]
    %v3523 = vld [vmem:[#allocation7 + $0x90] sm:$0xff]
    %v3524 = vld [vmem:[#allocation7 + $0x98] sm:$0xff]
    %v3525 = vld [vmem:[#allocation7 + $0xa0] sm:$0xff]
    %v3526 = vld [vmem:[#allocation7 + $0xa8] sm:$0xff]
    %v3527 = vld [vmem:[#allocation7 + $0xb0] sm:$0xff]
    %v3528 = vld [vmem:[#allocation7 + $0xb8] sm:$0xff]
    %v3529 = vld [vmem:[#allocation7 + $0xc0] sm:$0xff]
    %v3530 = vld [vmem:[#allocation7 + $0xc8] sm:$0xff]
    %v3531 = vld [vmem:[#allocation7 + $0xd0] sm:$0xff]
    %v3532 = vld [vmem:[#allocation7 + $0xd8] sm:$0xff]
    %v3533 = vld [vmem:[#allocation7 + $0xe0] sm:$0xff]
    %v3534 = vld [vmem:[#allocation7 + $0xe8] sm:$0xff]
    %v3535 = vld [vmem:[#allocation7 + $0xf0] sm:$0xff]
    %v3536 = vld [vmem:[#allocation7 + $0xf8] sm:$0xff]
    %v3569 = vunpack.c.l.b16 %v3505
    %v3570 = vunpack.c.h.b16 %v3505
    %v3571 = vunpack.c.l.b16 %v3506
    %v3572 = vunpack.c.h.b16 %v3506
    %v3573 = vunpack.c.l.b16 %v3507
    %v3574 = vunpack.c.h.b16 %v3507
    %v3575 = vunpack.c.l.b16 %v3508
    %v3576 = vunpack.c.h.b16 %v3508
    %v3577 = vunpack.c.l.b16 %v3509
    %v3578 = vunpack.c.h.b16 %v3509
    %v3579 = vunpack.c.l.b16 %v3510
    %v3580 = vunpack.c.h.b16 %v3510
    %v3581 = vunpack.c.l.b16 %v3511
    %v3582 = vunpack.c.h.b16 %v3511
    %v3583 = vunpack.c.l.b16 %v3512
    %v3584 = vunpack.c.h.b16 %v3512
    %v3585 = vunpack.c.l.b16 %v3513
    %v3586 = vunpack.c.h.b16 %v3513
    %v3587 = vunpack.c.l.b16 %v3514
    %v3588 = vunpack.c.h.b16 %v3514
    %v3589 = vunpack.c.l.b16 %v3515
    %v3590 = vunpack.c.h.b16 %v3515
    %v3591 = vunpack.c.l.b16 %v3516
    %v3592 = vunpack.c.h.b16 %v3516
    %v3593 = vunpack.c.l.b16 %v3517
    %v3594 = vunpack.c.h.b16 %v3517
    %v3595 = vunpack.c.l.b16 %v3518
    %v3596 = vunpack.c.h.b16 %v3518
    %v3597 = vunpack.c.l.b16 %v3519
    %v3598 = vunpack.c.h.b16 %v3519
    %v3599 = vunpack.c.l.b16 %v3520
    %v3600 = vunpack.c.h.b16 %v3520
    %v3601 = vunpack.c.l.b16 %v3521
    %v3602 = vunpack.c.h.b16 %v3521
    %v3603 = vunpack.c.l.b16 %v3522
    %v3604 = vunpack.c.h.b16 %v3522
    %v3605 = vunpack.c.l.b16 %v3523
    %v3606 = vunpack.c.h.b16 %v3523
    %v3607 = vunpack.c.l.b16 %v3524
    %v3608 = vunpack.c.h.b16 %v3524
    %v3609 = vunpack.c.l.b16 %v3525
    %v3610 = vunpack.c.h.b16 %v3525
    %v3611 = vunpack.c.l.b16 %v3526
    %v3612 = vunpack.c.h.b16 %v3526
    %v3613 = vunpack.c.l.b16 %v3527
    %v3614 = vunpack.c.h.b16 %v3527
    %v3615 = vunpack.c.l.b16 %v3528
    %v3616 = vunpack.c.h.b16 %v3528
    %v3617 = vunpack.c.l.b16 %v3529
    %v3618 = vunpack.c.h.b16 %v3529
    %v3619 = vunpack.c.l.b16 %v3530
    %v3620 = vunpack.c.h.b16 %v3530
    %v3621 = vunpack.c.l.b16 %v3531
    %v3622 = vunpack.c.h.b16 %v3531
    %v3623 = vunpack.c.l.b16 %v3532
    %v3624 = vunpack.c.h.b16 %v3532
    %v3625 = vunpack.c.l.b16 %v3533
    %v3626 = vunpack.c.h.b16 %v3533
    %v3627 = vunpack.c.l.b16 %v3534
    %v3628 = vunpack.c.h.b16 %v3534
    %v3629 = vunpack.c.l.b16 %v3535
    %v3630 = vunpack.c.h.b16 %v3535
    %v3631 = vunpack.c.l.b16 %v3536
    %v3632 = vunpack.c.h.b16 %v3536
    %v3633 = vpack.c.b16 %v3573, %v3569
    %v3634 = vpack.c.b16 %v3574, %v3570
    %v3635 = vpack.c.b16 %v3575, %v3571
    %v3636 = vpack.c.b16 %v3576, %v3572
    %v3637 = vpack.c.b16 %v3581, %v3577
    %v3638 = vpack.c.b16 %v3582, %v3578
    %v3639 = vpack.c.b16 %v3583, %v3579
    %v3640 = vpack.c.b16 %v3584, %v3580
    %v3641 = vpack.c.b16 %v3589, %v3585
    %v3642 = vpack.c.b16 %v3590, %v3586
    %v3643 = vpack.c.b16 %v3591, %v3587
    %v3644 = vpack.c.b16 %v3592, %v3588
    %v3645 = vpack.c.b16 %v3597, %v3593
    %v3646 = vpack.c.b16 %v3598, %v3594
    %v3647 = vpack.c.b16 %v3599, %v3595
    %v3648 = vpack.c.b16 %v3600, %v3596
    %v3649 = vpack.c.b16 %v3605, %v3601
    %v3650 = vpack.c.b16 %v3606, %v3602
    %v3651 = vpack.c.b16 %v3607, %v3603
    %v3652 = vpack.c.b16 %v3608, %v3604
    %v3653 = vpack.c.b16 %v3613, %v3609
    %v3654 = vpack.c.b16 %v3614, %v3610
    %v3655 = vpack.c.b16 %v3615, %v3611
    %v3656 = vpack.c.b16 %v3616, %v3612
    %v3657 = vpack.c.b16 %v3621, %v3617
    %v3658 = vpack.c.b16 %v3622, %v3618
    %v3659 = vpack.c.b16 %v3623, %v3619
    %v3660 = vpack.c.b16 %v3624, %v3620
    %v3661 = vpack.c.b16 %v3629, %v3625
    %v3662 = vpack.c.b16 %v3630, %v3626
    %v3663 = vpack.c.b16 %v3631, %v3627
    %v3664 = vpack.c.b16 %v3632, %v3628
    %3697 = vmatprep.subr.bf16.mxu0 %v3634
    %3698 = vmatpush1.bf16.msra.mxu0 %v3633
    %3699 = vmatprep.subr.bf16.mxu0 %v3638
    %3700 = vmatpush1.bf16.msra.mxu0 %v3637
    %3701 = vmatprep.subr.bf16.mxu0 %v3642
    %3702 = vmatpush1.bf16.msra.mxu0 %v3641
    %3703 = vmatprep.subr.bf16.mxu0 %v3646
    %3704 = vmatpush1.bf16.msra.mxu0 %v3645
    %3705 = vmatprep.subr.bf16.mxu0 %v3650
    %3706 = vmatpush1.bf16.msra.mxu0 %v3649
    %3707 = vmatprep.subr.bf16.mxu0 %v3654
    %3708 = vmatpush1.bf16.msra.mxu0 %v3653
    %3709 = vmatprep.subr.bf16.mxu0 %v3658
    %3710 = vmatpush1.bf16.msra.mxu0 %v3657
    %3711 = vmatprep.subr.bf16.mxu0 %v3662
    %3712 = vmatpush1.bf16.msra.mxu0 %v3661
    %3713 = vmatprep.subr.bf16.mxu0 0
    %3714 = vmatpush1.bf16.msra.mxu0 0
    %3715 = vmatprep.subr.bf16.mxu0 0
    %3716 = vmatpush1.bf16.msra.mxu0 0
    %3717 = vmatprep.subr.bf16.mxu0 0
    %3718 = vmatpush1.bf16.msra.mxu0 0
    %3719 = vmatprep.subr.bf16.mxu0 0
    %3720 = vmatpush1.bf16.msra.mxu0 0
    %3721 = vmatprep.subr.bf16.mxu0 0
    %3722 = vmatpush1.bf16.msra.mxu0 0
    %3723 = vmatprep.subr.bf16.mxu0 0
    %3724 = vmatpush1.bf16.msra.mxu0 0
    %3725 = vmatprep.subr.bf16.mxu0 0
    %3726 = vmatpush1.bf16.msra.mxu0 0
    %3727 = vmatprep.subr.bf16.mxu0 0
    %3728 = vmatpush1.bf16.msra.mxu0 0
    %3729 = vmatprep.mubr.bf16.mxu0 0
    %3730 = vmatmul.mubr.bf16.gmra.mrb[0].mxu0 %v3504
    %v3731 = vpop.f32.mrb[0].mxu0
    %v3732 = vadd.f32 0.0, %v3731
    %v3733 = vpop.f32.mrb[0].mxu0
    %v3734 = vadd.f32 0.0, %v3733
    %v3735 = vpop.f32.mrb[0].mxu0
    %v3736 = vpop.f32.mrb[0].mxu0
    %3737 = vdwg.mxu0
    %3738 = vmatprep.subr.bf16.mxu0 %v3636
    %3739 = vmatpush1.bf16.msra.mxu0 %v3635
    %3740 = vmatprep.subr.bf16.mxu0 %v3640
    %3741 = vmatpush1.bf16.msra.mxu0 %v3639
    %3742 = vmatprep.subr.bf16.mxu0 %v3644
    %3743 = vmatpush1.bf16.msra.mxu0 %v3643
    %3744 = vmatprep.subr.bf16.mxu0 %v3648
    %3745 = vmatpush1.bf16.msra.mxu0 %v3647
    %3746 = vmatprep.subr.bf16.mxu0 %v3652
    %3747 = vmatpush1.bf16.msra.mxu0 %v3651
    %3748 = vmatprep.subr.bf16.mxu0 %v3656
    %3749 = vmatpush1.bf16.msra.mxu0 %v3655
    %3750 = vmatprep.subr.bf16.mxu0 %v3660
    %3751 = vmatpush1.bf16.msra.mxu0 %v3659
    %3752 = vmatprep.subr.bf16.mxu0 %v3664
    %3753 = vmatpush1.bf16.msra.mxu0 %v3663
    %3754 = vmatprep.subr.bf16.mxu0 0
    %3755 = vmatpush1.bf16.msra.mxu0 0
    %3756 = vmatprep.subr.bf16.mxu0 0
    %3757 = vmatpush1.bf16.msra.mxu0 0
    %3758 = vmatprep.subr.bf16.mxu0 0
    %3759 = vmatpush1.bf16.msra.mxu0 0
    %3760 = vmatprep.subr.bf16.mxu0 0
    %3761 = vmatpush1.bf16.msra.mxu0 0
    %3762 = vmatprep.subr.bf16.mxu0 0
    %3763 = vmatpush1.bf16.msra.mxu0 0
    %3764 = vmatprep.subr.bf16.mxu0 0
    %3765 = vmatpush1.bf16.msra.mxu0 0
    %3766 = vmatprep.subr.bf16.mxu0 0
    %3767 = vmatpush1.bf16.msra.mxu0 0
    %3768 = vmatprep.subr.bf16.mxu0 0
    %3769 = vmatpush1.bf16.msra.mxu0 0
    %3770 = vmatprep.mubr.bf16.mxu0 0
    %3771 = vmatmul.mubr.bf16.gmra.mrb[0].mxu0 %v3504
    %v3772 = vpop.f32.mrb[0].mxu0
    %v3773 = vadd.f32 0.0, %v3772
    %v3774 = vpop.f32.mrb[0].mxu0
    %v3775 = vadd.f32 0.0, %v3774
    %v3776 = vpop.f32.mrb[0].mxu0
    %v3777 = vpop.f32.mrb[0].mxu0
    %3778 = vdwg.mxu0
    %s3779 = scalar_lea.vmem [#allocation4], 352
    %v3780 = vld [vmem:[%s3779] sm:$0xff]
    %v3781 = vld [vmem:[%s3779 + $0x8] sm:$0xff]
    %v3782 = vld [vmem:[%s3779 + $0x10] sm:$0xff]
    %v3783 = vld [vmem:[%s3779 + $0x18] sm:$0xff]
    %v3784 = vadd.f32 %v3780, %v3732
    %v3785 = vadd.f32 %v3781, %v3734
    %v3786 = vadd.f32 %v3782, %v3773
    %v3787 = vadd.f32 %v3783, %v3775
    %v3788 = vxor.u32 %v3784, 2147483648
    %v3789 = vmul.f32 %v3788, 1.442695
    %v3790 = vpow.pop %v3789
    %v3791 = vadd.f32 %v3790, 1.0
    %v3792 = vrcp.pop %v3791
    %v3793 = vmul.f32 1.0, %v3792
    %v3794 = vxor.u32 %v3785, 2147483648
    %v3795 = vmul.f32 %v3794, 1.442695
    %v3796 = vpow.pop %v3795
    %v3797 = vadd.f32 %v3796, 1.0
    %v3798 = vrcp.pop %v3797
    %v3799 = vmul.f32 1.0, %v3798
    %v3800 = vtanh.pop %v3786
    %v3801 = vxor.u32 %v3787, 2147483648
    %v3802 = vmul.f32 %v3801, 1.442695
    %v3803 = vpow.pop %v3802
    %v3804 = vadd.f32 %v3803, 1.0
    %v3805 = vrcp.pop %v3804
    %v3806 = vmul.f32 1.0, %v3805
    %v3807 = vmul.f32 %v3799, %v3503
    %v3808 = vmul.f32 %v3793, %v3800
    %v3809 = vadd.f32 %v3807, %v3808
    %v3810 = vtanh.pop %v3809
    %v3811 = vmul.f32 %v3806, %v3810
    %3812 = vst [vmem:[#allocation3] sm:$0xff] %v3809
    %3813 = vst [vmem:[#allocation2] sm:$0xff] %v3811
    %s3814 = scalar_lea.vmem [#allocation9], 88
    %3815 = vst [vmem:[%s3814] sm:$0xff] %v3811
    %v3816 = vld [vmem:[#allocation2] sm:$0xff]
    %v3817 = vld [vmem:[#allocation3] sm:$0xff]
    %v3818 = vpack.c.bf16 %v3816, %v3816
    %v3819 = vld [vmem:[#allocation7] sm:$0xff]
    %v3820 = vld [vmem:[#allocation7 + $0x8] sm:$0xff]
    %v3821 = vld [vmem:[#allocation7 + $0x10] sm:$0xff]
    %v3822 = vld [vmem:[#allocation7 + $0x18] sm:$0xff]
    %v3823 = vld [vmem:[#allocation7 + $0x20] sm:$0xff]
    %v3824 = vld [vmem:[#allocation7 + $0x28] sm:$0xff]
    %v3825 = vld [vmem:[#allocation7 + $0x30] sm:$0xff]
    %v3826 = vld [vmem:[#allocation7 + $0x38] sm:$0xff]
    %v3827 = vld [vmem:[#allocation7 + $0x40] sm:$0xff]
    %v3828 = vld [vmem:[#allocation7 + $0x48] sm:$0xff]
    %v3829 = vld [vmem:[#allocation7 + $0x50] sm:$0xff]
    %v3830 = vld [vmem:[#allocation7 + $0x58] sm:$0xff]
    %v3831 = vld [vmem:[#allocation7 + $0x60] sm:$0xff]
    %v3832 = vld [vmem:[#allocation7 + $0x68] sm:$0xff]
    %v3833 = vld [vmem:[#allocation7 + $0x70] sm:$0xff]
    %v3834 = vld [vmem:[#allocation7 + $0x78] sm:$0xff]
    %v3835 = vld [vmem:[#allocation7 + $0x80] sm:$0xff]
    %v3836 = vld [vmem:[#allocation7 + $0x88] sm:$0xff]
    %v3837 = vld [vmem:[#allocation7 + $0x90] sm:$0xff]
    %v3838 = vld [vmem:[#allocation7 + $0x98] sm:$0xff]
    %v3839 = vld [vmem:[#allocation7 + $0xa0] sm:$0xff]
    %v3840 = vld [vmem:[#allocation7 + $0xa8] sm:$0xff]
    %v3841 = vld [vmem:[#allocation7 + $0xb0] sm:$0xff]
    %v3842 = vld [vmem:[#allocation7 + $0xb8] sm:$0xff]
    %v3843 = vld [vmem:[#allocation7 + $0xc0] sm:$0xff]
    %v3844 = vld [vmem:[#allocation7 + $0xc8] sm:$0xff]
    %v3845 = vld [vmem:[#allocation7 + $0xd0] sm:$0xff]
    %v3846 = vld [vmem:[#allocation7 + $0xd8] sm:$0xff]
    %v3847 = vld [vmem:[#allocation7 + $0xe0] sm:$0xff]
    %v3848 = vld [vmem:[#allocation7 + $0xe8] sm:$0xff]
    %v3849 = vld [vmem:[#allocation7 + $0xf0] sm:$0xff]
    %v3850 = vld [vmem:[#allocation7 + $0xf8] sm:$0xff]
    %v3883 = vunpack.c.l.b16 %v3819
    %v3884 = vunpack.c.h.b16 %v3819
    %v3885 = vunpack.c.l.b16 %v3820
    %v3886 = vunpack.c.h.b16 %v3820
    %v3887 = vunpack.c.l.b16 %v3821
    %v3888 = vunpack.c.h.b16 %v3821
    %v3889 = vunpack.c.l.b16 %v3822
    %v3890 = vunpack.c.h.b16 %v3822
    %v3891 = vunpack.c.l.b16 %v3823
    %v3892 = vunpack.c.h.b16 %v3823
    %v3893 = vunpack.c.l.b16 %v3824
    %v3894 = vunpack.c.h.b16 %v3824
    %v3895 = vunpack.c.l.b16 %v3825
    %v3896 = vunpack.c.h.b16 %v3825
    %v3897 = vunpack.c.l.b16 %v3826
    %v3898 = vunpack.c.h.b16 %v3826
    %v3899 = vunpack.c.l.b16 %v3827
    %v3900 = vunpack.c.h.b16 %v3827
    %v3901 = vunpack.c.l.b16 %v3828
    %v3902 = vunpack.c.h.b16 %v3828
    %v3903 = vunpack.c.l.b16 %v3829
    %v3904 = vunpack.c.h.b16 %v3829
    %v3905 = vunpack.c.l.b16 %v3830
    %v3906 = vunpack.c.h.b16 %v3830
    %v3907 = vunpack.c.l.b16 %v3831
    %v3908 = vunpack.c.h.b16 %v3831
    %v3909 = vunpack.c.l.b16 %v3832
    %v3910 = vunpack.c.h.b16 %v3832
    %v3911 = vunpack.c.l.b16 %v3833
    %v3912 = vunpack.c.h.b16 %v3833
    %v3913 = vunpack.c.l.b16 %v3834
    %v3914 = vunpack.c.h.b16 %v3834
    %v3915 = vunpack.c.l.b16 %v3835
    %v3916 = vunpack.c.h.b16 %v3835
    %v3917 = vunpack.c.l.b16 %v3836
    %v3918 = vunpack.c.h.b16 %v3836
    %v3919 = vunpack.c.l.b16 %v3837
    %v3920 = vunpack.c.h.b16 %v3837
    %v3921 = vunpack.c.l.b16 %v3838
    %v3922 = vunpack.c.h.b16 %v3838
    %v3923 = vunpack.c.l.b16 %v3839
    %v3924 = vunpack.c.h.b16 %v3839
    %v3925 = vunpack.c.l.b16 %v3840
    %v3926 = vunpack.c.h.b16 %v3840
    %v3927 = vunpack.c.l.b16 %v3841
    %v3928 = vunpack.c.h.b16 %v3841
    %v3929 = vunpack.c.l.b16 %v3842
    %v3930 = vunpack.c.h.b16 %v3842
    %v3931 = vunpack.c.l.b16 %v3843
    %v3932 = vunpack.c.h.b16 %v3843
    %v3933 = vunpack.c.l.b16 %v3844
    %v3934 = vunpack.c.h.b16 %v3844
    %v3935 = vunpack.c.l.b16 %v3845
    %v3936 = vunpack.c.h.b16 %v3845
    %v3937 = vunpack.c.l.b16 %v3846
    %v3938 = vunpack.c.h.b16 %v3846
    %v3939 = vunpack.c.l.b16 %v3847
    %v3940 = vunpack.c.h.b16 %v3847
    %v3941 = vunpack.c.l.b16 %v3848
    %v3942 = vunpack.c.h.b16 %v3848
    %v3943 = vunpack.c.l.b16 %v3849
    %v3944 = vunpack.c.h.b16 %v3849
    %v3945 = vunpack.c.l.b16 %v3850
    %v3946 = vunpack.c.h.b16 %v3850
    %v3947 = vpack.c.b16 %v3887, %v3883
    %v3948 = vpack.c.b16 %v3888, %v3884
    %v3949 = vpack.c.b16 %v3889, %v3885
    %v3950 = vpack.c.b16 %v3890, %v3886
    %v3951 = vpack.c.b16 %v3895, %v3891
    %v3952 = vpack.c.b16 %v3896, %v3892
    %v3953 = vpack.c.b16 %v3897, %v3893
    %v3954 = vpack.c.b16 %v3898, %v3894
    %v3955 = vpack.c.b16 %v3903, %v3899
    %v3956 = vpack.c.b16 %v3904, %v3900
    %v3957 = vpack.c.b16 %v3905, %v3901
    %v3958 = vpack.c.b16 %v3906, %v3902
    %v3959 = vpack.c.b16 %v3911, %v3907
    %v3960 = vpack.c.b16 %v3912, %v3908
    %v3961 = vpack.c.b16 %v3913, %v3909
    %v3962 = vpack.c.b16 %v3914, %v3910
    %v3963 = vpack.c.b16 %v3919, %v3915
    %v3964 = vpack.c.b16 %v3920, %v3916
    %v3965 = vpack.c.b16 %v3921, %v3917
    %v3966 = vpack.c.b16 %v3922, %v3918
    %v3967 = vpack.c.b16 %v3927, %v3923
    %v3968 = vpack.c.b16 %v3928, %v3924
    %v3969 = vpack.c.b16 %v3929, %v3925
    %v3970 = vpack.c.b16 %v3930, %v3926
    %v3971 = vpack.c.b16 %v3935, %v3931
    %v3972 = vpack.c.b16 %v3936, %v3932
    %v3973 = vpack.c.b16 %v3937, %v3933
    %v3974 = vpack.c.b16 %v3938, %v3934
    %v3975 = vpack.c.b16 %v3943, %v3939
    %v3976 = vpack.c.b16 %v3944, %v3940
    %v3977 = vpack.c.b16 %v3945, %v3941
    %v3978 = vpack.c.b16 %v3946, %v3942
    %4011 = vmatprep.subr.bf16.mxu0 %v3948
    %4012 = vmatpush1.bf16.msra.mxu0 %v3947
    %4013 = vmatprep.subr.bf16.mxu0 %v3952
    %4014 = vmatpush1.bf16.msra.mxu0 %v3951
    %4015 = vmatprep.subr.bf16.mxu0 %v3956
    %4016 = vmatpush1.bf16.msra.mxu0 %v3955
    %4017 = vmatprep.subr.bf16.mxu0 %v3960
    %4018 = vmatpush1.bf16.msra.mxu0 %v3959
    %4019 = vmatprep.subr.bf16.mxu0 %v3964
    %4020 = vmatpush1.bf16.msra.mxu0 %v3963
    %4021 = vmatprep.subr.bf16.mxu0 %v3968
    %4022 = vmatpush1.bf16.msra.mxu0 %v3967
    %4023 = vmatprep.subr.bf16.mxu0 %v3972
    %4024 = vmatpush1.bf16.msra.mxu0 %v3971
    %4025 = vmatprep.subr.bf16.mxu0 %v3976
    %4026 = vmatpush1.bf16.msra.mxu0 %v3975
    %4027 = vmatprep.subr.bf16.mxu0 0
    %4028 = vmatpush1.bf16.msra.mxu0 0
    %4029 = vmatprep.subr.bf16.mxu0 0
    %4030 = vmatpush1.bf16.msra.mxu0 0
    %4031 = vmatprep.subr.bf16.mxu0 0
    %4032 = vmatpush1.bf16.msra.mxu0 0
    %4033 = vmatprep.subr.bf16.mxu0 0
    %4034 = vmatpush1.bf16.msra.mxu0 0
    %4035 = vmatprep.subr.bf16.mxu0 0
    %4036 = vmatpush1.bf16.msra.mxu0 0
    %4037 = vmatprep.subr.bf16.mxu0 0
    %4038 = vmatpush1.bf16.msra.mxu0 0
    %4039 = vmatprep.subr.bf16.mxu0 0
    %4040 = vmatpush1.bf16.msra.mxu0 0
    %4041 = vmatprep.subr.bf16.mxu0 0
    %4042 = vmatpush1.bf16.msra.mxu0 0
    %4043 = vmatprep.mubr.bf16.mxu0 0
    %4044 = vmatmul.mubr.bf16.gmra.mrb[0].mxu0 %v3818
    %v4045 = vpop.f32.mrb[0].mxu0
    %v4046 = vadd.f32 0.0, %v4045
    %v4047 = vpop.f32.mrb[0].mxu0
    %v4048 = vadd.f32 0.0, %v4047
    %v4049 = vpop.f32.mrb[0].mxu0
    %v4050 = vpop.f32.mrb[0].mxu0
    %4051 = vdwg.mxu0
    %4052 = vmatprep.subr.bf16.mxu0 %v3950
    %4053 = vmatpush1.bf16.msra.mxu0 %v3949
    %4054 = vmatprep.subr.bf16.mxu0 %v3954
    %4055 = vmatpush1.bf16.msra.mxu0 %v3953
    %4056 = vmatprep.subr.bf16.mxu0 %v3958
    %4057 = vmatpush1.bf16.msra.mxu0 %v3957
    %4058 = vmatprep.subr.bf16.mxu0 %v3962
    %4059 = vmatpush1.bf16.msra.mxu0 %v3961
    %4060 = vmatprep.subr.bf16.mxu0 %v3966
    %4061 = vmatpush1.bf16.msra.mxu0 %v3965
    %4062 = vmatprep.subr.bf16.mxu0 %v3970
    %4063 = vmatpush1.bf16.msra.mxu0 %v3969
    %4064 = vmatprep.subr.bf16.mxu0 %v3974
    %4065 = vmatpush1.bf16.msra.mxu0 %v3973
    %4066 = vmatprep.subr.bf16.mxu0 %v3978
    %4067 = vmatpush1.bf16.msra.mxu0 %v3977
    %4068 = vmatprep.subr.bf16.mxu0 0
    %4069 = vmatpush1.bf16.msra.mxu0 0
    %4070 = vmatprep.subr.bf16.mxu0 0
    %4071 = vmatpush1.bf16.msra.mxu0 0
    %4072 = vmatprep.subr.bf16.mxu0 0
    %4073 = vmatpush1.bf16.msra.mxu0 0
    %4074 = vmatprep.subr.bf16.mxu0 0
    %4075 = vmatpush1.bf16.msra.mxu0 0
    %4076 = vmatprep.subr.bf16.mxu0 0
    %4077 = vmatpush1.bf16.msra.mxu0 0
    %4078 = vmatprep.subr.bf16.mxu0 0
    %4079 = vmatpush1.bf16.msra.mxu0 0
    %4080 = vmatprep.subr.bf16.mxu0 0
    %4081 = vmatpush1.bf16.msra.mxu0 0
    %4082 = vmatprep.subr.bf16.mxu0 0
    %4083 = vmatpush1.bf16.msra.mxu0 0
    %4084 = vmatprep.mubr.bf16.mxu0 0
    %4085 = vmatmul.mubr.bf16.gmra.mrb[0].mxu0 %v3818
    %v4086 = vpop.f32.mrb[0].mxu0
    %v4087 = vadd.f32 0.0, %v4086
    %v4088 = vpop.f32.mrb[0].mxu0
    %v4089 = vadd.f32 0.0, %v4088
    %v4090 = vpop.f32.mrb[0].mxu0
    %v4091 = vpop.f32.mrb[0].mxu0
    %4092 = vdwg.mxu0
    %s4093 = scalar_lea.vmem [#allocation4], 384
    %v4094 = vld [vmem:[%s4093] sm:$0xff]
    %v4095 = vld [vmem:[%s4093 + $0x8] sm:$0xff]
    %v4096 = vld [vmem:[%s4093 + $0x10] sm:$0xff]
    %v4097 = vld [vmem:[%s4093 + $0x18] sm:$0xff]
    %v4098 = vadd.f32 %v4094, %v4046
    %v4099 = vadd.f32 %v4095, %v4048
    %v4100 = vadd.f32 %v4096, %v4087
    %v4101 = vadd.f32 %v4097, %v4089
    %v4102 = vxor.u32 %v4098, 2147483648
    %v4103 = vmul.f32 %v4102, 1.442695
    %v4104 = vpow.pop %v4103
    %v4105 = vadd.f32 %v4104, 1.0
    %v4106 = vrcp.pop %v4105
    %v4107 = vmul.f32 1.0, %v4106
    %v4108 = vxor.u32 %v4099, 2147483648
    %v4109 = vmul.f32 %v4108, 1.442695
    %v4110 = vpow.pop %v4109
    %v4111 = vadd.f32 %v4110, 1.0
    %v4112 = vrcp.pop %v4111
    %v4113 = vmul.f32 1.0, %v4112
    %v4114 = vtanh.pop %v4100
    %v4115 = vxor.u32 %v4101, 2147483648
    %v4116 = vmul.f32 %v4115, 1.442695
    %v4117 = vpow.pop %v4116
    %v4118 = vadd.f32 %v4117, 1.0
    %v4119 = vrcp.pop %v4118
    %v4120 = vmul.f32 1.0, %v4119
    %v4121 = vmul.f32 %v4113, %v3817
    %v4122 = vmul.f32 %v4107, %v4114
    %v4123 = vadd.f32 %v4121, %v4122
    %v4124 = vtanh.pop %v4123
    %v4125 = vmul.f32 %v4120, %v4124
    %4126 = vst [vmem:[#allocation3] sm:$0xff] %v4123
    %4127 = vst [vmem:[#allocation2] sm:$0xff] %v4125
    %s4128 = scalar_lea.vmem [#allocation9], 96
    %4129 = vst [vmem:[%s4128] sm:$0xff] %v4125
    %v4130 = vld [vmem:[#allocation2] sm:$0xff]
    %v4131 = vld [vmem:[#allocation3] sm:$0xff]
    %v4132 = vpack.c.bf16 %v4130, %v4130
    %v4133 = vld [vmem:[#allocation7] sm:$0xff]
    %v4134 = vld [vmem:[#allocation7 + $0x8] sm:$0xff]
    %v4135 = vld [vmem:[#allocation7 + $0x10] sm:$0xff]
    %v4136 = vld [vmem:[#allocation7 + $0x18] sm:$0xff]
    %v4137 = vld [vmem:[#allocation7 + $0x20] sm:$0xff]
    %v4138 = vld [vmem:[#allocation7 + $0x28] sm:$0xff]
    %v4139 = vld [vmem:[#allocation7 + $0x30] sm:$0xff]
    %v4140 = vld [vmem:[#allocation7 + $0x38] sm:$0xff]
    %v4141 = vld [vmem:[#allocation7 + $0x40] sm:$0xff]
    %v4142 = vld [vmem:[#allocation7 + $0x48] sm:$0xff]
    %v4143 = vld [vmem:[#allocation7 + $0x50] sm:$0xff]
    %v4144 = vld [vmem:[#allocation7 + $0x58] sm:$0xff]
    %v4145 = vld [vmem:[#allocation7 + $0x60] sm:$0xff]
    %v4146 = vld [vmem:[#allocation7 + $0x68] sm:$0xff]
    %v4147 = vld [vmem:[#allocation7 + $0x70] sm:$0xff]
    %v4148 = vld [vmem:[#allocation7 + $0x78] sm:$0xff]
    %v4149 = vld [vmem:[#allocation7 + $0x80] sm:$0xff]
    %v4150 = vld [vmem:[#allocation7 + $0x88] sm:$0xff]
    %v4151 = vld [vmem:[#allocation7 + $0x90] sm:$0xff]
    %v4152 = vld [vmem:[#allocation7 + $0x98] sm:$0xff]
    %v4153 = vld [vmem:[#allocation7 + $0xa0] sm:$0xff]
    %v4154 = vld [vmem:[#allocation7 + $0xa8] sm:$0xff]
    %v4155 = vld [vmem:[#allocation7 + $0xb0] sm:$0xff]
    %v4156 = vld [vmem:[#allocation7 + $0xb8] sm:$0xff]
    %v4157 = vld [vmem:[#allocation7 + $0xc0] sm:$0xff]
    %v4158 = vld [vmem:[#allocation7 + $0xc8] sm:$0xff]
    %v4159 = vld [vmem:[#allocation7 + $0xd0] sm:$0xff]
    %v4160 = vld [vmem:[#allocation7 + $0xd8] sm:$0xff]
    %v4161 = vld [vmem:[#allocation7 + $0xe0] sm:$0xff]
    %v4162 = vld [vmem:[#allocation7 + $0xe8] sm:$0xff]
    %v4163 = vld [vmem:[#allocation7 + $0xf0] sm:$0xff]
    %v4164 = vld [vmem:[#allocation7 + $0xf8] sm:$0xff]
    %v4197 = vunpack.c.l.b16 %v4133
    %v4198 = vunpack.c.h.b16 %v4133
    %v4199 = vunpack.c.l.b16 %v4134
    %v4200 = vunpack.c.h.b16 %v4134
    %v4201 = vunpack.c.l.b16 %v4135
    %v4202 = vunpack.c.h.b16 %v4135
    %v4203 = vunpack.c.l.b16 %v4136
    %v4204 = vunpack.c.h.b16 %v4136
    %v4205 = vunpack.c.l.b16 %v4137
    %v4206 = vunpack.c.h.b16 %v4137
    %v4207 = vunpack.c.l.b16 %v4138
    %v4208 = vunpack.c.h.b16 %v4138
    %v4209 = vunpack.c.l.b16 %v4139
    %v4210 = vunpack.c.h.b16 %v4139
    %v4211 = vunpack.c.l.b16 %v4140
    %v4212 = vunpack.c.h.b16 %v4140
    %v4213 = vunpack.c.l.b16 %v4141
    %v4214 = vunpack.c.h.b16 %v4141
    %v4215 = vunpack.c.l.b16 %v4142
    %v4216 = vunpack.c.h.b16 %v4142
    %v4217 = vunpack.c.l.b16 %v4143
    %v4218 = vunpack.c.h.b16 %v4143
    %v4219 = vunpack.c.l.b16 %v4144
    %v4220 = vunpack.c.h.b16 %v4144
    %v4221 = vunpack.c.l.b16 %v4145
    %v4222 = vunpack.c.h.b16 %v4145
    %v4223 = vunpack.c.l.b16 %v4146
    %v4224 = vunpack.c.h.b16 %v4146
    %v4225 = vunpack.c.l.b16 %v4147
    %v4226 = vunpack.c.h.b16 %v4147
    %v4227 = vunpack.c.l.b16 %v4148
    %v4228 = vunpack.c.h.b16 %v4148
    %v4229 = vunpack.c.l.b16 %v4149
    %v4230 = vunpack.c.h.b16 %v4149
    %v4231 = vunpack.c.l.b16 %v4150
    %v4232 = vunpack.c.h.b16 %v4150
    %v4233 = vunpack.c.l.b16 %v4151
    %v4234 = vunpack.c.h.b16 %v4151
    %v4235 = vunpack.c.l.b16 %v4152
    %v4236 = vunpack.c.h.b16 %v4152
    %v4237 = vunpack.c.l.b16 %v4153
    %v4238 = vunpack.c.h.b16 %v4153
    %v4239 = vunpack.c.l.b16 %v4154
    %v4240 = vunpack.c.h.b16 %v4154
    %v4241 = vunpack.c.l.b16 %v4155
    %v4242 = vunpack.c.h.b16 %v4155
    %v4243 = vunpack.c.l.b16 %v4156
    %v4244 = vunpack.c.h.b16 %v4156
    %v4245 = vunpack.c.l.b16 %v4157
    %v4246 = vunpack.c.h.b16 %v4157
    %v4247 = vunpack.c.l.b16 %v4158
    %v4248 = vunpack.c.h.b16 %v4158
    %v4249 = vunpack.c.l.b16 %v4159
    %v4250 = vunpack.c.h.b16 %v4159
    %v4251 = vunpack.c.l.b16 %v4160
    %v4252 = vunpack.c.h.b16 %v4160
    %v4253 = vunpack.c.l.b16 %v4161
    %v4254 = vunpack.c.h.b16 %v4161
    %v4255 = vunpack.c.l.b16 %v4162
    %v4256 = vunpack.c.h.b16 %v4162
    %v4257 = vunpack.c.l.b16 %v4163
    %v4258 = vunpack.c.h.b16 %v4163
    %v4259 = vunpack.c.l.b16 %v4164
    %v4260 = vunpack.c.h.b16 %v4164
    %v4261 = vpack.c.b16 %v4201, %v4197
    %v4262 = vpack.c.b16 %v4202, %v4198
    %v4263 = vpack.c.b16 %v4203, %v4199
    %v4264 = vpack.c.b16 %v4204, %v4200
    %v4265 = vpack.c.b16 %v4209, %v4205
    %v4266 = vpack.c.b16 %v4210, %v4206
    %v4267 = vpack.c.b16 %v4211, %v4207
    %v4268 = vpack.c.b16 %v4212, %v4208
    %v4269 = vpack.c.b16 %v4217, %v4213
    %v4270 = vpack.c.b16 %v4218, %v4214
    %v4271 = vpack.c.b16 %v4219, %v4215
    %v4272 = vpack.c.b16 %v4220, %v4216
    %v4273 = vpack.c.b16 %v4225, %v4221
    %v4274 = vpack.c.b16 %v4226, %v4222
    %v4275 = vpack.c.b16 %v4227, %v4223
    %v4276 = vpack.c.b16 %v4228, %v4224
    %v4277 = vpack.c.b16 %v4233, %v4229
    %v4278 = vpack.c.b16 %v4234, %v4230
    %v4279 = vpack.c.b16 %v4235, %v4231
    %v4280 = vpack.c.b16 %v4236, %v4232
    %v4281 = vpack.c.b16 %v4241, %v4237
    %v4282 = vpack.c.b16 %v4242, %v4238
    %v4283 = vpack.c.b16 %v4243, %v4239
    %v4284 = vpack.c.b16 %v4244, %v4240
    %v4285 = vpack.c.b16 %v4249, %v4245
    %v4286 = vpack.c.b16 %v4250, %v4246
    %v4287 = vpack.c.b16 %v4251, %v4247
    %v4288 = vpack.c.b16 %v4252, %v4248
    %v4289 = vpack.c.b16 %v4257, %v4253
    %v4290 = vpack.c.b16 %v4258, %v4254
    %v4291 = vpack.c.b16 %v4259, %v4255
    %v4292 = vpack.c.b16 %v4260, %v4256
    %4325 = vmatprep.subr.bf16.mxu0 %v4262
    %4326 = vmatpush1.bf16.msra.mxu0 %v4261
    %4327 = vmatprep.subr.bf16.mxu0 %v4266
    %4328 = vmatpush1.bf16.msra.mxu0 %v4265
    %4329 = vmatprep.subr.bf16.mxu0 %v4270
    %4330 = vmatpush1.bf16.msra.mxu0 %v4269
    %4331 = vmatprep.subr.bf16.mxu0 %v4274
    %4332 = vmatpush1.bf16.msra.mxu0 %v4273
    %4333 = vmatprep.subr.bf16.mxu0 %v4278
    %4334 = vmatpush1.bf16.msra.mxu0 %v4277
    %4335 = vmatprep.subr.bf16.mxu0 %v4282
    %4336 = vmatpush1.bf16.msra.mxu0 %v4281
    %4337 = vmatprep.subr.bf16.mxu0 %v4286
    %4338 = vmatpush1.bf16.msra.mxu0 %v4285
    %4339 = vmatprep.subr.bf16.mxu0 %v4290
    %4340 = vmatpush1.bf16.msra.mxu0 %v4289
    %4341 = vmatprep.subr.bf16.mxu0 0
    %4342 = vmatpush1.bf16.msra.mxu0 0
    %4343 = vmatprep.subr.bf16.mxu0 0
    %4344 = vmatpush1.bf16.msra.mxu0 0
    %4345 = vmatprep.subr.bf16.mxu0 0
    %4346 = vmatpush1.bf16.msra.mxu0 0
    %4347 = vmatprep.subr.bf16.mxu0 0
    %4348 = vmatpush1.bf16.msra.mxu0 0
    %4349 = vmatprep.subr.bf16.mxu0 0
    %4350 = vmatpush1.bf16.msra.mxu0 0
    %4351 = vmatprep.subr.bf16.mxu0 0
    %4352 = vmatpush1.bf16.msra.mxu0 0
    %4353 = vmatprep.subr.bf16.mxu0 0
    %4354 = vmatpush1.bf16.msra.mxu0 0
    %4355 = vmatprep.subr.bf16.mxu0 0
    %4356 = vmatpush1.bf16.msra.mxu0 0
    %4357 = vmatprep.mubr.bf16.mxu0 0
    %4358 = vmatmul.mubr.bf16.gmra.mrb[0].mxu0 %v4132
    %v4359 = vpop.f32.mrb[0].mxu0
    %v4360 = vadd.f32 0.0, %v4359
    %v4361 = vpop.f32.mrb[0].mxu0
    %v4362 = vadd.f32 0.0, %v4361
    %v4363 = vpop.f32.mrb[0].mxu0
    %v4364 = vpop.f32.mrb[0].mxu0
    %4365 = vdwg.mxu0
    %4366 = vmatprep.subr.bf16.mxu0 %v4264
    %4367 = vmatpush1.bf16.msra.mxu0 %v4263
    %4368 = vmatprep.subr.bf16.mxu0 %v4268
    %4369 = vmatpush1.bf16.msra.mxu0 %v4267
    %4370 = vmatprep.subr.bf16.mxu0 %v4272
    %4371 = vmatpush1.bf16.msra.mxu0 %v4271
    %4372 = vmatprep.subr.bf16.mxu0 %v4276
    %4373 = vmatpush1.bf16.msra.mxu0 %v4275
    %4374 = vmatprep.subr.bf16.mxu0 %v4280
    %4375 = vmatpush1.bf16.msra.mxu0 %v4279
    %4376 = vmatprep.subr.bf16.mxu0 %v4284
    %4377 = vmatpush1.bf16.msra.mxu0 %v4283
    %4378 = vmatprep.subr.bf16.mxu0 %v4288
    %4379 = vmatpush1.bf16.msra.mxu0 %v4287
    %4380 = vmatprep.subr.bf16.mxu0 %v4292
    %4381 = vmatpush1.bf16.msra.mxu0 %v4291
    %4382 = vmatprep.subr.bf16.mxu0 0
    %4383 = vmatpush1.bf16.msra.mxu0 0
    %4384 = vmatprep.subr.bf16.mxu0 0
    %4385 = vmatpush1.bf16.msra.mxu0 0
    %4386 = vmatprep.subr.bf16.mxu0 0
    %4387 = vmatpush1.bf16.msra.mxu0 0
    %4388 = vmatprep.subr.bf16.mxu0 0
    %4389 = vmatpush1.bf16.msra.mxu0 0
    %4390 = vmatprep.subr.bf16.mxu0 0
    %4391 = vmatpush1.bf16.msra.mxu0 0
    %4392 = vmatprep.subr.bf16.mxu0 0
    %4393 = vmatpush1.bf16.msra.mxu0 0
    %4394 = vmatprep.subr.bf16.mxu0 0
    %4395 = vmatpush1.bf16.msra.mxu0 0
    %4396 = vmatprep.subr.bf16.mxu0 0
    %4397 = vmatpush1.bf16.msra.mxu0 0
    %4398 = vmatprep.mubr.bf16.mxu0 0
    %4399 = vmatmul.mubr.bf16.gmra.mrb[0].mxu0 %v4132
    %v4400 = vpop.f32.mrb[0].mxu0
    %v4401 = vadd.f32 0.0, %v4400
    %v4402 = vpop.f32.mrb[0].mxu0
    %v4403 = vadd.f32 0.0, %v4402
    %v4404 = vpop.f32.mrb[0].mxu0
    %v4405 = vpop.f32.mrb[0].mxu0
    %4406 = vdwg.mxu0
    %s4407 = scalar_lea.vmem [#allocation4], 416
    %v4408 = vld [vmem:[%s4407] sm:$0xff]
    %v4409 = vld [vmem:[%s4407 + $0x8] sm:$0xff]
    %v4410 = vld [vmem:[%s4407 + $0x10] sm:$0xff]
    %v4411 = vld [vmem:[%s4407 + $0x18] sm:$0xff]
    %v4412 = vadd.f32 %v4408, %v4360
    %v4413 = vadd.f32 %v4409, %v4362
    %v4414 = vadd.f32 %v4410, %v4401
    %v4415 = vadd.f32 %v4411, %v4403
    %v4416 = vxor.u32 %v4412, 2147483648
    %v4417 = vmul.f32 %v4416, 1.442695
    %v4418 = vpow.pop %v4417
    %v4419 = vadd.f32 %v4418, 1.0
    %v4420 = vrcp.pop %v4419
    %v4421 = vmul.f32 1.0, %v4420
    %v4422 = vxor.u32 %v4413, 2147483648
    %v4423 = vmul.f32 %v4422, 1.442695
    %v4424 = vpow.pop %v4423
    %v4425 = vadd.f32 %v4424, 1.0
    %v4426 = vrcp.pop %v4425
    %v4427 = vmul.f32 1.0, %v4426
    %v4428 = vtanh.pop %v4414
    %v4429 = vxor.u32 %v4415, 2147483648
    %v4430 = vmul.f32 %v4429, 1.442695
    %v4431 = vpow.pop %v4430
    %v4432 = vadd.f32 %v4431, 1.0
    %v4433 = vrcp.pop %v4432
    %v4434 = vmul.f32 1.0, %v4433
    %v4435 = vmul.f32 %v4427, %v4131
    %v4436 = vmul.f32 %v4421, %v4428
    %v4437 = vadd.f32 %v4435, %v4436
    %v4438 = vtanh.pop %v4437
    %v4439 = vmul.f32 %v4434, %v4438
    %4440 = vst [vmem:[#allocation3] sm:$0xff] %v4437
    %4441 = vst [vmem:[#allocation2] sm:$0xff] %v4439
    %s4442 = scalar_lea.vmem [#allocation9], 104
    %4443 = vst [vmem:[%s4442] sm:$0xff] %v4439
    %v4444 = vld [vmem:[#allocation2] sm:$0xff]
    %v4445 = vld [vmem:[#allocation3] sm:$0xff]
    %v4446 = vpack.c.bf16 %v4444, %v4444
    %v4447 = vld [vmem:[#allocation7] sm:$0xff]
    %v4448 = vld [vmem:[#allocation7 + $0x8] sm:$0xff]
    %v4449 = vld [vmem:[#allocation7 + $0x10] sm:$0xff]
    %v4450 = vld [vmem:[#allocation7 + $0x18] sm:$0xff]
    %v4451 = vld [vmem:[#allocation7 + $0x20] sm:$0xff]
    %v4452 = vld [vmem:[#allocation7 + $0x28] sm:$0xff]
    %v4453 = vld [vmem:[#allocation7 + $0x30] sm:$0xff]
    %v4454 = vld [vmem:[#allocation7 + $0x38] sm:$0xff]
    %v4455 = vld [vmem:[#allocation7 + $0x40] sm:$0xff]
    %v4456 = vld [vmem:[#allocation7 + $0x48] sm:$0xff]
    %v4457 = vld [vmem:[#allocation7 + $0x50] sm:$0xff]
    %v4458 = vld [vmem:[#allocation7 + $0x58] sm:$0xff]
    %v4459 = vld [vmem:[#allocation7 + $0x60] sm:$0xff]
    %v4460 = vld [vmem:[#allocation7 + $0x68] sm:$0xff]
    %v4461 = vld [vmem:[#allocation7 + $0x70] sm:$0xff]
    %v4462 = vld [vmem:[#allocation7 + $0x78] sm:$0xff]
    %v4463 = vld [vmem:[#allocation7 + $0x80] sm:$0xff]
    %v4464 = vld [vmem:[#allocation7 + $0x88] sm:$0xff]
    %v4465 = vld [vmem:[#allocation7 + $0x90] sm:$0xff]
    %v4466 = vld [vmem:[#allocation7 + $0x98] sm:$0xff]
    %v4467 = vld [vmem:[#allocation7 + $0xa0] sm:$0xff]
    %v4468 = vld [vmem:[#allocation7 + $0xa8] sm:$0xff]
    %v4469 = vld [vmem:[#allocation7 + $0xb0] sm:$0xff]
    %v4470 = vld [vmem:[#allocation7 + $0xb8] sm:$0xff]
    %v4471 = vld [vmem:[#allocation7 + $0xc0] sm:$0xff]
    %v4472 = vld [vmem:[#allocation7 + $0xc8] sm:$0xff]
    %v4473 = vld [vmem:[#allocation7 + $0xd0] sm:$0xff]
    %v4474 = vld [vmem:[#allocation7 + $0xd8] sm:$0xff]
    %v4475 = vld [vmem:[#allocation7 + $0xe0] sm:$0xff]
    %v4476 = vld [vmem:[#allocation7 + $0xe8] sm:$0xff]
    %v4477 = vld [vmem:[#allocation7 + $0xf0] sm:$0xff]
    %v4478 = vld [vmem:[#allocation7 + $0xf8] sm:$0xff]
    %v4511 = vunpack.c.l.b16 %v4447
    %v4512 = vunpack.c.h.b16 %v4447
    %v4513 = vunpack.c.l.b16 %v4448
    %v4514 = vunpack.c.h.b16 %v4448
    %v4515 = vunpack.c.l.b16 %v4449
    %v4516 = vunpack.c.h.b16 %v4449
    %v4517 = vunpack.c.l.b16 %v4450
    %v4518 = vunpack.c.h.b16 %v4450
    %v4519 = vunpack.c.l.b16 %v4451
    %v4520 = vunpack.c.h.b16 %v4451
    %v4521 = vunpack.c.l.b16 %v4452
    %v4522 = vunpack.c.h.b16 %v4452
    %v4523 = vunpack.c.l.b16 %v4453
    %v4524 = vunpack.c.h.b16 %v4453
    %v4525 = vunpack.c.l.b16 %v4454
    %v4526 = vunpack.c.h.b16 %v4454
    %v4527 = vunpack.c.l.b16 %v4455
    %v4528 = vunpack.c.h.b16 %v4455
    %v4529 = vunpack.c.l.b16 %v4456
    %v4530 = vunpack.c.h.b16 %v4456
    %v4531 = vunpack.c.l.b16 %v4457
    %v4532 = vunpack.c.h.b16 %v4457
    %v4533 = vunpack.c.l.b16 %v4458
    %v4534 = vunpack.c.h.b16 %v4458
    %v4535 = vunpack.c.l.b16 %v4459
    %v4536 = vunpack.c.h.b16 %v4459
    %v4537 = vunpack.c.l.b16 %v4460
    %v4538 = vunpack.c.h.b16 %v4460
    %v4539 = vunpack.c.l.b16 %v4461
    %v4540 = vunpack.c.h.b16 %v4461
    %v4541 = vunpack.c.l.b16 %v4462
    %v4542 = vunpack.c.h.b16 %v4462
    %v4543 = vunpack.c.l.b16 %v4463
    %v4544 = vunpack.c.h.b16 %v4463
    %v4545 = vunpack.c.l.b16 %v4464
    %v4546 = vunpack.c.h.b16 %v4464
    %v4547 = vunpack.c.l.b16 %v4465
    %v4548 = vunpack.c.h.b16 %v4465
    %v4549 = vunpack.c.l.b16 %v4466
    %v4550 = vunpack.c.h.b16 %v4466
    %v4551 = vunpack.c.l.b16 %v4467
    %v4552 = vunpack.c.h.b16 %v4467
    %v4553 = vunpack.c.l.b16 %v4468
    %v4554 = vunpack.c.h.b16 %v4468
    %v4555 = vunpack.c.l.b16 %v4469
    %v4556 = vunpack.c.h.b16 %v4469
    %v4557 = vunpack.c.l.b16 %v4470
    %v4558 = vunpack.c.h.b16 %v4470
    %v4559 = vunpack.c.l.b16 %v4471
    %v4560 = vunpack.c.h.b16 %v4471
    %v4561 = vunpack.c.l.b16 %v4472
    %v4562 = vunpack.c.h.b16 %v4472
    %v4563 = vunpack.c.l.b16 %v4473
    %v4564 = vunpack.c.h.b16 %v4473
    %v4565 = vunpack.c.l.b16 %v4474
    %v4566 = vunpack.c.h.b16 %v4474
    %v4567 = vunpack.c.l.b16 %v4475
    %v4568 = vunpack.c.h.b16 %v4475
    %v4569 = vunpack.c.l.b16 %v4476
    %v4570 = vunpack.c.h.b16 %v4476
    %v4571 = vunpack.c.l.b16 %v4477
    %v4572 = vunpack.c.h.b16 %v4477
    %v4573 = vunpack.c.l.b16 %v4478
    %v4574 = vunpack.c.h.b16 %v4478
    %v4575 = vpack.c.b16 %v4515, %v4511
    %v4576 = vpack.c.b16 %v4516, %v4512
    %v4577 = vpack.c.b16 %v4517, %v4513
    %v4578 = vpack.c.b16 %v4518, %v4514
    %v4579 = vpack.c.b16 %v4523, %v4519
    %v4580 = vpack.c.b16 %v4524, %v4520
    %v4581 = vpack.c.b16 %v4525, %v4521
    %v4582 = vpack.c.b16 %v4526, %v4522
    %v4583 = vpack.c.b16 %v4531, %v4527
    %v4584 = vpack.c.b16 %v4532, %v4528
    %v4585 = vpack.c.b16 %v4533, %v4529
    %v4586 = vpack.c.b16 %v4534, %v4530
    %v4587 = vpack.c.b16 %v4539, %v4535
    %v4588 = vpack.c.b16 %v4540, %v4536
    %v4589 = vpack.c.b16 %v4541, %v4537
    %v4590 = vpack.c.b16 %v4542, %v4538
    %v4591 = vpack.c.b16 %v4547, %v4543
    %v4592 = vpack.c.b16 %v4548, %v4544
    %v4593 = vpack.c.b16 %v4549, %v4545
    %v4594 = vpack.c.b16 %v4550, %v4546
    %v4595 = vpack.c.b16 %v4555, %v4551
    %v4596 = vpack.c.b16 %v4556, %v4552
    %v4597 = vpack.c.b16 %v4557, %v4553
    %v4598 = vpack.c.b16 %v4558, %v4554
    %v4599 = vpack.c.b16 %v4563, %v4559
    %v4600 = vpack.c.b16 %v4564, %v4560
    %v4601 = vpack.c.b16 %v4565, %v4561
    %v4602 = vpack.c.b16 %v4566, %v4562
    %v4603 = vpack.c.b16 %v4571, %v4567
    %v4604 = vpack.c.b16 %v4572, %v4568
    %v4605 = vpack.c.b16 %v4573, %v4569
    %v4606 = vpack.c.b16 %v4574, %v4570
    %4639 = vmatprep.subr.bf16.mxu0 %v4576
    %4640 = vmatpush1.bf16.msra.mxu0 %v4575
    %4641 = vmatprep.subr.bf16.mxu0 %v4580
    %4642 = vmatpush1.bf16.msra.mxu0 %v4579
    %4643 = vmatprep.subr.bf16.mxu0 %v4584
    %4644 = vmatpush1.bf16.msra.mxu0 %v4583
    %4645 = vmatprep.subr.bf16.mxu0 %v4588
    %4646 = vmatpush1.bf16.msra.mxu0 %v4587
    %4647 = vmatprep.subr.bf16.mxu0 %v4592
    %4648 = vmatpush1.bf16.msra.mxu0 %v4591
    %4649 = vmatprep.subr.bf16.mxu0 %v4596
    %4650 = vmatpush1.bf16.msra.mxu0 %v4595
    %4651 = vmatprep.subr.bf16.mxu0 %v4600
    %4652 = vmatpush1.bf16.msra.mxu0 %v4599
    %4653 = vmatprep.subr.bf16.mxu0 %v4604
    %4654 = vmatpush1.bf16.msra.mxu0 %v4603
    %4655 = vmatprep.subr.bf16.mxu0 0
    %4656 = vmatpush1.bf16.msra.mxu0 0
    %4657 = vmatprep.subr.bf16.mxu0 0
    %4658 = vmatpush1.bf16.msra.mxu0 0
    %4659 = vmatprep.subr.bf16.mxu0 0
    %4660 = vmatpush1.bf16.msra.mxu0 0
    %4661 = vmatprep.subr.bf16.mxu0 0
    %4662 = vmatpush1.bf16.msra.mxu0 0
    %4663 = vmatprep.subr.bf16.mxu0 0
    %4664 = vmatpush1.bf16.msra.mxu0 0
    %4665 = vmatprep.subr.bf16.mxu0 0
    %4666 = vmatpush1.bf16.msra.mxu0 0
    %4667 = vmatprep.subr.bf16.mxu0 0
    %4668 = vmatpush1.bf16.msra.mxu0 0
    %4669 = vmatprep.subr.bf16.mxu0 0
    %4670 = vmatpush1.bf16.msra.mxu0 0
    %4671 = vmatprep.mubr.bf16.mxu0 0
    %4672 = vmatmul.mubr.bf16.gmra.mrb[0].mxu0 %v4446
    %v4673 = vpop.f32.mrb[0].mxu0
    %v4674 = vadd.f32 0.0, %v4673
    %v4675 = vpop.f32.mrb[0].mxu0
    %v4676 = vadd.f32 0.0, %v4675
    %v4677 = vpop.f32.mrb[0].mxu0
    %v4678 = vpop.f32.mrb[0].mxu0
    %4679 = vdwg.mxu0
    %4680 = vmatprep.subr.bf16.mxu0 %v4578
    %4681 = vmatpush1.bf16.msra.mxu0 %v4577
    %4682 = vmatprep.subr.bf16.mxu0 %v4582
    %4683 = vmatpush1.bf16.msra.mxu0 %v4581
    %4684 = vmatprep.subr.bf16.mxu0 %v4586
    %4685 = vmatpush1.bf16.msra.mxu0 %v4585
    %4686 = vmatprep.subr.bf16.mxu0 %v4590
    %4687 = vmatpush1.bf16.msra.mxu0 %v4589
    %4688 = vmatprep.subr.bf16.mxu0 %v4594
    %4689 = vmatpush1.bf16.msra.mxu0 %v4593
    %4690 = vmatprep.subr.bf16.mxu0 %v4598
    %4691 = vmatpush1.bf16.msra.mxu0 %v4597
    %4692 = vmatprep.subr.bf16.mxu0 %v4602
    %4693 = vmatpush1.bf16.msra.mxu0 %v4601
    %4694 = vmatprep.subr.bf16.mxu0 %v4606
    %4695 = vmatpush1.bf16.msra.mxu0 %v4605
    %4696 = vmatprep.subr.bf16.mxu0 0
    %4697 = vmatpush1.bf16.msra.mxu0 0
    %4698 = vmatprep.subr.bf16.mxu0 0
    %4699 = vmatpush1.bf16.msra.mxu0 0
    %4700 = vmatprep.subr.bf16.mxu0 0
    %4701 = vmatpush1.bf16.msra.mxu0 0
    %4702 = vmatprep.subr.bf16.mxu0 0
    %4703 = vmatpush1.bf16.msra.mxu0 0
    %4704 = vmatprep.subr.bf16.mxu0 0
    %4705 = vmatpush1.bf16.msra.mxu0 0
    %4706 = vmatprep.subr.bf16.mxu0 0
    %4707 = vmatpush1.bf16.msra.mxu0 0
    %4708 = vmatprep.subr.bf16.mxu0 0
    %4709 = vmatpush1.bf16.msra.mxu0 0
    %4710 = vmatprep.subr.bf16.mxu0 0
    %4711 = vmatpush1.bf16.msra.mxu0 0
    %4712 = vmatprep.mubr.bf16.mxu0 0
    %4713 = vmatmul.mubr.bf16.gmra.mrb[0].mxu0 %v4446
    %v4714 = vpop.f32.mrb[0].mxu0
    %v4715 = vadd.f32 0.0, %v4714
    %v4716 = vpop.f32.mrb[0].mxu0
    %v4717 = vadd.f32 0.0, %v4716
    %v4718 = vpop.f32.mrb[0].mxu0
    %v4719 = vpop.f32.mrb[0].mxu0
    %4720 = vdwg.mxu0
    %s4721 = scalar_lea.vmem [#allocation4], 448
    %v4722 = vld [vmem:[%s4721] sm:$0xff]
    %v4723 = vld [vmem:[%s4721 + $0x8] sm:$0xff]
    %v4724 = vld [vmem:[%s4721 + $0x10] sm:$0xff]
    %v4725 = vld [vmem:[%s4721 + $0x18] sm:$0xff]
    %v4726 = vadd.f32 %v4722, %v4674
    %v4727 = vadd.f32 %v4723, %v4676
    %v4728 = vadd.f32 %v4724, %v4715
    %v4729 = vadd.f32 %v4725, %v4717
    %v4730 = vxor.u32 %v4726, 2147483648
    %v4731 = vmul.f32 %v4730, 1.442695
    %v4732 = vpow.pop %v4731
    %v4733 = vadd.f32 %v4732, 1.0
    %v4734 = vrcp.pop %v4733
    %v4735 = vmul.f32 1.0, %v4734
    %v4736 = vxor.u32 %v4727, 2147483648
    %v4737 = vmul.f32 %v4736, 1.442695
    %v4738 = vpow.pop %v4737
    %v4739 = vadd.f32 %v4738, 1.0
    %v4740 = vrcp.pop %v4739
    %v4741 = vmul.f32 1.0, %v4740
    %v4742 = vtanh.pop %v4728
    %v4743 = vxor.u32 %v4729, 2147483648
    %v4744 = vmul.f32 %v4743, 1.442695
    %v4745 = vpow.pop %v4744
    %v4746 = vadd.f32 %v4745, 1.0
    %v4747 = vrcp.pop %v4746
    %v4748 = vmul.f32 1.0, %v4747
    %v4749 = vmul.f32 %v4741, %v4445
    %v4750 = vmul.f32 %v4735, %v4742
    %v4751 = vadd.f32 %v4749, %v4750
    %v4752 = vtanh.pop %v4751
    %v4753 = vmul.f32 %v4748, %v4752
    %4754 = vst [vmem:[#allocation3] sm:$0xff] %v4751
    %4755 = vst [vmem:[#allocation2] sm:$0xff] %v4753
    %s4756 = scalar_lea.vmem [#allocation9], 112
    %4757 = vst [vmem:[%s4756] sm:$0xff] %v4753
    %v4758 = vld [vmem:[#allocation2] sm:$0xff]
    %v4759 = vld [vmem:[#allocation3] sm:$0xff]
    %v4760 = vpack.c.bf16 %v4758, %v4758
    %v4761 = vld [vmem:[#allocation7] sm:$0xff]
    %v4762 = vld [vmem:[#allocation7 + $0x8] sm:$0xff]
    %v4763 = vld [vmem:[#allocation7 + $0x10] sm:$0xff]
    %v4764 = vld [vmem:[#allocation7 + $0x18] sm:$0xff]
    %v4765 = vld [vmem:[#allocation7 + $0x20] sm:$0xff]
    %v4766 = vld [vmem:[#allocation7 + $0x28] sm:$0xff]
    %v4767 = vld [vmem:[#allocation7 + $0x30] sm:$0xff]
    %v4768 = vld [vmem:[#allocation7 + $0x38] sm:$0xff]
    %v4769 = vld [vmem:[#allocation7 + $0x40] sm:$0xff]
    %v4770 = vld [vmem:[#allocation7 + $0x48] sm:$0xff]
    %v4771 = vld [vmem:[#allocation7 + $0x50] sm:$0xff]
    %v4772 = vld [vmem:[#allocation7 + $0x58] sm:$0xff]
    %v4773 = vld [vmem:[#allocation7 + $0x60] sm:$0xff]
    %v4774 = vld [vmem:[#allocation7 + $0x68] sm:$0xff]
    %v4775 = vld [vmem:[#allocation7 + $0x70] sm:$0xff]
    %v4776 = vld [vmem:[#allocation7 + $0x78] sm:$0xff]
    %v4777 = vld [vmem:[#allocation7 + $0x80] sm:$0xff]
    %v4778 = vld [vmem:[#allocation7 + $0x88] sm:$0xff]
    %v4779 = vld [vmem:[#allocation7 + $0x90] sm:$0xff]
    %v4780 = vld [vmem:[#allocation7 + $0x98] sm:$0xff]
    %v4781 = vld [vmem:[#allocation7 + $0xa0] sm:$0xff]
    %v4782 = vld [vmem:[#allocation7 + $0xa8] sm:$0xff]
    %v4783 = vld [vmem:[#allocation7 + $0xb0] sm:$0xff]
    %v4784 = vld [vmem:[#allocation7 + $0xb8] sm:$0xff]
    %v4785 = vld [vmem:[#allocation7 + $0xc0] sm:$0xff]
    %v4786 = vld [vmem:[#allocation7 + $0xc8] sm:$0xff]
    %v4787 = vld [vmem:[#allocation7 + $0xd0] sm:$0xff]
    %v4788 = vld [vmem:[#allocation7 + $0xd8] sm:$0xff]
    %v4789 = vld [vmem:[#allocation7 + $0xe0] sm:$0xff]
    %v4790 = vld [vmem:[#allocation7 + $0xe8] sm:$0xff]
    %v4791 = vld [vmem:[#allocation7 + $0xf0] sm:$0xff]
    %v4792 = vld [vmem:[#allocation7 + $0xf8] sm:$0xff]
    %v4825 = vunpack.c.l.b16 %v4761
    %v4826 = vunpack.c.h.b16 %v4761
    %v4827 = vunpack.c.l.b16 %v4762
    %v4828 = vunpack.c.h.b16 %v4762
    %v4829 = vunpack.c.l.b16 %v4763
    %v4830 = vunpack.c.h.b16 %v4763
    %v4831 = vunpack.c.l.b16 %v4764
    %v4832 = vunpack.c.h.b16 %v4764
    %v4833 = vunpack.c.l.b16 %v4765
    %v4834 = vunpack.c.h.b16 %v4765
    %v4835 = vunpack.c.l.b16 %v4766
    %v4836 = vunpack.c.h.b16 %v4766
    %v4837 = vunpack.c.l.b16 %v4767
    %v4838 = vunpack.c.h.b16 %v4767
    %v4839 = vunpack.c.l.b16 %v4768
    %v4840 = vunpack.c.h.b16 %v4768
    %v4841 = vunpack.c.l.b16 %v4769
    %v4842 = vunpack.c.h.b16 %v4769
    %v4843 = vunpack.c.l.b16 %v4770
    %v4844 = vunpack.c.h.b16 %v4770
    %v4845 = vunpack.c.l.b16 %v4771
    %v4846 = vunpack.c.h.b16 %v4771
    %v4847 = vunpack.c.l.b16 %v4772
    %v4848 = vunpack.c.h.b16 %v4772
    %v4849 = vunpack.c.l.b16 %v4773
    %v4850 = vunpack.c.h.b16 %v4773
    %v4851 = vunpack.c.l.b16 %v4774
    %v4852 = vunpack.c.h.b16 %v4774
    %v4853 = vunpack.c.l.b16 %v4775
    %v4854 = vunpack.c.h.b16 %v4775
    %v4855 = vunpack.c.l.b16 %v4776
    %v4856 = vunpack.c.h.b16 %v4776
    %v4857 = vunpack.c.l.b16 %v4777
    %v4858 = vunpack.c.h.b16 %v4777
    %v4859 = vunpack.c.l.b16 %v4778
    %v4860 = vunpack.c.h.b16 %v4778
    %v4861 = vunpack.c.l.b16 %v4779
    %v4862 = vunpack.c.h.b16 %v4779
    %v4863 = vunpack.c.l.b16 %v4780
    %v4864 = vunpack.c.h.b16 %v4780
    %v4865 = vunpack.c.l.b16 %v4781
    %v4866 = vunpack.c.h.b16 %v4781
    %v4867 = vunpack.c.l.b16 %v4782
    %v4868 = vunpack.c.h.b16 %v4782
    %v4869 = vunpack.c.l.b16 %v4783
    %v4870 = vunpack.c.h.b16 %v4783
    %v4871 = vunpack.c.l.b16 %v4784
    %v4872 = vunpack.c.h.b16 %v4784
    %v4873 = vunpack.c.l.b16 %v4785
    %v4874 = vunpack.c.h.b16 %v4785
    %v4875 = vunpack.c.l.b16 %v4786
    %v4876 = vunpack.c.h.b16 %v4786
    %v4877 = vunpack.c.l.b16 %v4787
    %v4878 = vunpack.c.h.b16 %v4787
    %v4879 = vunpack.c.l.b16 %v4788
    %v4880 = vunpack.c.h.b16 %v4788
    %v4881 = vunpack.c.l.b16 %v4789
    %v4882 = vunpack.c.h.b16 %v4789
    %v4883 = vunpack.c.l.b16 %v4790
    %v4884 = vunpack.c.h.b16 %v4790
    %v4885 = vunpack.c.l.b16 %v4791
    %v4886 = vunpack.c.h.b16 %v4791
    %v4887 = vunpack.c.l.b16 %v4792
    %v4888 = vunpack.c.h.b16 %v4792
    %v4889 = vpack.c.b16 %v4829, %v4825
    %v4890 = vpack.c.b16 %v4830, %v4826
    %v4891 = vpack.c.b16 %v4831, %v4827
    %v4892 = vpack.c.b16 %v4832, %v4828
    %v4893 = vpack.c.b16 %v4837, %v4833
    %v4894 = vpack.c.b16 %v4838, %v4834
    %v4895 = vpack.c.b16 %v4839, %v4835
    %v4896 = vpack.c.b16 %v4840, %v4836
    %v4897 = vpack.c.b16 %v4845, %v4841
    %v4898 = vpack.c.b16 %v4846, %v4842
    %v4899 = vpack.c.b16 %v4847, %v4843
    %v4900 = vpack.c.b16 %v4848, %v4844
    %v4901 = vpack.c.b16 %v4853, %v4849
    %v4902 = vpack.c.b16 %v4854, %v4850
    %v4903 = vpack.c.b16 %v4855, %v4851
    %v4904 = vpack.c.b16 %v4856, %v4852
    %v4905 = vpack.c.b16 %v4861, %v4857
    %v4906 = vpack.c.b16 %v4862, %v4858
    %v4907 = vpack.c.b16 %v4863, %v4859
    %v4908 = vpack.c.b16 %v4864, %v4860
    %v4909 = vpack.c.b16 %v4869, %v4865
    %v4910 = vpack.c.b16 %v4870, %v4866
    %v4911 = vpack.c.b16 %v4871, %v4867
    %v4912 = vpack.c.b16 %v4872, %v4868
    %v4913 = vpack.c.b16 %v4877, %v4873
    %v4914 = vpack.c.b16 %v4878, %v4874
    %v4915 = vpack.c.b16 %v4879, %v4875
    %v4916 = vpack.c.b16 %v4880, %v4876
    %v4917 = vpack.c.b16 %v4885, %v4881
    %v4918 = vpack.c.b16 %v4886, %v4882
    %v4919 = vpack.c.b16 %v4887, %v4883
    %v4920 = vpack.c.b16 %v4888, %v4884
    %4953 = vmatprep.subr.bf16.mxu0 %v4890
    %4954 = vmatpush1.bf16.msra.mxu0 %v4889
    %4955 = vmatprep.subr.bf16.mxu0 %v4894
    %4956 = vmatpush1.bf16.msra.mxu0 %v4893
    %4957 = vmatprep.subr.bf16.mxu0 %v4898
    %4958 = vmatpush1.bf16.msra.mxu0 %v4897
    %4959 = vmatprep.subr.bf16.mxu0 %v4902
    %4960 = vmatpush1.bf16.msra.mxu0 %v4901
    %4961 = vmatprep.subr.bf16.mxu0 %v4906
    %4962 = vmatpush1.bf16.msra.mxu0 %v4905
    %4963 = vmatprep.subr.bf16.mxu0 %v4910
    %4964 = vmatpush1.bf16.msra.mxu0 %v4909
    %4965 = vmatprep.subr.bf16.mxu0 %v4914
    %4966 = vmatpush1.bf16.msra.mxu0 %v4913
    %4967 = vmatprep.subr.bf16.mxu0 %v4918
    %4968 = vmatpush1.bf16.msra.mxu0 %v4917
    %4969 = vmatprep.subr.bf16.mxu0 0
    %4970 = vmatpush1.bf16.msra.mxu0 0
    %4971 = vmatprep.subr.bf16.mxu0 0
    %4972 = vmatpush1.bf16.msra.mxu0 0
    %4973 = vmatprep.subr.bf16.mxu0 0
    %4974 = vmatpush1.bf16.msra.mxu0 0
    %4975 = vmatprep.subr.bf16.mxu0 0
    %4976 = vmatpush1.bf16.msra.mxu0 0
    %4977 = vmatprep.subr.bf16.mxu0 0
    %4978 = vmatpush1.bf16.msra.mxu0 0
    %4979 = vmatprep.subr.bf16.mxu0 0
    %4980 = vmatpush1.bf16.msra.mxu0 0
    %4981 = vmatprep.subr.bf16.mxu0 0
    %4982 = vmatpush1.bf16.msra.mxu0 0
    %4983 = vmatprep.subr.bf16.mxu0 0
    %4984 = vmatpush1.bf16.msra.mxu0 0
    %4985 = vmatprep.mubr.bf16.mxu0 0
    %4986 = vmatmul.mubr.bf16.gmra.mrb[0].mxu0 %v4760
    %v4987 = vpop.f32.mrb[0].mxu0
    %v4988 = vadd.f32 0.0, %v4987
    %v4989 = vpop.f32.mrb[0].mxu0
    %v4990 = vadd.f32 0.0, %v4989
    %v4991 = vpop.f32.mrb[0].mxu0
    %v4992 = vpop.f32.mrb[0].mxu0
    %4993 = vdwg.mxu0
    %4994 = vmatprep.subr.bf16.mxu0 %v4892
    %4995 = vmatpush1.bf16.msra.mxu0 %v4891
    %4996 = vmatprep.subr.bf16.mxu0 %v4896
    %4997 = vmatpush1.bf16.msra.mxu0 %v4895
    %4998 = vmatprep.subr.bf16.mxu0 %v4900
    %4999 = vmatpush1.bf16.msra.mxu0 %v4899
    %5000 = vmatprep.subr.bf16.mxu0 %v4904
    %5001 = vmatpush1.bf16.msra.mxu0 %v4903
    %5002 = vmatprep.subr.bf16.mxu0 %v4908
    %5003 = vmatpush1.bf16.msra.mxu0 %v4907
    %5004 = vmatprep.subr.bf16.mxu0 %v4912
    %5005 = vmatpush1.bf16.msra.mxu0 %v4911
    %5006 = vmatprep.subr.bf16.mxu0 %v4916
    %5007 = vmatpush1.bf16.msra.mxu0 %v4915
    %5008 = vmatprep.subr.bf16.mxu0 %v4920
    %5009 = vmatpush1.bf16.msra.mxu0 %v4919
    %5010 = vmatprep.subr.bf16.mxu0 0
    %5011 = vmatpush1.bf16.msra.mxu0 0
    %5012 = vmatprep.subr.bf16.mxu0 0
    %5013 = vmatpush1.bf16.msra.mxu0 0
    %5014 = vmatprep.subr.bf16.mxu0 0
    %5015 = vmatpush1.bf16.msra.mxu0 0
    %5016 = vmatprep.subr.bf16.mxu0 0
    %5017 = vmatpush1.bf16.msra.mxu0 0
    %5018 = vmatprep.subr.bf16.mxu0 0
    %5019 = vmatpush1.bf16.msra.mxu0 0
    %5020 = vmatprep.subr.bf16.mxu0 0
    %5021 = vmatpush1.bf16.msra.mxu0 0
    %5022 = vmatprep.subr.bf16.mxu0 0
    %5023 = vmatpush1.bf16.msra.mxu0 0
    %5024 = vmatprep.subr.bf16.mxu0 0
    %5025 = vmatpush1.bf16.msra.mxu0 0
    %5026 = vmatprep.mubr.bf16.mxu0 0
    %5027 = vmatmul.mubr.bf16.gmra.mrb[0].mxu0 %v4760
    %v5028 = vpop.f32.mrb[0].mxu0
    %v5029 = vadd.f32 0.0, %v5028
    %v5030 = vpop.f32.mrb[0].mxu0
    %v5031 = vadd.f32 0.0, %v5030
    %v5032 = vpop.f32.mrb[0].mxu0
    %v5033 = vpop.f32.mrb[0].mxu0
    %5034 = vdwg.mxu0
    %s5035 = scalar_lea.vmem [#allocation4], 480
    %v5036 = vld [vmem:[%s5035] sm:$0xff]
    %v5037 = vld [vmem:[%s5035 + $0x8] sm:$0xff]
    %v5038 = vld [vmem:[%s5035 + $0x10] sm:$0xff]
    %v5039 = vld [vmem:[%s5035 + $0x18] sm:$0xff]
    %v5040 = vadd.f32 %v5036, %v4988
    %v5041 = vadd.f32 %v5037, %v4990
    %v5042 = vadd.f32 %v5038, %v5029
    %v5043 = vadd.f32 %v5039, %v5031
    %v5044 = vxor.u32 %v5040, 2147483648
    %v5045 = vmul.f32 %v5044, 1.442695
    %v5046 = vpow.pop %v5045
    %v5047 = vadd.f32 %v5046, 1.0
    %v5048 = vrcp.pop %v5047
    %v5049 = vmul.f32 1.0, %v5048
    %v5050 = vxor.u32 %v5041, 2147483648
    %v5051 = vmul.f32 %v5050, 1.442695
    %v5052 = vpow.pop %v5051
    %v5053 = vadd.f32 %v5052, 1.0
    %v5054 = vrcp.pop %v5053
    %v5055 = vmul.f32 1.0, %v5054
    %v5056 = vtanh.pop %v5042
    %v5057 = vxor.u32 %v5043, 2147483648
    %v5058 = vmul.f32 %v5057, 1.442695
    %v5059 = vpow.pop %v5058
    %v5060 = vadd.f32 %v5059, 1.0
    %v5061 = vrcp.pop %v5060
    %v5062 = vmul.f32 1.0, %v5061
    %v5063 = vmul.f32 %v5055, %v4759
    %v5064 = vmul.f32 %v5049, %v5056
    %v5065 = vadd.f32 %v5063, %v5064
    %v5066 = vtanh.pop %v5065
    %v5067 = vmul.f32 %v5062, %v5066
    %5068 = vst [vmem:[#allocation3] sm:$0xff] %v5065
    %5069 = vst [vmem:[#allocation2] sm:$0xff] %v5067
    %s5070 = scalar_lea.vmem [#allocation9], 120
    %5071 = vst [vmem:[%s5070] sm:$0xff] %v5067
    // Predicated region
    $region22: #{tpu_custom_call.1} parent=1 // pred_check
      %p5072 = pneg %p44
    $region23: #{tpu_custom_call.1} parent=1 // pred_check_branch
      %5074 = sbr.rel (%p5072) target = $region25
    $region24: #{tpu_custom_call.1} parent=1 // pred_region
      %v5075 = vld [vmem:[#allocation3] sm:$0xff]
      %5076 = vst [vmem:[#allocation10] sm:$0xff] %v5075
    $region25: #{tpu_custom_call.1} parent=1 // pred_fallthru
      _
    // Predicated region
    $region26: #{tpu_custom_call.1} parent=1 // pred_check
      _
    $region27: #{tpu_custom_call.1} parent=1 // pred_check_branch
      %5078 = sbr.rel (0) target = $region29
    $region28: #{tpu_custom_call.1} parent=1 // pred_region
      %s5080 = ssub.s32 2048, 2048
      %5081 = vsyncadd [#allocation6], %s5080
      %s5082 = sshll.u32 [#allocation9], 4
      %s5083 = int_to_ptr.vmem [resolvable:$true] %s5082
      %5088 = dma.vmem_to_hbm [thread:$0]  %s5083, 2048, %s2, [#allocation6], 128, 128, 8
    $region29: #{tpu_custom_call.1} parent=1 // pred_fallthru
      _
    // Predicated region
    $region30: #{tpu_custom_call.1} parent=1 // pred_check
      _
    $region31: #{tpu_custom_call.1} parent=1 // pred_check_branch
      %5090 = sbr.rel (0) target = $region33
    $region32: #{tpu_custom_call.1} parent=1 // pred_region
      %s5092 = ssub.s32 128, 128
      %5093 = vsyncadd [#allocation11], %s5092
      %s5095 = sshll.u32 [#allocation10], 4
      %s5096 = int_to_ptr.vmem [resolvable:$true] %s5095
      %5098 = dma.vmem_to_hbm [thread:$0]  %s5096, 128, %s3, [#allocation11]
    $region33: #{tpu_custom_call.1} parent=1 // pred_fallthru
      _
    // Predicated region
    $region34: #{tpu_custom_call.1} parent=1 // pred_check
      _
    $region35: #{tpu_custom_call.1} parent=1 // pred_check_branch
      %5100 = sbr.rel (0) target = $region37
    $region36: #{tpu_custom_call.1} parent=1 // pred_region
      %5101 = dma.done [#allocation6], 2048
    $region37: #{tpu_custom_call.1} parent=1 // pred_fallthru
      _
    // Predicated region
    $region38: #{tpu_custom_call.1} parent=1 // pred_check
      _
    $region39: #{tpu_custom_call.1} parent=1 // pred_check_branch
      %5103 = sbr.rel (0) target = $region41
    $region40: #{tpu_custom_call.1} parent=1 // pred_region
      %5104 = dma.done [#allocation11], 128
    $region41: #{tpu_custom_call.1} parent=1 // pred_fallthru
      _
    %5105 = vsyncpa [#allocation5], 1
    %5106 = vsyncpa [#allocation8], 1
    %5107 = vsyncpa [#allocation6], 1
    %5108 = vsyncpa [#allocation11], 1

</llo_original>
